<compile_context>
chip_gen: v7x
topology: tpu7x:2x2x1
jax: 0.10.0
libtpu: 0.0.40
codegen_flags: <defaults>
</compile_context>

<pallas_src>
import functools

import jax
import jax.numpy as jnp
from jax.experimental import pallas as pl
from jax.experimental.pallas import tpu as pltpu


# ----------------------------------------------------------------------------
# Fused recurrent kernel: grid over time chunks; both GRU layers per step;
# hidden states carried in resident (Bp, H) output blocks; per-step layer-2
# hidden written to the (chunk, Bp, H) output slab.  PyTorch gate order: r,z,n.
# ----------------------------------------------------------------------------
def _gru2_kernel(gi1_ref, h01_ref, h02_ref,
                 w_hh1_ref, w_rz2_ref, w_in2_ref, w_hn2_ref,
                 b_rz2_ref, b_in2_ref, bn1_ref, bn2_ref,
                 h2_seq_ref, h1_ref, h2_ref,
                 *, hidden_size, chunk, seq_len, masked, unroll):
    H = hidden_size
    c = pl.program_id(0)
    Bp = h01_ref.shape[0]
    cd = w_hh1_ref.dtype                              # MXU operand dtype

    @pl.when(c == 0)
    def _():
        h1_ref[...] = h01_ref[...]
        h2_ref[...] = h02_ref[...]

    # Hoist the bias broadcasts out of the unrolled time loop (JAX does not
    # CSE broadcast_in_dim).  Weights are read at the dot sites instead, so no
    # whole-(128,384) value has to stay live across the unrolled body.
    b_rz2 = jnp.broadcast_to(b_rz2_ref[...], (Bp, 2 * H))
    b_in2 = jnp.broadcast_to(b_in2_ref[...], (Bp, H))
    bn1 = jnp.broadcast_to(bn1_ref[...], (Bp, H))
    bn2 = jnp.broadcast_to(bn2_ref[...], (Bp, H))

    def step(i, carry):
        h1, h2 = carry

        # ---- layer 1 (input projection + folded r/z biases precomputed) ----
        gi1 = gi1_ref[i]                              # (Bp, 3H), f32
        gh1 = jnp.dot(h1.astype(cd), w_hh1_ref[...],
                      preferred_element_type=jnp.float32)
        rz1 = jax.nn.sigmoid(gi1[:, :2 * H] + gh1[:, :2 * H])   # fused r/z
        r1 = rz1[:, :H]
        z1 = rz1[:, H:]
        n1 = jnp.tanh(gi1[:, 2 * H:] + r1 * (gh1[:, 2 * H:] + bn1))
        h1_new = (1.0 - z1) * n1 + z1 * h1

        # ---- layer 2: r/z via one full-depth K=2H matmul ---------------------
        h12 = jnp.concatenate([h1_new, h2], axis=1).astype(cd)  # (Bp, 2H)
        rz2 = jax.nn.sigmoid(
            jnp.dot(h12, w_rz2_ref[...], preferred_element_type=jnp.float32)
            + b_rz2)
        r2 = rz2[:, :H]
        z2 = rz2[:, H:]
        gi2n = jnp.dot(h1_new.astype(cd), w_in2_ref[...],
                       preferred_element_type=jnp.float32) + b_in2
        gh2n = jnp.dot(h2.astype(cd), w_hn2_ref[...],
                       preferred_element_type=jnp.float32) + bn2
        n2 = jnp.tanh(gi2n + r2 * gh2n)
        h2_new = (1.0 - z2) * n2 + z2 * h2

        if masked:  # only generated when chunking over-runs the true seq len
            valid = (c * chunk + i) < seq_len
            h1_new = jnp.where(valid, h1_new, h1)
            h2_new = jnp.where(valid, h2_new, h2)

        # Per-step GRU output (layer-2 hidden); fc+sigmoid happens in XLA.
        h2_seq_ref[i] = h2_new
        return h1_new, h2_new

    h1_fin, h2_fin = jax.lax.fori_loop(
        0, chunk, step, (h1_ref[...], h2_ref[...]), unroll=unroll)
    h1_ref[...] = h1_fin
    h2_ref[...] = h2_fin


def _fused_call(gi1, h01, h02, w_hh1_t, w_rz2, w_in2, w_hn2,
                b_rz2, b_in2, bn1, bn2, *, chunk, seq_len, unroll):
    T_pad, Bp, G = gi1.shape
    H = w_hh1_t.shape[0]
    assert T_pad % chunk == 0
    nc = T_pad // chunk
    masked = (chunk * nc != seq_len)

    # Explicit VMEM budget from actual tiles (double-buffered), generous, and
    # capped below the smallest physical VMEM (v7x: 64 MiB).
    weight_bytes = sum(int(a.size) * a.dtype.itemsize for a in
                       (w_hh1_t, w_rz2, w_in2, w_hn2, b_rz2, b_in2, bn1, bn2,
                        h01, h02))
    tile_bytes = 2 * (chunk * Bp * G * gi1.dtype.itemsize
                      + chunk * Bp * H * 4) + 4 * Bp * H * 4
    vmem_limit = int(min(48 << 20,
                         max(16 << 20, 6 * (weight_bytes + tile_bytes))))

    kernel = functools.partial(_gru2_kernel, hidden_size=H, chunk=chunk,
                               seq_len=seq_len, masked=masked, unroll=unroll)

    h2_seq, h1T, h2T = pl.pallas_call(
        kernel,
        out_shape=(
            jax.ShapeDtypeStruct((T_pad, Bp, H), jnp.float32),
            jax.ShapeDtypeStruct((Bp, H), jnp.float32),
            jax.ShapeDtypeStruct((Bp, H), jnp.float32),
        ),
        grid_spec=pltpu.PrefetchScalarGridSpec(
            num_scalar_prefetch=0,
            grid=(nc,),
            in_specs=[
                pl.BlockSpec((chunk, Bp, G), lambda c: (c, 0, 0)),   # gi1 slab
                pl.BlockSpec((Bp, H), lambda c: (0, 0)),             # h0 layer1
                pl.BlockSpec((Bp, H), lambda c: (0, 0)),             # h0 layer2
                pl.BlockSpec((H, 3 * H), lambda c: (0, 0)),          # w_hh1^T
                pl.BlockSpec((2 * H, 2 * H), lambda c: (0, 0)),      # w_rz2 stack
                pl.BlockSpec((H, H), lambda c: (0, 0)),              # w_ih2_n^T
                pl.BlockSpec((H, H), lambda c: (0, 0)),              # w_hh2_n^T
                pl.BlockSpec((1, 2 * H), lambda c: (0, 0)),          # b_rz2 folded
                pl.BlockSpec((1, H), lambda c: (0, 0)),              # b_ih2_n
                pl.BlockSpec((1, H), lambda c: (0, 0)),              # b_hh1_n
                pl.BlockSpec((1, H), lambda c: (0, 0)),              # b_hh2_n
            ],
            out_specs=[
                pl.BlockSpec((chunk, Bp, H), lambda c: (c, 0, 0)),   # h2 per step
                pl.BlockSpec((Bp, H), lambda c: (0, 0)),             # h1 final
                pl.BlockSpec((Bp, H), lambda c: (0, 0)),             # h2 final
            ],
        ),
        compiler_params=pltpu.CompilerParams(
            dimension_semantics=("arbitrary",),      # sequential recurrence
            vmem_limit_bytes=vmem_limit),
    )(gi1, h01, h02, w_hh1_t, w_rz2, w_in2, w_hn2, b_rz2, b_in2, bn1, bn2)
    return h2_seq, h1T, h2T


# ----------------------------------------------------------------------------
# Parameters (PyTorch layout / init) and one-time preparation for the kernel.
# ----------------------------------------------------------------------------
def init_params(key, input_size, hidden_size, num_layers, output_size):
    bound = 1.0 / jnp.sqrt(hidden_size)
    params = {"layers": [], "hidden_size": hidden_size, "num_layers": num_layers}
    for l in range(num_layers):
        din = input_size if l == 0 else hidden_size
        key, k1, k2, k3, k4 = jax.random.split(key, 5)
        w_ih = jax.random.uniform(k1, (3 * hidden_size, din), jnp.float32, -bound, bound)
        w_hh = jax.random.uniform(k2, (3 * hidden_size, hidden_size), jnp.float32, -bound, bound)
        b_ih = jax.random.uniform(k3, (3 * hidden_size,), jnp.float32, -bound, bound)
        b_hh = jax.random.uniform(k4, (3 * hidden_size,), jnp.float32, -bound, bound)
        params["layers"].append((w_ih, w_hh, b_ih, b_hh))
    key, k5, k6 = jax.random.split(key, 3)
    params["fc_w"] = jax.random.uniform(k5, (output_size, hidden_size), jnp.float32, -bound, bound)
    params["fc_b"] = jax.random.uniform(k6, (output_size,), jnp.float32, -bound, bound)
    return params


def prepare_params(params, compute_dtype=jnp.bfloat16):
    """One-time transform of raw (PyTorch-layout) parameters.

    bf16 MXU operands (default) with f32 accumulation; transposed weights;
    layer-1 r/z biases folded into the hoisted input projection; layer-2 r/z
    weights vertically stacked for a single full-depth (K=2H) matmul.
    """
    assert params["num_layers"] == 2, "fused kernel implements num_layers == 2"
    # TODO(synk): generalize to num_layers != 2 by stacking per-layer weights;
    # the module default (2) is what is implemented here.
    H = params["hidden_size"]
    cd = compute_dtype

    w_ih1, w_hh1, b_ih1, b_hh1 = params["layers"][0]
    w_ih2, w_hh2, b_ih2, b_hh2 = params["layers"][1]

    # Layer 1: input projection hoisted to XLA; r/z biases of ih+hh folded in.
    w_ih1_t = jnp.transpose(w_ih1)                                 # (Din, 3H) f32
    b1_fold = jnp.concatenate(
        [b_ih1[:2 * H] + b_hh1[:2 * H], b_ih1[2 * H:]]).reshape(1, 3 * H)
    w_hh1_t = jnp.transpose(w_hh1).astype(cd)                      # (H, 3H)
    bn1 = b_hh1[2 * H:].reshape(1, H)                              # (1, H)

    # Layer 2: stacked r/z weights (K = 2H), separate n-column weights.
    w_ih2_t = jnp.transpose(w_ih2)                                 # (H, 3H)
    w_hh2_t = jnp.transpose(w_hh2)                                 # (H, 3H)
    w_rz2 = jnp.concatenate(
        [w_ih2_t[:, :2 * H], w_hh2_t[:, :2 * H]], axis=0).astype(cd)  # (2H, 2H)
    b_rz2 = (b_ih2[:2 * H] + b_hh2[:2 * H]).reshape(1, 2 * H)
    w_in2 = w_ih2_t[:, 2 * H:].astype(cd)                          # (H, H)
    b_in2 = b_ih2[2 * H:].reshape(1, H)
    w_hn2 = w_hh2_t[:, 2 * H:].astype(cd)                          # (H, H)
    bn2 = b_hh2[2 * H:].reshape(1, H)

    return {
        "w_ih1_t": w_ih1_t, "b1_fold": b1_fold,
        "w_hh1_t": w_hh1_t, "bn1": bn1,
        "w_rz2": w_rz2, "b_rz2": b_rz2,
        "w_in2": w_in2, "b_in2": b_in2,
        "w_hn2": w_hn2, "bn2": bn2,
        # fc head runs in XLA (out of the recurrent loop) -> keep f32.
        "fc_w_t": jnp.transpose(params["fc_w"]),                   # (H, O)
        "fc_b": params["fc_b"].reshape(1, -1),                     # (1, O)
    }


def _pick_chunk(T, cap=64):
    """Timesteps per grid step: prefer a divisor of T (no masked tail),
    else minimize tail padding among chunks in (cap/2, cap]."""
    if T <= cap:
        return T
    best_c, best_pad = cap, (-T) % cap
    for c in range(cap, cap // 2, -1):
        pad = (-T) % c
        if pad == 0:
            return c
        if pad < best_pad:
            best_c, best_pad = c, pad
    return best_c


# ----------------------------------------------------------------------------
# Forward pass (matches ChaoticGRU.forward: batch_first GRU + Linear + Sigmoid)
# ----------------------------------------------------------------------------
def chaotic_gru_forward(prep, x, hidden=None):
    """x: (B, T, input_size).  Returns (out: (B, T, O), hidden: (2, B, H))."""
    B, T, _ = x.shape
    H = prep["w_hh1_t"].shape[0]
    O = prep["fc_w_t"].shape[1]

    Bp = max(8, ((B + 7) // 8) * 8)            # pad batch to sublane width
    chunk = max(1, _pick_chunk(T))             # timesteps per grid step
    nc = (T + chunk - 1) // chunk
    T_pad = nc * chunk
    unroll = chunk if chunk <= 16 else 8       # partial unroll for long chunks

    if hidden is None:
        hidden = jnp.zeros((2, B, H), jnp.float32)

    # Hoisted layer-1 input projection: one big matmul over all timesteps.
    x_tbd = jnp.transpose(x, (1, 0, 2)).astype(jnp.float32)        # (T, B, Din)
    x_tbd = jnp.pad(x_tbd, ((0, T_pad - T), (0, Bp - B), (0, 0)))
    gi1 = jnp.einsum("tbd,dg->tbg", x_tbd, prep["w_ih1_t"]) + prep["b1_fold"]

    h0 = jnp.pad(hidden.astype(jnp.float32), ((0, 0), (0, Bp - B), (0, 0)))

    h2_seq, h1T, h2T = _fused_call(
        gi1, h0[0], h0[1],
        prep["w_hh1_t"], prep["w_rz2"], prep["w_in2"], prep["w_hn2"],
        prep["b_rz2"], prep["b_in2"], prep["bn1"], prep["bn2"],
        chunk=chunk, seq_len=T, unroll=unroll)

    # fc + sigmoid head: one large XLA matmul over all (T*B) rows.
    h2_valid = h2_seq[:T, :B, :]                                   # (T, B, H)
    out = jax.nn.sigmoid(
        jnp.einsum("tbh,ho->tbo", h2_valid, prep["fc_w_t"]) + prep["fc_b"])
    out = jnp.transpose(out, (1, 0, 2))                            # (B, T, O)
    hidden_out = jnp.stack([h1T[:B], h2T[:B]], axis=0)             # (2, B, H)
    return out, hidden_out


# ----------------------------------------------------------------------------
# Pure-JAX reference (lax.scan) for the correctness check
# ----------------------------------------------------------------------------
def _reference_forward(params, x, hidden=None):
    B, T, _ = x.shape
    H = params["hidden_size"]
    L = params["num_layers"]
    if hidden is None:
        hidden = jnp.zeros((L, B, H), jnp.float32)

    def cell(carry, x_t, w_ih, w_hh, b_ih, b_hh):
        gi = x_t @ w_ih.T + b_ih
        gh = carry @ w_hh.T + b_hh
        i_r, i_z, i_n = jnp.split(gi, 3, axis=-1)
        h_r, h_z, h_n = jnp.split(gh, 3, axis=-1)
        r = jax.nn.sigmoid(i_r + h_r)
        z = jax.nn.sigmoid(i_z + h_z)
        n = jnp.tanh(i_n + r * h_n)
        h = (1.0 - z) * n + z * carry
        return h, h

    x_tbd = jnp.transpose(x, (1, 0, 2))
    finals = []
    layer_in = x_tbd
    for l in range(L):
        w_ih, w_hh, b_ih, b_hh = params["layers"][l]
        hT, y = jax.lax.scan(
            lambda c, xt: cell(c, xt, w_ih, w_hh, b_ih, b_hh), hidden[l], layer_in)
        finals.append(hT)
        layer_in = y
    hidden_out = jnp.stack(finals, axis=0)
    out = jax.nn.sigmoid(layer_in @ params["fc_w"].T + params["fc_b"])
    return jnp.transpose(out, (1, 0, 2)), hidden_out


if __name__ == "__main__":
    # Shapes consistent with the module: input_size=1, hidden=128, layers=2,
    # output_size=1; batch=2, seq=8.
    B, T, INPUT, HIDDEN, LAYERS, OUTPUT = 2, 8, 1, 128, 2, 1

    key = jax.random.PRNGKey(0)
    key, pkey, xkey = jax.random.split(key, 3)
    params = init_params(pkey, INPUT, HIDDEN, LAYERS, OUTPUT)
    x = jax.random.normal(xkey, (B, T, INPUT), jnp.float32)

    fwd = jax.jit(chaotic_gru_forward)
    ref_out, ref_hidden = _reference_forward(params, x)

    # Default path: bf16 MXU operands, f32 accumulation / carry.
    prep_bf16 = prepare_params(params)                     # bf16 default
    out, hidden = fwd(prep_bf16, x)
    out = jax.block_until_ready(out)
    hidden = jax.block_until_ready(hidden)
    assert out.shape == (B, T, OUTPUT)
    assert hidden.shape == (LAYERS, B, HIDDEN)
    assert jnp.allclose(out, ref_out, atol=5e-2)
    assert jnp.allclose(hidden, ref_hidden, atol=5e-2)

    # Strict-parity path: f32 MXU operands (matches PyTorch f32 semantics).
    prep_f32 = prepare_params(params, jnp.float32)
    out32, hidden32 = fwd(prep_f32, x)
    out32 = jax.block_until_ready(out32)
    hidden32 = jax.block_until_ready(hidden32)
    assert jnp.allclose(out32, ref_out, atol=3e-4, rtol=1e-3)
    assert jnp.allclose(hidden32, ref_hidden, atol=3e-4, rtol=1e-3)

    print("KERNEL_OK")
</pallas_src>

<mosaic_0001>
module attributes {stable_mosaic.version = 11 : i64} {
  func.func @_gru2_kernel(%arg0: i32, %arg1: memref<8x8x384xf32, #tpu.memory_space<vmem>>, %arg2: memref<8x128xf32, #tpu.memory_space<vmem>>, %arg3: memref<8x128xf32, #tpu.memory_space<vmem>>, %arg4: memref<128x384xbf16, #tpu.memory_space<vmem>>, %arg5: memref<256x256xbf16, #tpu.memory_space<vmem>>, %arg6: memref<128x128xbf16, #tpu.memory_space<vmem>>, %arg7: memref<128x128xbf16, #tpu.memory_space<vmem>>, %arg8: memref<1x256xf32, #tpu.memory_space<vmem>>, %arg9: memref<1x128xf32, #tpu.memory_space<vmem>>, %arg10: memref<1x128xf32, #tpu.memory_space<vmem>>, %arg11: memref<1x128xf32, #tpu.memory_space<vmem>>, %arg12: memref<8x8x128xf32, #tpu.memory_space<vmem>>, %arg13: memref<8x128xf32, #tpu.memory_space<vmem>>, %arg14: memref<8x128xf32, #tpu.memory_space<vmem>>) attributes {dimension_semantics = [#tpu.dimension_semantics<arbitrary>], iteration_bounds = array<i64: 1>, scalar_prefetch = 0 : i64, scratch_operands = 0 : i64, tpu.core_type = #tpu.core_type<tc>, window_params = [{transform_indices = @transform_0, window_bounds = array<i64: 8, 8, 384>}, {pipeline_mode = #tpu.pipeline_mode<synchronous>, transform_indices = @transform_1, window_bounds = array<i64: 8, 128>}, {pipeline_mode = #tpu.pipeline_mode<synchronous>, transform_indices = @transform_2, window_bounds = array<i64: 8, 128>}, {pipeline_mode = #tpu.pipeline_mode<synchronous>, transform_indices = @transform_3, window_bounds = array<i64: 128, 384>}, {pipeline_mode = #tpu.pipeline_mode<synchronous>, transform_indices = @transform_4, window_bounds = array<i64: 256, 256>}, {pipeline_mode = #tpu.pipeline_mode<synchronous>, transform_indices = @transform_5, window_bounds = array<i64: 128, 128>}, {pipeline_mode = #tpu.pipeline_mode<synchronous>, transform_indices = @transform_6, window_bounds = array<i64: 128, 128>}, {pipeline_mode = #tpu.pipeline_mode<synchronous>, transform_indices = @transform_7, window_bounds = array<i64: 1, 256>}, {pipeline_mode = #tpu.pipeline_mode<synchronous>, transform_indices = @transform_8, window_bounds = array<i64: 1, 128>}, {pipeline_mode = #tpu.pipeline_mode<synchronous>, transform_indices = @transform_9, window_bounds = array<i64: 1, 128>}, {pipeline_mode = #tpu.pipeline_mode<synchronous>, transform_indices = @transform_10, window_bounds = array<i64: 1, 128>}, {transform_indices = @transform_11, window_bounds = array<i64: 8, 8, 128>}, {pipeline_mode = #tpu.pipeline_mode<synchronous>, transform_indices = @transform_12, window_bounds = array<i64: 8, 128>}, {pipeline_mode = #tpu.pipeline_mode<synchronous>, transform_indices = @transform_13, window_bounds = array<i64: 8, 128>}]} {
    %c0_i32 = arith.constant 0 : i32
    %0 = arith.cmpi eq, %arg0, %c0_i32 : i32
    %1 = arith.extui %0 : i1 to i32
    %c0_i32_0 = arith.constant 0 : i32
    %2 = arith.cmpi ne, %1, %c0_i32_0 : i32
    scf.if %2 {
      %c0_176 = arith.constant 0 : index
      %c0_177 = arith.constant 0 : index
      %491 = vector.load %arg2[%c0_176, %c0_177] : memref<8x128xf32, #tpu.memory_space<vmem>>, vector<8x128xf32>
      %c0_178 = arith.constant 0 : index
      %c0_179 = arith.constant 0 : index
      %492 = vector.load %arg13[%c0_178, %c0_179] : memref<8x128xf32, #tpu.memory_space<vmem>>, vector<8x128xf32>
      tpu.vector_store %arg13[%c0_178, %c0_179], %491 {strides = array<i32>} : memref<8x128xf32, #tpu.memory_space<vmem>>, vector<8x128xf32>,
      %c0_180 = arith.constant 0 : index
      %c0_181 = arith.constant 0 : index
      %493 = vector.load %arg3[%c0_180, %c0_181] : memref<8x128xf32, #tpu.memory_space<vmem>>, vector<8x128xf32>
      %c0_182 = arith.constant 0 : index
      %c0_183 = arith.constant 0 : index
      %494 = vector.load %arg14[%c0_182, %c0_183] : memref<8x128xf32, #tpu.memory_space<vmem>>, vector<8x128xf32>
      tpu.vector_store %arg14[%c0_182, %c0_183], %493 {strides = array<i32>} : memref<8x128xf32, #tpu.memory_space<vmem>>, vector<8x128xf32>,
    } else {
    }
    %c0 = arith.constant 0 : index
    %c0_1 = arith.constant 0 : index
    %3 = vector.load %arg8[%c0, %c0_1] : memref<1x256xf32, #tpu.memory_space<vmem>>, vector<1x256xf32>
    %4 = vector.shape_cast %3 : vector<1x256xf32> to vector<1x256xf32>
    %5 = vector.broadcast %4 : vector<1x256xf32> to vector<8x256xf32>
    %c0_2 = arith.constant 0 : index
    %c0_3 = arith.constant 0 : index
    %6 = vector.load %arg9[%c0_2, %c0_3] : memref<1x128xf32, #tpu.memory_space<vmem>>, vector<1x128xf32>
    %7 = vector.shape_cast %6 : vector<1x128xf32> to vector<1x128xf32>
    %8 = vector.broadcast %7 : vector<1x128xf32> to vector<8x128xf32>
    %c0_4 = arith.constant 0 : index
    %c0_5 = arith.constant 0 : index
    %9 = vector.load %arg10[%c0_4, %c0_5] : memref<1x128xf32, #tpu.memory_space<vmem>>, vector<1x128xf32>
    %10 = vector.shape_cast %9 : vector<1x128xf32> to vector<1x128xf32>
    %11 = vector.broadcast %10 : vector<1x128xf32> to vector<8x128xf32>
    %c0_6 = arith.constant 0 : index
    %c0_7 = arith.constant 0 : index
    %12 = vector.load %arg11[%c0_6, %c0_7] : memref<1x128xf32, #tpu.memory_space<vmem>>, vector<1x128xf32>
    %13 = vector.shape_cast %12 : vector<1x128xf32> to vector<1x128xf32>
    %14 = vector.broadcast %13 : vector<1x128xf32> to vector<8x128xf32>
    %c0_8 = arith.constant 0 : index
    %c0_9 = arith.constant 0 : index
    %15 = vector.load %arg13[%c0_8, %c0_9] : memref<8x128xf32, #tpu.memory_space<vmem>>, vector<8x128xf32>
    %c0_10 = arith.constant 0 : index
    %c0_11 = arith.constant 0 : index
    %16 = vector.load %arg14[%c0_10, %c0_11] : memref<8x128xf32, #tpu.memory_space<vmem>>, vector<8x128xf32>
    %c0_i32_12 = arith.constant 0 : i32
    %17 = arith.index_cast %c0_i32_12 : i32 to index
    %c0_13 = arith.constant 0 : index
    %c0_14 = arith.constant 0 : index
    %18 = vector.load %arg1[%17, %c0_13, %c0_14] : memref<8x8x384xf32, #tpu.memory_space<vmem>>, vector<1x8x384xf32>
    %19 = vector.shape_cast %18 : vector<1x8x384xf32> to vector<8x384xf32>
    %20 = arith.truncf %15 : vector<8x128xf32> to vector<8x128xbf16>
    %c0_15 = arith.constant 0 : index
    %c0_16 = arith.constant 0 : index
    %21 = vector.load %arg4[%c0_15, %c0_16] : memref<128x384xbf16, #tpu.memory_space<vmem>>, vector<128x384xbf16>
    %cst = arith.constant dense<0.000000e+00> : vector<8x384xf32>
    %22 = tpu.matmul %20, %21, %cst {dimension_numbers = #tpu.dot_dimension_numbers<[1], [0], [0], [1], [0, 0, 1, 1], [], []>} : vector<8x128xbf16>, vector<128x384xbf16>, vector<8x384xf32> -> vector<8x384xf32>
    %23 = vector.extract_strided_slice %19 {offsets = [0, 0], sizes = [8, 256], strides = [1, 1]} : vector<8x384xf32> to vector<8x256xf32>
    %24 = vector.extract_strided_slice %22 {offsets = [0, 0], sizes = [8, 256], strides = [1, 1]} : vector<8x384xf32> to vector<8x256xf32>
    %25 = arith.addf %23, %24 : vector<8x256xf32>
    %26 = arith.negf %25 : vector<8x256xf32>
    %27 = math.exp %26 : vector<8x256xf32>
    %cst_17 = arith.constant 1.000000e+00 : f32
    %28 = vector.broadcast %cst_17 : f32 to vector<8x256xf32>
    %29 = arith.addf %28, %27 : vector<8x256xf32>
    %30 = arith.divf %28, %29 : vector<8x256xf32>
    %31 = vector.extract_strided_slice %30 {offsets = [0, 0], sizes = [8, 128], strides = [1, 1]} : vector<8x256xf32> to vector<8x128xf32>
    %32 = vector.extract_strided_slice %30 {offsets = [0, 128], sizes = [8, 128], strides = [1, 1]} : vector<8x256xf32> to vector<8x128xf32>
    %33 = vector.extract_strided_slice %19 {offsets = [0, 256], sizes = [8, 128], strides = [1, 1]} : vector<8x384xf32> to vector<8x128xf32>
    %34 = vector.extract_strided_slice %22 {offsets = [0, 256], sizes = [8, 128], strides = [1, 1]} : vector<8x384xf32> to vector<8x128xf32>
    %35 = arith.addf %34, %11 : vector<8x128xf32>
    %36 = arith.mulf %31, %35 : vector<8x128xf32>
    %37 = arith.addf %33, %36 : vector<8x128xf32>
    %38 = math.tanh %37 : vector<8x128xf32>
    %cst_18 = arith.constant 1.000000e+00 : f32
    %39 = vector.broadcast %cst_18 : f32 to vector<8x128xf32>
    %40 = arith.subf %39, %32 : vector<8x128xf32>
    %41 = arith.mulf %40, %38 : vector<8x128xf32>
    %42 = arith.mulf %32, %15 : vector<8x128xf32>
    %43 = arith.addf %41, %42 : vector<8x128xf32>
    %44 = tpu.concatenate %43, %16 in 1 : vector<8x128xf32>, vector<8x128xf32> -> vector<8x256xf32>
    %45 = arith.truncf %44 : vector<8x256xf32> to vector<8x256xbf16>
    %c0_19 = arith.constant 0 : index
    %c0_20 = arith.constant 0 : index
    %46 = vector.load %arg5[%c0_19, %c0_20] : memref<256x256xbf16, #tpu.memory_space<vmem>>, vector<256x256xbf16>
    %cst_21 = arith.constant dense<0.000000e+00> : vector<8x256xf32>
    %47 = tpu.matmul %45, %46, %cst_21 {dimension_numbers = #tpu.dot_dimension_numbers<[1], [0], [0], [1], [0, 0, 1, 1], [], []>} : vector<8x256xbf16>, vector<256x256xbf16>, vector<8x256xf32> -> vector<8x256xf32>
    %48 = arith.addf %47, %5 : vector<8x256xf32>
    %49 = arith.negf %48 : vector<8x256xf32>
    %50 = math.exp %49 : vector<8x256xf32>
    %cst_22 = arith.constant 1.000000e+00 : f32
    %51 = vector.broadcast %cst_22 : f32 to vector<8x256xf32>
    %52 = arith.addf %51, %50 : vector<8x256xf32>
    %53 = arith.divf %51, %52 : vector<8x256xf32>
    %54 = vector.extract_strided_slice %53 {offsets = [0, 0], sizes = [8, 128], strides = [1, 1]} : vector<8x256xf32> to vector<8x128xf32>
    %55 = vector.extract_strided_slice %53 {offsets = [0, 128], sizes = [8, 128], strides = [1, 1]} : vector<8x256xf32> to vector<8x128xf32>
    %56 = arith.truncf %43 : vector<8x128xf32> to vector<8x128xbf16>
    %c0_23 = arith.constant 0 : index
    %c0_24 = arith.constant 0 : index
    %57 = vector.load %arg6[%c0_23, %c0_24] : memref<128x128xbf16, #tpu.memory_space<vmem>>, vector<128x128xbf16>
    %cst_25 = arith.constant dense<0.000000e+00> : vector<8x128xf32>
    %58 = tpu.matmul %56, %57, %cst_25 {dimension_numbers = #tpu.dot_dimension_numbers<[1], [0], [0], [1], [0, 0, 1, 1], [], []>} : vector<8x128xbf16>, vector<128x128xbf16>, vector<8x128xf32> -> vector<8x128xf32>
    %59 = arith.addf %58, %8 : vector<8x128xf32>
    %60 = arith.truncf %16 : vector<8x128xf32> to vector<8x128xbf16>
    %c0_26 = arith.constant 0 : index
    %c0_27 = arith.constant 0 : index
    %61 = vector.load %arg7[%c0_26, %c0_27] : memref<128x128xbf16, #tpu.memory_space<vmem>>, vector<128x128xbf16>
    %cst_28 = arith.constant dense<0.000000e+00> : vector<8x128xf32>
    %62 = tpu.matmul %60, %61, %cst_28 {dimension_numbers = #tpu.dot_dimension_numbers<[1], [0], [0], [1], [0, 0, 1, 1], [], []>} : vector<8x128xbf16>, vector<128x128xbf16>, vector<8x128xf32> -> vector<8x128xf32>
    %63 = arith.addf %62, %14 : vector<8x128xf32>
    %64 = arith.mulf %54, %63 : vector<8x128xf32>
    %65 = arith.addf %59, %64 : vector<8x128xf32>
    %66 = math.tanh %65 : vector<8x128xf32>
    %cst_29 = arith.constant 1.000000e+00 : f32
    %67 = vector.broadcast %cst_29 : f32 to vector<8x128xf32>
    %68 = arith.subf %67, %55 : vector<8x128xf32>
    %69 = arith.mulf %68, %66 : vector<8x128xf32>
    %70 = arith.mulf %55, %16 : vector<8x128xf32>
    %71 = arith.addf %69, %70 : vector<8x128xf32>
    %72 = arith.index_cast %c0_i32_12 : i32 to index
    %c0_30 = arith.constant 0 : index
    %c0_31 = arith.constant 0 : index
    %73 = vector.load %arg12[%72, %c0_30, %c0_31] : memref<8x8x128xf32, #tpu.memory_space<vmem>>, vector<1x8x128xf32>
    %74 = vector.shape_cast %73 : vector<1x8x128xf32> to vector<8x128xf32>
    %75 = vector.shape_cast %71 : vector<8x128xf32> to vector<1x8x128xf32>
    tpu.vector_store %arg12[%72, %c0_30, %c0_31], %75 {strides = array<i32>} : memref<8x8x128xf32, #tpu.memory_space<vmem>>, vector<1x8x128xf32>,
    %c1_i32 = arith.constant 1 : i32
    %76 = arith.index_cast %c1_i32 : i32 to index
    %c0_32 = arith.constant 0 : index
    %c0_33 = arith.constant 0 : index
    %77 = vector.load %arg1[%76, %c0_32, %c0_33] : memref<8x8x384xf32, #tpu.memory_space<vmem>>, vector<1x8x384xf32>
    %78 = vector.shape_cast %77 : vector<1x8x384xf32> to vector<8x384xf32>
    %79 = arith.truncf %43 : vector<8x128xf32> to vector<8x128xbf16>
    %c0_34 = arith.constant 0 : index
    %c0_35 = arith.constant 0 : index
    %80 = vector.load %arg4[%c0_34, %c0_35] : memref<128x384xbf16, #tpu.memory_space<vmem>>, vector<128x384xbf16>
    %cst_36 = arith.constant dense<0.000000e+00> : vector<8x384xf32>
    %81 = tpu.matmul %79, %80, %cst_36 {dimension_numbers = #tpu.dot_dimension_numbers<[1], [0], [0], [1], [0, 0, 1, 1], [], []>} : vector<8x128xbf16>, vector<128x384xbf16>, vector<8x384xf32> -> vector<8x384xf32>
    %82 = vector.extract_strided_slice %78 {offsets = [0, 0], sizes = [8, 256], strides = [1, 1]} : vector<8x384xf32> to vector<8x256xf32>
    %83 = vector.extract_strided_slice %81 {offsets = [0, 0], sizes = [8, 256], strides = [1, 1]} : vector<8x384xf32> to vector<8x256xf32>
    %84 = arith.addf %82, %83 : vector<8x256xf32>
    %85 = arith.negf %84 : vector<8x256xf32>
    %86 = math.exp %85 : vector<8x256xf32>
    %cst_37 = arith.constant 1.000000e+00 : f32
    %87 = vector.broadcast %cst_37 : f32 to vector<8x256xf32>
    %88 = arith.addf %87, %86 : vector<8x256xf32>
    %89 = arith.divf %87, %88 : vector<8x256xf32>
    %90 = vector.extract_strided_slice %89 {offsets = [0, 0], sizes = [8, 128], strides = [1, 1]} : vector<8x256xf32> to vector<8x128xf32>
    %91 = vector.extract_strided_slice %89 {offsets = [0, 128], sizes = [8, 128], strides = [1, 1]} : vector<8x256xf32> to vector<8x128xf32>
    %92 = vector.extract_strided_slice %78 {offsets = [0, 256], sizes = [8, 128], strides = [1, 1]} : vector<8x384xf32> to vector<8x128xf32>
    %93 = vector.extract_strided_slice %81 {offsets = [0, 256], sizes = [8, 128], strides = [1, 1]} : vector<8x384xf32> to vector<8x128xf32>
    %94 = arith.addf %93, %11 : vector<8x128xf32>
    %95 = arith.mulf %90, %94 : vector<8x128xf32>
    %96 = arith.addf %92, %95 : vector<8x128xf32>
    %97 = math.tanh %96 : vector<8x128xf32>
    %cst_38 = arith.constant 1.000000e+00 : f32
    %98 = vector.broadcast %cst_38 : f32 to vector<8x128xf32>
    %99 = arith.subf %98, %91 : vector<8x128xf32>
    %100 = arith.mulf %99, %97 : vector<8x128xf32>
    %101 = arith.mulf %91, %43 : vector<8x128xf32>
    %102 = arith.addf %100, %101 : vector<8x128xf32>
    %103 = tpu.concatenate %102, %71 in 1 : vector<8x128xf32>, vector<8x128xf32> -> vector<8x256xf32>
    %104 = arith.truncf %103 : vector<8x256xf32> to vector<8x256xbf16>
    %c0_39 = arith.constant 0 : index
    %c0_40 = arith.constant 0 : index
    %105 = vector.load %arg5[%c0_39, %c0_40] : memref<256x256xbf16, #tpu.memory_space<vmem>>, vector<256x256xbf16>
    %cst_41 = arith.constant dense<0.000000e+00> : vector<8x256xf32>
    %106 = tpu.matmul %104, %105, %cst_41 {dimension_numbers = #tpu.dot_dimension_numbers<[1], [0], [0], [1], [0, 0, 1, 1], [], []>} : vector<8x256xbf16>, vector<256x256xbf16>, vector<8x256xf32> -> vector<8x256xf32>
    %107 = arith.addf %106, %5 : vector<8x256xf32>
    %108 = arith.negf %107 : vector<8x256xf32>
    %109 = math.exp %108 : vector<8x256xf32>
    %cst_42 = arith.constant 1.000000e+00 : f32
    %110 = vector.broadcast %cst_42 : f32 to vector<8x256xf32>
    %111 = arith.addf %110, %109 : vector<8x256xf32>
    %112 = arith.divf %110, %111 : vector<8x256xf32>
    %113 = vector.extract_strided_slice %112 {offsets = [0, 0], sizes = [8, 128], strides = [1, 1]} : vector<8x256xf32> to vector<8x128xf32>
    %114 = vector.extract_strided_slice %112 {offsets = [0, 128], sizes = [8, 128], strides = [1, 1]} : vector<8x256xf32> to vector<8x128xf32>
    %115 = arith.truncf %102 : vector<8x128xf32> to vector<8x128xbf16>
    %c0_43 = arith.constant 0 : index
    %c0_44 = arith.constant 0 : index
    %116 = vector.load %arg6[%c0_43, %c0_44] : memref<128x128xbf16, #tpu.memory_space<vmem>>, vector<128x128xbf16>
    %cst_45 = arith.constant dense<0.000000e+00> : vector<8x128xf32>
    %117 = tpu.matmul %115, %116, %cst_45 {dimension_numbers = #tpu.dot_dimension_numbers<[1], [0], [0], [1], [0, 0, 1, 1], [], []>} : vector<8x128xbf16>, vector<128x128xbf16>, vector<8x128xf32> -> vector<8x128xf32>
    %118 = arith.addf %117, %8 : vector<8x128xf32>
    %119 = arith.truncf %71 : vector<8x128xf32> to vector<8x128xbf16>
    %c0_46 = arith.constant 0 : index
    %c0_47 = arith.constant 0 : index
    %120 = vector.load %arg7[%c0_46, %c0_47] : memref<128x128xbf16, #tpu.memory_space<vmem>>, vector<128x128xbf16>
    %cst_48 = arith.constant dense<0.000000e+00> : vector<8x128xf32>
    %121 = tpu.matmul %119, %120, %cst_48 {dimension_numbers = #tpu.dot_dimension_numbers<[1], [0], [0], [1], [0, 0, 1, 1], [], []>} : vector<8x128xbf16>, vector<128x128xbf16>, vector<8x128xf32> -> vector<8x128xf32>
    %122 = arith.addf %121, %14 : vector<8x128xf32>
    %123 = arith.mulf %113, %122 : vector<8x128xf32>
    %124 = arith.addf %118, %123 : vector<8x128xf32>
    %125 = math.tanh %124 : vector<8x128xf32>
    %cst_49 = arith.constant 1.000000e+00 : f32
    %126 = vector.broadcast %cst_49 : f32 to vector<8x128xf32>
    %127 = arith.subf %126, %114 : vector<8x128xf32>
    %128 = arith.mulf %127, %125 : vector<8x128xf32>
    %129 = arith.mulf %114, %71 : vector<8x128xf32>
    %130 = arith.addf %128, %129 : vector<8x128xf32>
    %131 = arith.index_cast %c1_i32 : i32 to index
    %c0_50 = arith.constant 0 : index
    %c0_51 = arith.constant 0 : index
    %132 = vector.load %arg12[%131, %c0_50, %c0_51] : memref<8x8x128xf32, #tpu.memory_space<vmem>>, vector<1x8x128xf32>
    %133 = vector.shape_cast %132 : vector<1x8x128xf32> to vector<8x128xf32>
    %134 = vector.shape_cast %130 : vector<8x128xf32> to vector<1x8x128xf32>
    tpu.vector_store %arg12[%131, %c0_50, %c0_51], %134 {strides = array<i32>} : memref<8x8x128xf32, #tpu.memory_space<vmem>>, vector<1x8x128xf32>,
    %c2_i32 = arith.constant 2 : i32
    %135 = arith.index_cast %c2_i32 : i32 to index
    %c0_52 = arith.constant 0 : index
    %c0_53 = arith.constant 0 : index
    %136 = vector.load %arg1[%135, %c0_52, %c0_53] : memref<8x8x384xf32, #tpu.memory_space<vmem>>, vector<1x8x384xf32>
    %137 = vector.shape_cast %136 : vector<1x8x384xf32> to vector<8x384xf32>
    %138 = arith.truncf %102 : vector<8x128xf32> to vector<8x128xbf16>
    %c0_54 = arith.constant 0 : index
    %c0_55 = arith.constant 0 : index
    %139 = vector.load %arg4[%c0_54, %c0_55] : memref<128x384xbf16, #tpu.memory_space<vmem>>, vector<128x384xbf16>
    %cst_56 = arith.constant dense<0.000000e+00> : vector<8x384xf32>
    %140 = tpu.matmul %138, %139, %cst_56 {dimension_numbers = #tpu.dot_dimension_numbers<[1], [0], [0], [1], [0, 0, 1, 1], [], []>} : vector<8x128xbf16>, vector<128x384xbf16>, vector<8x384xf32> -> vector<8x384xf32>
    %141 = vector.extract_strided_slice %137 {offsets = [0, 0], sizes = [8, 256], strides = [1, 1]} : vector<8x384xf32> to vector<8x256xf32>
    %142 = vector.extract_strided_slice %140 {offsets = [0, 0], sizes = [8, 256], strides = [1, 1]} : vector<8x384xf32> to vector<8x256xf32>
    %143 = arith.addf %141, %142 : vector<8x256xf32>
    %144 = arith.negf %143 : vector<8x256xf32>
    %145 = math.exp %144 : vector<8x256xf32>
    %cst_57 = arith.constant 1.000000e+00 : f32
    %146 = vector.broadcast %cst_57 : f32 to vector<8x256xf32>
    %147 = arith.addf %146, %145 : vector<8x256xf32>
    %148 = arith.divf %146, %147 : vector<8x256xf32>
    %149 = vector.extract_strided_slice %148 {offsets = [0, 0], sizes = [8, 128], strides = [1, 1]} : vector<8x256xf32> to vector<8x128xf32>
    %150 = vector.extract_strided_slice %148 {offsets = [0, 128], sizes = [8, 128], strides = [1, 1]} : vector<8x256xf32> to vector<8x128xf32>
    %151 = vector.extract_strided_slice %137 {offsets = [0, 256], sizes = [8, 128], strides = [1, 1]} : vector<8x384xf32> to vector<8x128xf32>
    %152 = vector.extract_strided_slice %140 {offsets = [0, 256], sizes = [8, 128], strides = [1, 1]} : vector<8x384xf32> to vector<8x128xf32>
    %153 = arith.addf %152, %11 : vector<8x128xf32>
    %154 = arith.mulf %149, %153 : vector<8x128xf32>
    %155 = arith.addf %151, %154 : vector<8x128xf32>
    %156 = math.tanh %155 : vector<8x128xf32>
    %cst_58 = arith.constant 1.000000e+00 : f32
    %157 = vector.broadcast %cst_58 : f32 to vector<8x128xf32>
    %158 = arith.subf %157, %150 : vector<8x128xf32>
    %159 = arith.mulf %158, %156 : vector<8x128xf32>
    %160 = arith.mulf %150, %102 : vector<8x128xf32>
    %161 = arith.addf %159, %160 : vector<8x128xf32>
    %162 = tpu.concatenate %161, %130 in 1 : vector<8x128xf32>, vector<8x128xf32> -> vector<8x256xf32>
    %163 = arith.truncf %162 : vector<8x256xf32> to vector<8x256xbf16>
    %c0_59 = arith.constant 0 : index
    %c0_60 = arith.constant 0 : index
    %164 = vector.load %arg5[%c0_59, %c0_60] : memref<256x256xbf16, #tpu.memory_space<vmem>>, vector<256x256xbf16>
    %cst_61 = arith.constant dense<0.000000e+00> : vector<8x256xf32>
    %165 = tpu.matmul %163, %164, %cst_61 {dimension_numbers = #tpu.dot_dimension_numbers<[1], [0], [0], [1], [0, 0, 1, 1], [], []>} : vector<8x256xbf16>, vector<256x256xbf16>, vector<8x256xf32> -> vector<8x256xf32>
    %166 = arith.addf %165, %5 : vector<8x256xf32>
    %167 = arith.negf %166 : vector<8x256xf32>
    %168 = math.exp %167 : vector<8x256xf32>
    %cst_62 = arith.constant 1.000000e+00 : f32
    %169 = vector.broadcast %cst_62 : f32 to vector<8x256xf32>
    %170 = arith.addf %169, %168 : vector<8x256xf32>
    %171 = arith.divf %169, %170 : vector<8x256xf32>
    %172 = vector.extract_strided_slice %171 {offsets = [0, 0], sizes = [8, 128], strides = [1, 1]} : vector<8x256xf32> to vector<8x128xf32>
    %173 = vector.extract_strided_slice %171 {offsets = [0, 128], sizes = [8, 128], strides = [1, 1]} : vector<8x256xf32> to vector<8x128xf32>
    %174 = arith.truncf %161 : vector<8x128xf32> to vector<8x128xbf16>
    %c0_63 = arith.constant 0 : index
    %c0_64 = arith.constant 0 : index
    %175 = vector.load %arg6[%c0_63, %c0_64] : memref<128x128xbf16, #tpu.memory_space<vmem>>, vector<128x128xbf16>
    %cst_65 = arith.constant dense<0.000000e+00> : vector<8x128xf32>
    %176 = tpu.matmul %174, %175, %cst_65 {dimension_numbers = #tpu.dot_dimension_numbers<[1], [0], [0], [1], [0, 0, 1, 1], [], []>} : vector<8x128xbf16>, vector<128x128xbf16>, vector<8x128xf32> -> vector<8x128xf32>
    %177 = arith.addf %176, %8 : vector<8x128xf32>
    %178 = arith.truncf %130 : vector<8x128xf32> to vector<8x128xbf16>
    %c0_66 = arith.constant 0 : index
    %c0_67 = arith.constant 0 : index
    %179 = vector.load %arg7[%c0_66, %c0_67] : memref<128x128xbf16, #tpu.memory_space<vmem>>, vector<128x128xbf16>
    %cst_68 = arith.constant dense<0.000000e+00> : vector<8x128xf32>
    %180 = tpu.matmul %178, %179, %cst_68 {dimension_numbers = #tpu.dot_dimension_numbers<[1], [0], [0], [1], [0, 0, 1, 1], [], []>} : vector<8x128xbf16>, vector<128x128xbf16>, vector<8x128xf32> -> vector<8x128xf32>
    %181 = arith.addf %180, %14 : vector<8x128xf32>
    %182 = arith.mulf %172, %181 : vector<8x128xf32>
    %183 = arith.addf %177, %182 : vector<8x128xf32>
    %184 = math.tanh %183 : vector<8x128xf32>
    %cst_69 = arith.constant 1.000000e+00 : f32
    %185 = vector.broadcast %cst_69 : f32 to vector<8x128xf32>
    %186 = arith.subf %185, %173 : vector<8x128xf32>
    %187 = arith.mulf %186, %184 : vector<8x128xf32>
    %188 = arith.mulf %173, %130 : vector<8x128xf32>
    %189 = arith.addf %187, %188 : vector<8x128xf32>
    %190 = arith.index_cast %c2_i32 : i32 to index
    %c0_70 = arith.constant 0 : index
    %c0_71 = arith.constant 0 : index
    %191 = vector.load %arg12[%190, %c0_70, %c0_71] : memref<8x8x128xf32, #tpu.memory_space<vmem>>, vector<1x8x128xf32>
    %192 = vector.shape_cast %191 : vector<1x8x128xf32> to vector<8x128xf32>
    %193 = vector.shape_cast %189 : vector<8x128xf32> to vector<1x8x128xf32>
    tpu.vector_store %arg12[%190, %c0_70, %c0_71], %193 {strides = array<i32>} : memref<8x8x128xf32, #tpu.memory_space<vmem>>, vector<1x8x128xf32>,
    %c3_i32 = arith.constant 3 : i32
    %194 = arith.index_cast %c3_i32 : i32 to index
    %c0_72 = arith.constant 0 : index
    %c0_73 = arith.constant 0 : index
    %195 = vector.load %arg1[%194, %c0_72, %c0_73] : memref<8x8x384xf32, #tpu.memory_space<vmem>>, vector<1x8x384xf32>
    %196 = vector.shape_cast %195 : vector<1x8x384xf32> to vector<8x384xf32>
    %197 = arith.truncf %161 : vector<8x128xf32> to vector<8x128xbf16>
    %c0_74 = arith.constant 0 : index
    %c0_75 = arith.constant 0 : index
    %198 = vector.load %arg4[%c0_74, %c0_75] : memref<128x384xbf16, #tpu.memory_space<vmem>>, vector<128x384xbf16>
    %cst_76 = arith.constant dense<0.000000e+00> : vector<8x384xf32>
    %199 = tpu.matmul %197, %198, %cst_76 {dimension_numbers = #tpu.dot_dimension_numbers<[1], [0], [0], [1], [0, 0, 1, 1], [], []>} : vector<8x128xbf16>, vector<128x384xbf16>, vector<8x384xf32> -> vector<8x384xf32>
    %200 = vector.extract_strided_slice %196 {offsets = [0, 0], sizes = [8, 256], strides = [1, 1]} : vector<8x384xf32> to vector<8x256xf32>
    %201 = vector.extract_strided_slice %199 {offsets = [0, 0], sizes = [8, 256], strides = [1, 1]} : vector<8x384xf32> to vector<8x256xf32>
    %202 = arith.addf %200, %201 : vector<8x256xf32>
    %203 = arith.negf %202 : vector<8x256xf32>
    %204 = math.exp %203 : vector<8x256xf32>
    %cst_77 = arith.constant 1.000000e+00 : f32
    %205 = vector.broadcast %cst_77 : f32 to vector<8x256xf32>
    %206 = arith.addf %205, %204 : vector<8x256xf32>
    %207 = arith.divf %205, %206 : vector<8x256xf32>
    %208 = vector.extract_strided_slice %207 {offsets = [0, 0], sizes = [8, 128], strides = [1, 1]} : vector<8x256xf32> to vector<8x128xf32>
    %209 = vector.extract_strided_slice %207 {offsets = [0, 128], sizes = [8, 128], strides = [1, 1]} : vector<8x256xf32> to vector<8x128xf32>
    %210 = vector.extract_strided_slice %196 {offsets = [0, 256], sizes = [8, 128], strides = [1, 1]} : vector<8x384xf32> to vector<8x128xf32>
    %211 = vector.extract_strided_slice %199 {offsets = [0, 256], sizes = [8, 128], strides = [1, 1]} : vector<8x384xf32> to vector<8x128xf32>
    %212 = arith.addf %211, %11 : vector<8x128xf32>
    %213 = arith.mulf %208, %212 : vector<8x128xf32>
    %214 = arith.addf %210, %213 : vector<8x128xf32>
    %215 = math.tanh %214 : vector<8x128xf32>
    %cst_78 = arith.constant 1.000000e+00 : f32
    %216 = vector.broadcast %cst_78 : f32 to vector<8x128xf32>
    %217 = arith.subf %216, %209 : vector<8x128xf32>
    %218 = arith.mulf %217, %215 : vector<8x128xf32>
    %219 = arith.mulf %209, %161 : vector<8x128xf32>
    %220 = arith.addf %218, %219 : vector<8x128xf32>
    %221 = tpu.concatenate %220, %189 in 1 : vector<8x128xf32>, vector<8x128xf32> -> vector<8x256xf32>
    %222 = arith.truncf %221 : vector<8x256xf32> to vector<8x256xbf16>
    %c0_79 = arith.constant 0 : index
    %c0_80 = arith.constant 0 : index
    %223 = vector.load %arg5[%c0_79, %c0_80] : memref<256x256xbf16, #tpu.memory_space<vmem>>, vector<256x256xbf16>
    %cst_81 = arith.constant dense<0.000000e+00> : vector<8x256xf32>
    %224 = tpu.matmul %222, %223, %cst_81 {dimension_numbers = #tpu.dot_dimension_numbers<[1], [0], [0], [1], [0, 0, 1, 1], [], []>} : vector<8x256xbf16>, vector<256x256xbf16>, vector<8x256xf32> -> vector<8x256xf32>
    %225 = arith.addf %224, %5 : vector<8x256xf32>
    %226 = arith.negf %225 : vector<8x256xf32>
    %227 = math.exp %226 : vector<8x256xf32>
    %cst_82 = arith.constant 1.000000e+00 : f32
    %228 = vector.broadcast %cst_82 : f32 to vector<8x256xf32>
    %229 = arith.addf %228, %227 : vector<8x256xf32>
    %230 = arith.divf %228, %229 : vector<8x256xf32>
    %231 = vector.extract_strided_slice %230 {offsets = [0, 0], sizes = [8, 128], strides = [1, 1]} : vector<8x256xf32> to vector<8x128xf32>
    %232 = vector.extract_strided_slice %230 {offsets = [0, 128], sizes = [8, 128], strides = [1, 1]} : vector<8x256xf32> to vector<8x128xf32>
    %233 = arith.truncf %220 : vector<8x128xf32> to vector<8x128xbf16>
    %c0_83 = arith.constant 0 : index
    %c0_84 = arith.constant 0 : index
    %234 = vector.load %arg6[%c0_83, %c0_84] : memref<128x128xbf16, #tpu.memory_space<vmem>>, vector<128x128xbf16>
    %cst_85 = arith.constant dense<0.000000e+00> : vector<8x128xf32>
    %235 = tpu.matmul %233, %234, %cst_85 {dimension_numbers = #tpu.dot_dimension_numbers<[1], [0], [0], [1], [0, 0, 1, 1], [], []>} : vector<8x128xbf16>, vector<128x128xbf16>, vector<8x128xf32> -> vector<8x128xf32>
    %236 = arith.addf %235, %8 : vector<8x128xf32>
    %237 = arith.truncf %189 : vector<8x128xf32> to vector<8x128xbf16>
    %c0_86 = arith.constant 0 : index
    %c0_87 = arith.constant 0 : index
    %238 = vector.load %arg7[%c0_86, %c0_87] : memref<128x128xbf16, #tpu.memory_space<vmem>>, vector<128x128xbf16>
    %cst_88 = arith.constant dense<0.000000e+00> : vector<8x128xf32>
    %239 = tpu.matmul %237, %238, %cst_88 {dimension_numbers = #tpu.dot_dimension_numbers<[1], [0], [0], [1], [0, 0, 1, 1], [], []>} : vector<8x128xbf16>, vector<128x128xbf16>, vector<8x128xf32> -> vector<8x128xf32>
    %240 = arith.addf %239, %14 : vector<8x128xf32>
    %241 = arith.mulf %231, %240 : vector<8x128xf32>
    %242 = arith.addf %236, %241 : vector<8x128xf32>
    %243 = math.tanh %242 : vector<8x128xf32>
    %cst_89 = arith.constant 1.000000e+00 : f32
    %244 = vector.broadcast %cst_89 : f32 to vector<8x128xf32>
    %245 = arith.subf %244, %232 : vector<8x128xf32>
    %246 = arith.mulf %245, %243 : vector<8x128xf32>
    %247 = arith.mulf %232, %189 : vector<8x128xf32>
    %248 = arith.addf %246, %247 : vector<8x128xf32>
    %249 = arith.index_cast %c3_i32 : i32 to index
    %c0_90 = arith.constant 0 : index
    %c0_91 = arith.constant 0 : index
    %250 = vector.load %arg12[%249, %c0_90, %c0_91] : memref<8x8x128xf32, #tpu.memory_space<vmem>>, vector<1x8x128xf32>
    %251 = vector.shape_cast %250 : vector<1x8x128xf32> to vector<8x128xf32>
    %252 = vector.shape_cast %248 : vector<8x128xf32> to vector<1x8x128xf32>
    tpu.vector_store %arg12[%249, %c0_90, %c0_91], %252 {strides = array<i32>} : memref<8x8x128xf32, #tpu.memory_space<vmem>>, vector<1x8x128xf32>,
    %c4_i32 = arith.constant 4 : i32
    %253 = arith.index_cast %c4_i32 : i32 to index
    %c0_92 = arith.constant 0 : index
    %c0_93 = arith.constant 0 : index
    %254 = vector.load %arg1[%253, %c0_92, %c0_93] : memref<8x8x384xf32, #tpu.memory_space<vmem>>, vector<1x8x384xf32>
    %255 = vector.shape_cast %254 : vector<1x8x384xf32> to vector<8x384xf32>
    %256 = arith.truncf %220 : vector<8x128xf32> to vector<8x128xbf16>
    %c0_94 = arith.constant 0 : index
    %c0_95 = arith.constant 0 : index
    %257 = vector.load %arg4[%c0_94, %c0_95] : memref<128x384xbf16, #tpu.memory_space<vmem>>, vector<128x384xbf16>
    %cst_96 = arith.constant dense<0.000000e+00> : vector<8x384xf32>
    %258 = tpu.matmul %256, %257, %cst_96 {dimension_numbers = #tpu.dot_dimension_numbers<[1], [0], [0], [1], [0, 0, 1, 1], [], []>} : vector<8x128xbf16>, vector<128x384xbf16>, vector<8x384xf32> -> vector<8x384xf32>
    %259 = vector.extract_strided_slice %255 {offsets = [0, 0], sizes = [8, 256], strides = [1, 1]} : vector<8x384xf32> to vector<8x256xf32>
    %260 = vector.extract_strided_slice %258 {offsets = [0, 0], sizes = [8, 256], strides = [1, 1]} : vector<8x384xf32> to vector<8x256xf32>
    %261 = arith.addf %259, %260 : vector<8x256xf32>
    %262 = arith.negf %261 : vector<8x256xf32>
    %263 = math.exp %262 : vector<8x256xf32>
    %cst_97 = arith.constant 1.000000e+00 : f32
    %264 = vector.broadcast %cst_97 : f32 to vector<8x256xf32>
    %265 = arith.addf %264, %263 : vector<8x256xf32>
    %266 = arith.divf %264, %265 : vector<8x256xf32>
    %267 = vector.extract_strided_slice %266 {offsets = [0, 0], sizes = [8, 128], strides = [1, 1]} : vector<8x256xf32> to vector<8x128xf32>
    %268 = vector.extract_strided_slice %266 {offsets = [0, 128], sizes = [8, 128], strides = [1, 1]} : vector<8x256xf32> to vector<8x128xf32>
    %269 = vector.extract_strided_slice %255 {offsets = [0, 256], sizes = [8, 128], strides = [1, 1]} : vector<8x384xf32> to vector<8x128xf32>
    %270 = vector.extract_strided_slice %258 {offsets = [0, 256], sizes = [8, 128], strides = [1, 1]} : vector<8x384xf32> to vector<8x128xf32>
    %271 = arith.addf %270, %11 : vector<8x128xf32>
    %272 = arith.mulf %267, %271 : vector<8x128xf32>
    %273 = arith.addf %269, %272 : vector<8x128xf32>
    %274 = math.tanh %273 : vector<8x128xf32>
    %cst_98 = arith.constant 1.000000e+00 : f32
    %275 = vector.broadcast %cst_98 : f32 to vector<8x128xf32>
    %276 = arith.subf %275, %268 : vector<8x128xf32>
    %277 = arith.mulf %276, %274 : vector<8x128xf32>
    %278 = arith.mulf %268, %220 : vector<8x128xf32>
    %279 = arith.addf %277, %278 : vector<8x128xf32>
    %280 = tpu.concatenate %279, %248 in 1 : vector<8x128xf32>, vector<8x128xf32> -> vector<8x256xf32>
    %281 = arith.truncf %280 : vector<8x256xf32> to vector<8x256xbf16>
    %c0_99 = arith.constant 0 : index
    %c0_100 = arith.constant 0 : index
    %282 = vector.load %arg5[%c0_99, %c0_100] : memref<256x256xbf16, #tpu.memory_space<vmem>>, vector<256x256xbf16>
    %cst_101 = arith.constant dense<0.000000e+00> : vector<8x256xf32>
    %283 = tpu.matmul %281, %282, %cst_101 {dimension_numbers = #tpu.dot_dimension_numbers<[1], [0], [0], [1], [0, 0, 1, 1], [], []>} : vector<8x256xbf16>, vector<256x256xbf16>, vector<8x256xf32> -> vector<8x256xf32>
    %284 = arith.addf %283, %5 : vector<8x256xf32>
    %285 = arith.negf %284 : vector<8x256xf32>
    %286 = math.exp %285 : vector<8x256xf32>
    %cst_102 = arith.constant 1.000000e+00 : f32
    %287 = vector.broadcast %cst_102 : f32 to vector<8x256xf32>
    %288 = arith.addf %287, %286 : vector<8x256xf32>
    %289 = arith.divf %287, %288 : vector<8x256xf32>
    %290 = vector.extract_strided_slice %289 {offsets = [0, 0], sizes = [8, 128], strides = [1, 1]} : vector<8x256xf32> to vector<8x128xf32>
    %291 = vector.extract_strided_slice %289 {offsets = [0, 128], sizes = [8, 128], strides = [1, 1]} : vector<8x256xf32> to vector<8x128xf32>
    %292 = arith.truncf %279 : vector<8x128xf32> to vector<8x128xbf16>
    %c0_103 = arith.constant 0 : index
    %c0_104 = arith.constant 0 : index
    %293 = vector.load %arg6[%c0_103, %c0_104] : memref<128x128xbf16, #tpu.memory_space<vmem>>, vector<128x128xbf16>
    %cst_105 = arith.constant dense<0.000000e+00> : vector<8x128xf32>
    %294 = tpu.matmul %292, %293, %cst_105 {dimension_numbers = #tpu.dot_dimension_numbers<[1], [0], [0], [1], [0, 0, 1, 1], [], []>} : vector<8x128xbf16>, vector<128x128xbf16>, vector<8x128xf32> -> vector<8x128xf32>
    %295 = arith.addf %294, %8 : vector<8x128xf32>
    %296 = arith.truncf %248 : vector<8x128xf32> to vector<8x128xbf16>
    %c0_106 = arith.constant 0 : index
    %c0_107 = arith.constant 0 : index
    %297 = vector.load %arg7[%c0_106, %c0_107] : memref<128x128xbf16, #tpu.memory_space<vmem>>, vector<128x128xbf16>
    %cst_108 = arith.constant dense<0.000000e+00> : vector<8x128xf32>
    %298 = tpu.matmul %296, %297, %cst_108 {dimension_numbers = #tpu.dot_dimension_numbers<[1], [0], [0], [1], [0, 0, 1, 1], [], []>} : vector<8x128xbf16>, vector<128x128xbf16>, vector<8x128xf32> -> vector<8x128xf32>
    %299 = arith.addf %298, %14 : vector<8x128xf32>
    %300 = arith.mulf %290, %299 : vector<8x128xf32>
    %301 = arith.addf %295, %300 : vector<8x128xf32>
    %302 = math.tanh %301 : vector<8x128xf32>
    %cst_109 = arith.constant 1.000000e+00 : f32
    %303 = vector.broadcast %cst_109 : f32 to vector<8x128xf32>
    %304 = arith.subf %303, %291 : vector<8x128xf32>
    %305 = arith.mulf %304, %302 : vector<8x128xf32>
    %306 = arith.mulf %291, %248 : vector<8x128xf32>
    %307 = arith.addf %305, %306 : vector<8x128xf32>
    %308 = arith.index_cast %c4_i32 : i32 to index
    %c0_110 = arith.constant 0 : index
    %c0_111 = arith.constant 0 : index
    %309 = vector.load %arg12[%308, %c0_110, %c0_111] : memref<8x8x128xf32, #tpu.memory_space<vmem>>, vector<1x8x128xf32>
    %310 = vector.shape_cast %309 : vector<1x8x128xf32> to vector<8x128xf32>
    %311 = vector.shape_cast %307 : vector<8x128xf32> to vector<1x8x128xf32>
    tpu.vector_store %arg12[%308, %c0_110, %c0_111], %311 {strides = array<i32>} : memref<8x8x128xf32, #tpu.memory_space<vmem>>, vector<1x8x128xf32>,
    %c5_i32 = arith.constant 5 : i32
    %312 = arith.index_cast %c5_i32 : i32 to index
    %c0_112 = arith.constant 0 : index
    %c0_113 = arith.constant 0 : index
    %313 = vector.load %arg1[%312, %c0_112, %c0_113] : memref<8x8x384xf32, #tpu.memory_space<vmem>>, vector<1x8x384xf32>
    %314 = vector.shape_cast %313 : vector<1x8x384xf32> to vector<8x384xf32>
    %315 = arith.truncf %279 : vector<8x128xf32> to vector<8x128xbf16>
    %c0_114 = arith.constant 0 : index
    %c0_115 = arith.constant 0 : index
    %316 = vector.load %arg4[%c0_114, %c0_115] : memref<128x384xbf16, #tpu.memory_space<vmem>>, vector<128x384xbf16>
    %cst_116 = arith.constant dense<0.000000e+00> : vector<8x384xf32>
    %317 = tpu.matmul %315, %316, %cst_116 {dimension_numbers = #tpu.dot_dimension_numbers<[1], [0], [0], [1], [0, 0, 1, 1], [], []>} : vector<8x128xbf16>, vector<128x384xbf16>, vector<8x384xf32> -> vector<8x384xf32>
    %318 = vector.extract_strided_slice %314 {offsets = [0, 0], sizes = [8, 256], strides = [1, 1]} : vector<8x384xf32> to vector<8x256xf32>
    %319 = vector.extract_strided_slice %317 {offsets = [0, 0], sizes = [8, 256], strides = [1, 1]} : vector<8x384xf32> to vector<8x256xf32>
    %320 = arith.addf %318, %319 : vector<8x256xf32>
    %321 = arith.negf %320 : vector<8x256xf32>
    %322 = math.exp %321 : vector<8x256xf32>
    %cst_117 = arith.constant 1.000000e+00 : f32
    %323 = vector.broadcast %cst_117 : f32 to vector<8x256xf32>
    %324 = arith.addf %323, %322 : vector<8x256xf32>
    %325 = arith.divf %323, %324 : vector<8x256xf32>
    %326 = vector.extract_strided_slice %325 {offsets = [0, 0], sizes = [8, 128], strides = [1, 1]} : vector<8x256xf32> to vector<8x128xf32>
    %327 = vector.extract_strided_slice %325 {offsets = [0, 128], sizes = [8, 128], strides = [1, 1]} : vector<8x256xf32> to vector<8x128xf32>
    %328 = vector.extract_strided_slice %314 {offsets = [0, 256], sizes = [8, 128], strides = [1, 1]} : vector<8x384xf32> to vector<8x128xf32>
    %329 = vector.extract_strided_slice %317 {offsets = [0, 256], sizes = [8, 128], strides = [1, 1]} : vector<8x384xf32> to vector<8x128xf32>
    %330 = arith.addf %329, %11 : vector<8x128xf32>
    %331 = arith.mulf %326, %330 : vector<8x128xf32>
    %332 = arith.addf %328, %331 : vector<8x128xf32>
    %333 = math.tanh %332 : vector<8x128xf32>
    %cst_118 = arith.constant 1.000000e+00 : f32
    %334 = vector.broadcast %cst_118 : f32 to vector<8x128xf32>
    %335 = arith.subf %334, %327 : vector<8x128xf32>
    %336 = arith.mulf %335, %333 : vector<8x128xf32>
    %337 = arith.mulf %327, %279 : vector<8x128xf32>
    %338 = arith.addf %336, %337 : vector<8x128xf32>
    %339 = tpu.concatenate %338, %307 in 1 : vector<8x128xf32>, vector<8x128xf32> -> vector<8x256xf32>
    %340 = arith.truncf %339 : vector<8x256xf32> to vector<8x256xbf16>
    %c0_119 = arith.constant 0 : index
    %c0_120 = arith.constant 0 : index
    %341 = vector.load %arg5[%c0_119, %c0_120] : memref<256x256xbf16, #tpu.memory_space<vmem>>, vector<256x256xbf16>
    %cst_121 = arith.constant dense<0.000000e+00> : vector<8x256xf32>
    %342 = tpu.matmul %340, %341, %cst_121 {dimension_numbers = #tpu.dot_dimension_numbers<[1], [0], [0], [1], [0, 0, 1, 1], [], []>} : vector<8x256xbf16>, vector<256x256xbf16>, vector<8x256xf32> -> vector<8x256xf32>
    %343 = arith.addf %342, %5 : vector<8x256xf32>
    %344 = arith.negf %343 : vector<8x256xf32>
    %345 = math.exp %344 : vector<8x256xf32>
    %cst_122 = arith.constant 1.000000e+00 : f32
    %346 = vector.broadcast %cst_122 : f32 to vector<8x256xf32>
    %347 = arith.addf %346, %345 : vector<8x256xf32>
    %348 = arith.divf %346, %347 : vector<8x256xf32>
    %349 = vector.extract_strided_slice %348 {offsets = [0, 0], sizes = [8, 128], strides = [1, 1]} : vector<8x256xf32> to vector<8x128xf32>
    %350 = vector.extract_strided_slice %348 {offsets = [0, 128], sizes = [8, 128], strides = [1, 1]} : vector<8x256xf32> to vector<8x128xf32>
    %351 = arith.truncf %338 : vector<8x128xf32> to vector<8x128xbf16>
    %c0_123 = arith.constant 0 : index
    %c0_124 = arith.constant 0 : index
    %352 = vector.load %arg6[%c0_123, %c0_124] : memref<128x128xbf16, #tpu.memory_space<vmem>>, vector<128x128xbf16>
    %cst_125 = arith.constant dense<0.000000e+00> : vector<8x128xf32>
    %353 = tpu.matmul %351, %352, %cst_125 {dimension_numbers = #tpu.dot_dimension_numbers<[1], [0], [0], [1], [0, 0, 1, 1], [], []>} : vector<8x128xbf16>, vector<128x128xbf16>, vector<8x128xf32> -> vector<8x128xf32>
    %354 = arith.addf %353, %8 : vector<8x128xf32>
    %355 = arith.truncf %307 : vector<8x128xf32> to vector<8x128xbf16>
    %c0_126 = arith.constant 0 : index
    %c0_127 = arith.constant 0 : index
    %356 = vector.load %arg7[%c0_126, %c0_127] : memref<128x128xbf16, #tpu.memory_space<vmem>>, vector<128x128xbf16>
    %cst_128 = arith.constant dense<0.000000e+00> : vector<8x128xf32>
    %357 = tpu.matmul %355, %356, %cst_128 {dimension_numbers = #tpu.dot_dimension_numbers<[1], [0], [0], [1], [0, 0, 1, 1], [], []>} : vector<8x128xbf16>, vector<128x128xbf16>, vector<8x128xf32> -> vector<8x128xf32>
    %358 = arith.addf %357, %14 : vector<8x128xf32>
    %359 = arith.mulf %349, %358 : vector<8x128xf32>
    %360 = arith.addf %354, %359 : vector<8x128xf32>
    %361 = math.tanh %360 : vector<8x128xf32>
    %cst_129 = arith.constant 1.000000e+00 : f32
    %362 = vector.broadcast %cst_129 : f32 to vector<8x128xf32>
    %363 = arith.subf %362, %350 : vector<8x128xf32>
    %364 = arith.mulf %363, %361 : vector<8x128xf32>
    %365 = arith.mulf %350, %307 : vector<8x128xf32>
    %366 = arith.addf %364, %365 : vector<8x128xf32>
    %367 = arith.index_cast %c5_i32 : i32 to index
    %c0_130 = arith.constant 0 : index
    %c0_131 = arith.constant 0 : index
    %368 = vector.load %arg12[%367, %c0_130, %c0_131] : memref<8x8x128xf32, #tpu.memory_space<vmem>>, vector<1x8x128xf32>
    %369 = vector.shape_cast %368 : vector<1x8x128xf32> to vector<8x128xf32>
    %370 = vector.shape_cast %366 : vector<8x128xf32> to vector<1x8x128xf32>
    tpu.vector_store %arg12[%367, %c0_130, %c0_131], %370 {strides = array<i32>} : memref<8x8x128xf32, #tpu.memory_space<vmem>>, vector<1x8x128xf32>,
    %c6_i32 = arith.constant 6 : i32
    %371 = arith.index_cast %c6_i32 : i32 to index
    %c0_132 = arith.constant 0 : index
    %c0_133 = arith.constant 0 : index
    %372 = vector.load %arg1[%371, %c0_132, %c0_133] : memref<8x8x384xf32, #tpu.memory_space<vmem>>, vector<1x8x384xf32>
    %373 = vector.shape_cast %372 : vector<1x8x384xf32> to vector<8x384xf32>
    %374 = arith.truncf %338 : vector<8x128xf32> to vector<8x128xbf16>
    %c0_134 = arith.constant 0 : index
    %c0_135 = arith.constant 0 : index
    %375 = vector.load %arg4[%c0_134, %c0_135] : memref<128x384xbf16, #tpu.memory_space<vmem>>, vector<128x384xbf16>
    %cst_136 = arith.constant dense<0.000000e+00> : vector<8x384xf32>
    %376 = tpu.matmul %374, %375, %cst_136 {dimension_numbers = #tpu.dot_dimension_numbers<[1], [0], [0], [1], [0, 0, 1, 1], [], []>} : vector<8x128xbf16>, vector<128x384xbf16>, vector<8x384xf32> -> vector<8x384xf32>
    %377 = vector.extract_strided_slice %373 {offsets = [0, 0], sizes = [8, 256], strides = [1, 1]} : vector<8x384xf32> to vector<8x256xf32>
    %378 = vector.extract_strided_slice %376 {offsets = [0, 0], sizes = [8, 256], strides = [1, 1]} : vector<8x384xf32> to vector<8x256xf32>
    %379 = arith.addf %377, %378 : vector<8x256xf32>
    %380 = arith.negf %379 : vector<8x256xf32>
    %381 = math.exp %380 : vector<8x256xf32>
    %cst_137 = arith.constant 1.000000e+00 : f32
    %382 = vector.broadcast %cst_137 : f32 to vector<8x256xf32>
    %383 = arith.addf %382, %381 : vector<8x256xf32>
    %384 = arith.divf %382, %383 : vector<8x256xf32>
    %385 = vector.extract_strided_slice %384 {offsets = [0, 0], sizes = [8, 128], strides = [1, 1]} : vector<8x256xf32> to vector<8x128xf32>
    %386 = vector.extract_strided_slice %384 {offsets = [0, 128], sizes = [8, 128], strides = [1, 1]} : vector<8x256xf32> to vector<8x128xf32>
    %387 = vector.extract_strided_slice %373 {offsets = [0, 256], sizes = [8, 128], strides = [1, 1]} : vector<8x384xf32> to vector<8x128xf32>
    %388 = vector.extract_strided_slice %376 {offsets = [0, 256], sizes = [8, 128], strides = [1, 1]} : vector<8x384xf32> to vector<8x128xf32>
    %389 = arith.addf %388, %11 : vector<8x128xf32>
    %390 = arith.mulf %385, %389 : vector<8x128xf32>
    %391 = arith.addf %387, %390 : vector<8x128xf32>
    %392 = math.tanh %391 : vector<8x128xf32>
    %cst_138 = arith.constant 1.000000e+00 : f32
    %393 = vector.broadcast %cst_138 : f32 to vector<8x128xf32>
    %394 = arith.subf %393, %386 : vector<8x128xf32>
    %395 = arith.mulf %394, %392 : vector<8x128xf32>
    %396 = arith.mulf %386, %338 : vector<8x128xf32>
    %397 = arith.addf %395, %396 : vector<8x128xf32>
    %398 = tpu.concatenate %397, %366 in 1 : vector<8x128xf32>, vector<8x128xf32> -> vector<8x256xf32>
    %399 = arith.truncf %398 : vector<8x256xf32> to vector<8x256xbf16>
    %c0_139 = arith.constant 0 : index
    %c0_140 = arith.constant 0 : index
    %400 = vector.load %arg5[%c0_139, %c0_140] : memref<256x256xbf16, #tpu.memory_space<vmem>>, vector<256x256xbf16>
    %cst_141 = arith.constant dense<0.000000e+00> : vector<8x256xf32>
    %401 = tpu.matmul %399, %400, %cst_141 {dimension_numbers = #tpu.dot_dimension_numbers<[1], [0], [0], [1], [0, 0, 1, 1], [], []>} : vector<8x256xbf16>, vector<256x256xbf16>, vector<8x256xf32> -> vector<8x256xf32>
    %402 = arith.addf %401, %5 : vector<8x256xf32>
    %403 = arith.negf %402 : vector<8x256xf32>
    %404 = math.exp %403 : vector<8x256xf32>
    %cst_142 = arith.constant 1.000000e+00 : f32
    %405 = vector.broadcast %cst_142 : f32 to vector<8x256xf32>
    %406 = arith.addf %405, %404 : vector<8x256xf32>
    %407 = arith.divf %405, %406 : vector<8x256xf32>
    %408 = vector.extract_strided_slice %407 {offsets = [0, 0], sizes = [8, 128], strides = [1, 1]} : vector<8x256xf32> to vector<8x128xf32>
    %409 = vector.extract_strided_slice %407 {offsets = [0, 128], sizes = [8, 128], strides = [1, 1]} : vector<8x256xf32> to vector<8x128xf32>
    %410 = arith.truncf %397 : vector<8x128xf32> to vector<8x128xbf16>
    %c0_143 = arith.constant 0 : index
    %c0_144 = arith.constant 0 : index
    %411 = vector.load %arg6[%c0_143, %c0_144] : memref<128x128xbf16, #tpu.memory_space<vmem>>, vector<128x128xbf16>
    %cst_145 = arith.constant dense<0.000000e+00> : vector<8x128xf32>
    %412 = tpu.matmul %410, %411, %cst_145 {dimension_numbers = #tpu.dot_dimension_numbers<[1], [0], [0], [1], [0, 0, 1, 1], [], []>} : vector<8x128xbf16>, vector<128x128xbf16>, vector<8x128xf32> -> vector<8x128xf32>
    %413 = arith.addf %412, %8 : vector<8x128xf32>
    %414 = arith.truncf %366 : vector<8x128xf32> to vector<8x128xbf16>
    %c0_146 = arith.constant 0 : index
    %c0_147 = arith.constant 0 : index
    %415 = vector.load %arg7[%c0_146, %c0_147] : memref<128x128xbf16, #tpu.memory_space<vmem>>, vector<128x128xbf16>
    %cst_148 = arith.constant dense<0.000000e+00> : vector<8x128xf32>
    %416 = tpu.matmul %414, %415, %cst_148 {dimension_numbers = #tpu.dot_dimension_numbers<[1], [0], [0], [1], [0, 0, 1, 1], [], []>} : vector<8x128xbf16>, vector<128x128xbf16>, vector<8x128xf32> -> vector<8x128xf32>
    %417 = arith.addf %416, %14 : vector<8x128xf32>
    %418 = arith.mulf %408, %417 : vector<8x128xf32>
    %419 = arith.addf %413, %418 : vector<8x128xf32>
    %420 = math.tanh %419 : vector<8x128xf32>
    %cst_149 = arith.constant 1.000000e+00 : f32
    %421 = vector.broadcast %cst_149 : f32 to vector<8x128xf32>
    %422 = arith.subf %421, %409 : vector<8x128xf32>
    %423 = arith.mulf %422, %420 : vector<8x128xf32>
    %424 = arith.mulf %409, %366 : vector<8x128xf32>
    %425 = arith.addf %423, %424 : vector<8x128xf32>
    %426 = arith.index_cast %c6_i32 : i32 to index
    %c0_150 = arith.constant 0 : index
    %c0_151 = arith.constant 0 : index
    %427 = vector.load %arg12[%426, %c0_150, %c0_151] : memref<8x8x128xf32, #tpu.memory_space<vmem>>, vector<1x8x128xf32>
    %428 = vector.shape_cast %427 : vector<1x8x128xf32> to vector<8x128xf32>
    %429 = vector.shape_cast %425 : vector<8x128xf32> to vector<1x8x128xf32>
    tpu.vector_store %arg12[%426, %c0_150, %c0_151], %429 {strides = array<i32>} : memref<8x8x128xf32, #tpu.memory_space<vmem>>, vector<1x8x128xf32>,
    %c7_i32 = arith.constant 7 : i32
    %430 = arith.index_cast %c7_i32 : i32 to index
    %c0_152 = arith.constant 0 : index
    %c0_153 = arith.constant 0 : index
    %431 = vector.load %arg1[%430, %c0_152, %c0_153] : memref<8x8x384xf32, #tpu.memory_space<vmem>>, vector<1x8x384xf32>
    %432 = vector.shape_cast %431 : vector<1x8x384xf32> to vector<8x384xf32>
    %433 = arith.truncf %397 : vector<8x128xf32> to vector<8x128xbf16>
    %c0_154 = arith.constant 0 : index
    %c0_155 = arith.constant 0 : index
    %434 = vector.load %arg4[%c0_154, %c0_155] : memref<128x384xbf16, #tpu.memory_space<vmem>>, vector<128x384xbf16>
    %cst_156 = arith.constant dense<0.000000e+00> : vector<8x384xf32>
    %435 = tpu.matmul %433, %434, %cst_156 {dimension_numbers = #tpu.dot_dimension_numbers<[1], [0], [0], [1], [0, 0, 1, 1], [], []>} : vector<8x128xbf16>, vector<128x384xbf16>, vector<8x384xf32> -> vector<8x384xf32>
    %436 = vector.extract_strided_slice %432 {offsets = [0, 0], sizes = [8, 256], strides = [1, 1]} : vector<8x384xf32> to vector<8x256xf32>
    %437 = vector.extract_strided_slice %435 {offsets = [0, 0], sizes = [8, 256], strides = [1, 1]} : vector<8x384xf32> to vector<8x256xf32>
    %438 = arith.addf %436, %437 : vector<8x256xf32>
    %439 = arith.negf %438 : vector<8x256xf32>
    %440 = math.exp %439 : vector<8x256xf32>
    %cst_157 = arith.constant 1.000000e+00 : f32
    %441 = vector.broadcast %cst_157 : f32 to vector<8x256xf32>
    %442 = arith.addf %441, %440 : vector<8x256xf32>
    %443 = arith.divf %441, %442 : vector<8x256xf32>
    %444 = vector.extract_strided_slice %443 {offsets = [0, 0], sizes = [8, 128], strides = [1, 1]} : vector<8x256xf32> to vector<8x128xf32>
    %445 = vector.extract_strided_slice %443 {offsets = [0, 128], sizes = [8, 128], strides = [1, 1]} : vector<8x256xf32> to vector<8x128xf32>
    %446 = vector.extract_strided_slice %432 {offsets = [0, 256], sizes = [8, 128], strides = [1, 1]} : vector<8x384xf32> to vector<8x128xf32>
    %447 = vector.extract_strided_slice %435 {offsets = [0, 256], sizes = [8, 128], strides = [1, 1]} : vector<8x384xf32> to vector<8x128xf32>
    %448 = arith.addf %447, %11 : vector<8x128xf32>
    %449 = arith.mulf %444, %448 : vector<8x128xf32>
    %450 = arith.addf %446, %449 : vector<8x128xf32>
    %451 = math.tanh %450 : vector<8x128xf32>
    %cst_158 = arith.constant 1.000000e+00 : f32
    %452 = vector.broadcast %cst_158 : f32 to vector<8x128xf32>
    %453 = arith.subf %452, %445 : vector<8x128xf32>
    %454 = arith.mulf %453, %451 : vector<8x128xf32>
    %455 = arith.mulf %445, %397 : vector<8x128xf32>
    %456 = arith.addf %454, %455 : vector<8x128xf32>
    %457 = tpu.concatenate %456, %425 in 1 : vector<8x128xf32>, vector<8x128xf32> -> vector<8x256xf32>
    %458 = arith.truncf %457 : vector<8x256xf32> to vector<8x256xbf16>
    %c0_159 = arith.constant 0 : index
    %c0_160 = arith.constant 0 : index
    %459 = vector.load %arg5[%c0_159, %c0_160] : memref<256x256xbf16, #tpu.memory_space<vmem>>, vector<256x256xbf16>
    %cst_161 = arith.constant dense<0.000000e+00> : vector<8x256xf32>
    %460 = tpu.matmul %458, %459, %cst_161 {dimension_numbers = #tpu.dot_dimension_numbers<[1], [0], [0], [1], [0, 0, 1, 1], [], []>} : vector<8x256xbf16>, vector<256x256xbf16>, vector<8x256xf32> -> vector<8x256xf32>
    %461 = arith.addf %460, %5 : vector<8x256xf32>
    %462 = arith.negf %461 : vector<8x256xf32>
    %463 = math.exp %462 : vector<8x256xf32>
    %cst_162 = arith.constant 1.000000e+00 : f32
    %464 = vector.broadcast %cst_162 : f32 to vector<8x256xf32>
    %465 = arith.addf %464, %463 : vector<8x256xf32>
    %466 = arith.divf %464, %465 : vector<8x256xf32>
    %467 = vector.extract_strided_slice %466 {offsets = [0, 0], sizes = [8, 128], strides = [1, 1]} : vector<8x256xf32> to vector<8x128xf32>
    %468 = vector.extract_strided_slice %466 {offsets = [0, 128], sizes = [8, 128], strides = [1, 1]} : vector<8x256xf32> to vector<8x128xf32>
    %469 = arith.truncf %456 : vector<8x128xf32> to vector<8x128xbf16>
    %c0_163 = arith.constant 0 : index
    %c0_164 = arith.constant 0 : index
    %470 = vector.load %arg6[%c0_163, %c0_164] : memref<128x128xbf16, #tpu.memory_space<vmem>>, vector<128x128xbf16>
    %cst_165 = arith.constant dense<0.000000e+00> : vector<8x128xf32>
    %471 = tpu.matmul %469, %470, %cst_165 {dimension_numbers = #tpu.dot_dimension_numbers<[1], [0], [0], [1], [0, 0, 1, 1], [], []>} : vector<8x128xbf16>, vector<128x128xbf16>, vector<8x128xf32> -> vector<8x128xf32>
    %472 = arith.addf %471, %8 : vector<8x128xf32>
    %473 = arith.truncf %425 : vector<8x128xf32> to vector<8x128xbf16>
    %c0_166 = arith.constant 0 : index
    %c0_167 = arith.constant 0 : index
    %474 = vector.load %arg7[%c0_166, %c0_167] : memref<128x128xbf16, #tpu.memory_space<vmem>>, vector<128x128xbf16>
    %cst_168 = arith.constant dense<0.000000e+00> : vector<8x128xf32>
    %475 = tpu.matmul %473, %474, %cst_168 {dimension_numbers = #tpu.dot_dimension_numbers<[1], [0], [0], [1], [0, 0, 1, 1], [], []>} : vector<8x128xbf16>, vector<128x128xbf16>, vector<8x128xf32> -> vector<8x128xf32>
    %476 = arith.addf %475, %14 : vector<8x128xf32>
    %477 = arith.mulf %467, %476 : vector<8x128xf32>
    %478 = arith.addf %472, %477 : vector<8x128xf32>
    %479 = math.tanh %478 : vector<8x128xf32>
    %cst_169 = arith.constant 1.000000e+00 : f32
    %480 = vector.broadcast %cst_169 : f32 to vector<8x128xf32>
    %481 = arith.subf %480, %468 : vector<8x128xf32>
    %482 = arith.mulf %481, %479 : vector<8x128xf32>
    %483 = arith.mulf %468, %425 : vector<8x128xf32>
    %484 = arith.addf %482, %483 : vector<8x128xf32>
    %485 = arith.index_cast %c7_i32 : i32 to index
    %c0_170 = arith.constant 0 : index
    %c0_171 = arith.constant 0 : index
    %486 = vector.load %arg12[%485, %c0_170, %c0_171] : memref<8x8x128xf32, #tpu.memory_space<vmem>>, vector<1x8x128xf32>
    %487 = vector.shape_cast %486 : vector<1x8x128xf32> to vector<8x128xf32>
    %488 = vector.shape_cast %484 : vector<8x128xf32> to vector<1x8x128xf32>
    tpu.vector_store %arg12[%485, %c0_170, %c0_171], %488 {strides = array<i32>} : memref<8x8x128xf32, #tpu.memory_space<vmem>>, vector<1x8x128xf32>,
    %c8_i32 = arith.constant 8 : i32
    %c0_172 = arith.constant 0 : index
    %c0_173 = arith.constant 0 : index
    %489 = vector.load %arg13[%c0_172, %c0_173] : memref<8x128xf32, #tpu.memory_space<vmem>>, vector<8x128xf32>
    tpu.vector_store %arg13[%c0_172, %c0_173], %456 {strides = array<i32>} : memref<8x128xf32, #tpu.memory_space<vmem>>, vector<8x128xf32>,
    %c0_174 = arith.constant 0 : index
    %c0_175 = arith.constant 0 : index
    %490 = vector.load %arg14[%c0_174, %c0_175] : memref<8x128xf32, #tpu.memory_space<vmem>>, vector<8x128xf32>
    tpu.vector_store %arg14[%c0_174, %c0_175], %484 {strides = array<i32>} : memref<8x128xf32, #tpu.memory_space<vmem>>, vector<8x128xf32>,
    return
  }
  func.func @transform_0(%arg0: i32) -> (i32, i32, i32) {
    %c0_i32 = arith.constant 0 : i32
    %c0_i32_0 = arith.constant 0 : i32
    %c0_i32_1 = arith.constant 0 : i32
    return %arg0, %c0_i32, %c0_i32_0 : i32, i32, i32
  }
  func.func @transform_1(%arg0: i32) -> (i32, i32) {
    %c0_i32 = arith.constant 0 : i32
    %c0_i32_0 = arith.constant 0 : i32
    %c0_i32_1 = arith.constant 0 : i32
    return %c0_i32, %c0_i32_0 : i32, i32
  }
  func.func @transform_2(%arg0: i32) -> (i32, i32) {
    %c0_i32 = arith.constant 0 : i32
    %c0_i32_0 = arith.constant 0 : i32
    %c0_i32_1 = arith.constant 0 : i32
    return %c0_i32, %c0_i32_0 : i32, i32
  }
  func.func @transform_3(%arg0: i32) -> (i32, i32) {
    %c0_i32 = arith.constant 0 : i32
    %c0_i32_0 = arith.constant 0 : i32
    %c0_i32_1 = arith.constant 0 : i32
    return %c0_i32, %c0_i32_0 : i32, i32
  }
  func.func @transform_4(%arg0: i32) -> (i32, i32) {
    %c0_i32 = arith.constant 0 : i32
    %c0_i32_0 = arith.constant 0 : i32
    %c0_i32_1 = arith.constant 0 : i32
    return %c0_i32, %c0_i32_0 : i32, i32
  }
  func.func @transform_5(%arg0: i32) -> (i32, i32) {
    %c0_i32 = arith.constant 0 : i32
    %c0_i32_0 = arith.constant 0 : i32
    %c0_i32_1 = arith.constant 0 : i32
    return %c0_i32, %c0_i32_0 : i32, i32
  }
  func.func @transform_6(%arg0: i32) -> (i32, i32) {
    %c0_i32 = arith.constant 0 : i32
    %c0_i32_0 = arith.constant 0 : i32
    %c0_i32_1 = arith.constant 0 : i32
    return %c0_i32, %c0_i32_0 : i32, i32
  }
  func.func @transform_7(%arg0: i32) -> (i32, i32) {
    %c0_i32 = arith.constant 0 : i32
    %c0_i32_0 = arith.constant 0 : i32
    %c0_i32_1 = arith.constant 0 : i32
    return %c0_i32, %c0_i32_0 : i32, i32
  }
  func.func @transform_8(%arg0: i32) -> (i32, i32) {
    %c0_i32 = arith.constant 0 : i32
    %c0_i32_0 = arith.constant 0 : i32
    %c0_i32_1 = arith.constant 0 : i32
    return %c0_i32, %c0_i32_0 : i32, i32
  }
  func.func @transform_9(%arg0: i32) -> (i32, i32) {
    %c0_i32 = arith.constant 0 : i32
    %c0_i32_0 = arith.constant 0 : i32
    %c0_i32_1 = arith.constant 0 : i32
    return %c0_i32, %c0_i32_0 : i32, i32
  }
  func.func @transform_10(%arg0: i32) -> (i32, i32) {
    %c0_i32 = arith.constant 0 : i32
    %c0_i32_0 = arith.constant 0 : i32
    %c0_i32_1 = arith.constant 0 : i32
    return %c0_i32, %c0_i32_0 : i32, i32
  }
  func.func @transform_11(%arg0: i32) -> (i32, i32, i32) {
    %c0_i32 = arith.constant 0 : i32
    %c0_i32_0 = arith.constant 0 : i32
    %c0_i32_1 = arith.constant 0 : i32
    return %arg0, %c0_i32, %c0_i32_0 : i32, i32, i32
  }
  func.func @transform_12(%arg0: i32) -> (i32, i32) {
    %c0_i32 = arith.constant 0 : i32
    %c0_i32_0 = arith.constant 0 : i32
    %c0_i32_1 = arith.constant 0 : i32
    return %c0_i32, %c0_i32_0 : i32, i32
  }
  func.func @transform_13(%arg0: i32) -> (i32, i32) {
    %c0_i32 = arith.constant 0 : i32
    %c0_i32_0 = arith.constant 0 : i32
    %c0_i32_1 = arith.constant 0 : i32
    return %c0_i32, %c0_i32_0 : i32, i32
  }
}

</mosaic_0001>

<llo_original>
// kernel: chaotic_gru_forward.1
$region0: #{chaotic_gru_forward.1}
  #allocation0 [shape = 'u32[]', space=smem, size = 0x4, offset = 0x4, fixed_abs, tag = 'smem constant byte address 0x4 - core index']
  #allocation1 [shape = 'u32[144,128]{1,0:T(1,128)}', space=vmem, size = 0x12000, scoped, tag = 'internal scratch']
  %s0 = inlined_call_operand.vmem [shape: f32[8,8,384], index: 0, kind: input, shape index: {}]
  %s1 = inlined_call_operand.vmem [shape: f32[8,128], index: 1, kind: input, shape index: {}, may-alias: {1,2}]
  %s2 = inlined_call_operand.vmem [shape: f32[8,128], index: 2, kind: input, shape index: {}, may-alias: {1,2}]
  %s3 = inlined_call_operand.hbm [shape: bf16[128,384], index: 3, kind: input, shape index: {}]
  %s4 = inlined_call_operand.vmem [shape: bf16[256,256], index: 4, kind: input, shape index: {}]
  %s5 = inlined_call_operand.hbm [shape: bf16[128,128], index: 5, kind: input, shape index: {}]
  %s6 = inlined_call_operand.hbm [shape: bf16[128,128], index: 6, kind: input, shape index: {}]
  %s7 = inlined_call_operand.vmem [shape: f32[1,256], index: 7, kind: input, shape index: {}]
  %s8 = inlined_call_operand.vmem [shape: f32[1,128], index: 8, kind: input, shape index: {}]
  %s9 = inlined_call_operand.vmem [shape: f32[1,128], index: 9, kind: input, shape index: {}]
  %s10 = inlined_call_operand.vmem [shape: f32[1,128], index: 10, kind: input, shape index: {}]
  %s11 = inlined_call_operand.vmem [shape: f32[8,8,128], index: 11, kind: output, shape index: {0}]
  %s12 = inlined_call_operand.vmem [shape: f32[8,128], index: 12, kind: output, shape index: {1}]
  %s13 = inlined_call_operand.vmem [shape: f32[8,128], index: 13, kind: output, shape index: {2}]
  %14 = xla_tuple %s11, %s12, %s13
  %s15 = sld [smem:[#allocation0]]
  $region86: #{chaotic_gru_forward.1} parent=0
    _
  %s17 = ssub.s32 1, %s15
  %s18 = scalar_select 0, %s17, %s15
  $region1: #{chaotic_gru_forward.1} parent=0
    #allocation2 [shape = 'u8[98304]{0}', space=vmem, size = 0x18000, scoped, tag = 'input window, operand 3, single buffered']
    #allocation3 [shape = 's32[1]{0}', space=sflag, size = 0x4, scoped, tag = 'scoped memory for chaotic_gru_forward.1']
    #allocation4 [shape = 'u8[32768]{0}', space=vmem, size = 0x8000, scoped, tag = 'input window, operand 5, single buffered']
    #allocation5 [shape = 's32[1]{0}', space=sflag, size = 0x4, scoped, tag = 'scoped memory for chaotic_gru_forward.1']
    #allocation6 [shape = 'u8[32768]{0}', space=vmem, size = 0x8000, scoped, tag = 'input window, operand 6, single buffered']
    %19 = vsyncpa [#allocation3], 0
    %20 = vsyncpa [#allocation5], 0
    // Predicated region
    $region2: #{chaotic_gru_forward.1} parent=1 // pred_check
      _
    $region3: #{chaotic_gru_forward.1} parent=1 // pred_check_branch
      %22 = sbr.rel (0) target = $region5
    $region4: #{chaotic_gru_forward.1} parent=1 // pred_region
      _
    $region5: #{chaotic_gru_forward.1} parent=1 // pred_fallthru
      _
    // Predicated region
    $region6: #{chaotic_gru_forward.1} parent=1 // pred_check
      _
    $region7: #{chaotic_gru_forward.1} parent=1 // pred_check_branch
      %24 = sbr.rel (0) target = $region9
    $region8: #{chaotic_gru_forward.1} parent=1 // pred_region
      _
    $region9: #{chaotic_gru_forward.1} parent=1 // pred_fallthru
      _
    // Predicated region
    $region10: #{chaotic_gru_forward.1} parent=1 // pred_check
      _
    $region11: #{chaotic_gru_forward.1} parent=1 // pred_check_branch
      %26 = sbr.rel (0) target = $region13
    $region12: #{chaotic_gru_forward.1} parent=1 // pred_region
      _
    $region13: #{chaotic_gru_forward.1} parent=1 // pred_fallthru
      _
    // Predicated region
    $region14: #{chaotic_gru_forward.1} parent=1 // pred_check
      _
    $region15: #{chaotic_gru_forward.1} parent=1 // pred_check_branch
      %28 = sbr.rel (0) target = $region17
    $region16: #{chaotic_gru_forward.1} parent=1 // pred_region
      %s30 = ssub.s32 3072, 3072
      %31 = vsyncadd [#allocation3], %s30
      %s32 = sshll.u32 [#allocation2], 4
      %s33 = int_to_ptr.vmem [resolvable:$true] %s32
      %38 = dma.hbm_to_vmem [thread:$0]  %s3, 3072, %s33, [#allocation3], 192, 192, 12
    $region17: #{chaotic_gru_forward.1} parent=1 // pred_fallthru
      _
    // Predicated region
    $region18: #{chaotic_gru_forward.1} parent=1 // pred_check
      _
    $region19: #{chaotic_gru_forward.1} parent=1 // pred_check_branch
      %40 = sbr.rel (0) target = $region21
    $region20: #{chaotic_gru_forward.1} parent=1 // pred_region
      _
    $region21: #{chaotic_gru_forward.1} parent=1 // pred_fallthru
      _
    // Predicated region
    $region22: #{chaotic_gru_forward.1} parent=1 // pred_check
      _
    $region23: #{chaotic_gru_forward.1} parent=1 // pred_check_branch
      %42 = sbr.rel (0) target = $region25
    $region24: #{chaotic_gru_forward.1} parent=1 // pred_region
      %s44 = ssub.s32 1024, 1024
      %45 = vsyncadd [#allocation5], %s44
      %s46 = sshll.u32 [#allocation4], 4
      %s47 = int_to_ptr.vmem [resolvable:$true] %s46
      %52 = dma.hbm_to_vmem [thread:$0]  %s5, 1024, %s47, [#allocation5], 64, 64, 4
    $region25: #{chaotic_gru_forward.1} parent=1 // pred_fallthru
      _
    // Predicated region
    $region26: #{chaotic_gru_forward.1} parent=1 // pred_check
      _
    $region27: #{chaotic_gru_forward.1} parent=1 // pred_check_branch
      %54 = sbr.rel (0) target = $region29
    $region28: #{chaotic_gru_forward.1} parent=1 // pred_region
      %s56 = ssub.s32 1024, 1024
      %57 = vsyncadd [#allocation5], %s56
      %s58 = sshll.u32 [#allocation6], 4
      %s59 = int_to_ptr.vmem [resolvable:$true] %s58
      %64 = dma.hbm_to_vmem [thread:$0]  %s6, 1024, %s59, [#allocation5], 64, 64, 4
    $region29: #{chaotic_gru_forward.1} parent=1 // pred_fallthru
      _
    // Predicated region
    $region30: #{chaotic_gru_forward.1} parent=1 // pred_check
      _
    $region31: #{chaotic_gru_forward.1} parent=1 // pred_check_branch
      %66 = sbr.rel (0) target = $region33
    $region32: #{chaotic_gru_forward.1} parent=1 // pred_region
      _
    $region33: #{chaotic_gru_forward.1} parent=1 // pred_fallthru
      _
    // Predicated region
    $region34: #{chaotic_gru_forward.1} parent=1 // pred_check
      _
    $region35: #{chaotic_gru_forward.1} parent=1 // pred_check_branch
      %68 = sbr.rel (0) target = $region37
    $region36: #{chaotic_gru_forward.1} parent=1 // pred_region
      _
    $region37: #{chaotic_gru_forward.1} parent=1 // pred_fallthru
      _
    // Predicated region
    $region38: #{chaotic_gru_forward.1} parent=1 // pred_check
      _
    $region39: #{chaotic_gru_forward.1} parent=1 // pred_check_branch
      %70 = sbr.rel (0) target = $region41
    $region40: #{chaotic_gru_forward.1} parent=1 // pred_region
      _
    $region41: #{chaotic_gru_forward.1} parent=1 // pred_fallthru
      _
    // Predicated region
    $region42: #{chaotic_gru_forward.1} parent=1 // pred_check
      _
    $region43: #{chaotic_gru_forward.1} parent=1 // pred_check_branch
      %72 = sbr.rel (0) target = $region45
    $region44: #{chaotic_gru_forward.1} parent=1 // pred_region
      _
    $region45: #{chaotic_gru_forward.1} parent=1 // pred_fallthru
      _
    // Predicated region
    $region46: #{chaotic_gru_forward.1} parent=1 // pred_check
      _
    $region47: #{chaotic_gru_forward.1} parent=1 // pred_check_branch
      %74 = sbr.rel (0) target = $region49
    $region48: #{chaotic_gru_forward.1} parent=1 // pred_region
      %75 = dma.done [#allocation3], 3072
    $region49: #{chaotic_gru_forward.1} parent=1 // pred_fallthru
      _
    // Predicated region
    $region50: #{chaotic_gru_forward.1} parent=1 // pred_check
      _
    $region51: #{chaotic_gru_forward.1} parent=1 // pred_check_branch
      %77 = sbr.rel (0) target = $region53
    $region52: #{chaotic_gru_forward.1} parent=1 // pred_region
      %78 = dma.done [#allocation5], 1024
    $region53: #{chaotic_gru_forward.1} parent=1 // pred_fallthru
      _
    // Predicated region
    $region54: #{chaotic_gru_forward.1} parent=1 // pred_check
      _
    $region55: #{chaotic_gru_forward.1} parent=1 // pred_check_branch
      %80 = sbr.rel (0) target = $region57
    $region56: #{chaotic_gru_forward.1} parent=1 // pred_region
      %81 = dma.done [#allocation5], 1024
    $region57: #{chaotic_gru_forward.1} parent=1 // pred_fallthru
      _
    %p83 = scmp.eq.s32.totalorder 0, 0
    // Predicated region
    $region58: #{chaotic_gru_forward.1} parent=1 // pred_check
      %p84 = pneg %p83
    $region59: #{chaotic_gru_forward.1} parent=1 // pred_check_branch
      %86 = sbr.rel (%p84) target = $region61
    $region60: #{chaotic_gru_forward.1} parent=1 // pred_region
      %v87 = vld [vmem:[%s1] sm:$0xff]
      %88 = vst [vmem:[%s12] sm:$0xff] %v87
      %v89 = vld [vmem:[%s2] sm:$0xff]
      %90 = vst [vmem:[%s13] sm:$0xff] %v89
    $region61: #{chaotic_gru_forward.1} parent=1 // pred_fallthru
      _
    %v91 = vld [vmem:[%s7] sm:$0x3]
    %v93 = vlaneseq
    %v94 = vshrl.u32 %v93, 7
    %v95 = vsub.s32 0, %v94
    %v96 = vrot.slane %v91, %v95
    %v97 = vlaneseq
    %v98 = vshrl.u32 %v97, 7
    %v99 = vsub.s32 1, %v98
    %v100 = vrot.slane %v91, %v99
    %v103 = vld [vmem:[%s8] sm:$0x1]
    %v105 = vlaneseq
    %v106 = vshrl.u32 %v105, 7
    %v107 = vsub.s32 0, %v106
    %v108 = vrot.slane %v103, %v107
    %v110 = vld [vmem:[%s9] sm:$0x1]
    %v112 = vlaneseq
    %v113 = vshrl.u32 %v112, 7
    %v114 = vsub.s32 0, %v113
    %v115 = vrot.slane %v110, %v114
    %v117 = vld [vmem:[%s10] sm:$0x1]
    %v119 = vlaneseq
    %v120 = vshrl.u32 %v119, 7
    %v121 = vsub.s32 0, %v120
    %v122 = vrot.slane %v117, %v121
    %v124 = vld [vmem:[%s12] sm:$0xff]
    %v125 = vld [vmem:[%s13] sm:$0xff]
    %v126 = vld [vmem:[%s0] sm:$0xff]
    %v127 = vld [vmem:[%s0 + $0x8] sm:$0xff]
    %v128 = vld [vmem:[%s0 + $0x10] sm:$0xff]
    %v129 = vpack.c.bf16 %v124, %v124
    %v130 = vld [vmem:[#allocation2] sm:$0xff]
    %v131 = vld [vmem:[#allocation2 + $0x8] sm:$0xf]
    %v132 = vld [vmem:[#allocation2 + $0xc] sm:$0xff]
    %v133 = vld [vmem:[#allocation2 + $0x14] sm:$0xf]
    %v134 = vld [vmem:[#allocation2 + $0x18] sm:$0xff]
    %v135 = vld [vmem:[#allocation2 + $0x20] sm:$0xf]
    %v136 = vld [vmem:[#allocation2 + $0x24] sm:$0xff]
    %v137 = vld [vmem:[#allocation2 + $0x2c] sm:$0xf]
    %v138 = vld [vmem:[#allocation2 + $0x30] sm:$0xff]
    %v139 = vld [vmem:[#allocation2 + $0x38] sm:$0xf]
    %v140 = vld [vmem:[#allocation2 + $0x3c] sm:$0xff]
    %v141 = vld [vmem:[#allocation2 + $0x44] sm:$0xf]
    %v142 = vld [vmem:[#allocation2 + $0x48] sm:$0xff]
    %v143 = vld [vmem:[#allocation2 + $0x50] sm:$0xf]
    %v144 = vld [vmem:[#allocation2 + $0x54] sm:$0xff]
    %v145 = vld [vmem:[#allocation2 + $0x5c] sm:$0xf]
    %v146 = vld [vmem:[#allocation2 + $0x60] sm:$0xff]
    %v147 = vld [vmem:[#allocation2 + $0x68] sm:$0xf]
    %v148 = vld [vmem:[#allocation2 + $0x6c] sm:$0xff]
    %v149 = vld [vmem:[#allocation2 + $0x74] sm:$0xf]
    %v150 = vld [vmem:[#allocation2 + $0x78] sm:$0xff]
    %v151 = vld [vmem:[#allocation2 + $0x80] sm:$0xf]
    %v152 = vld [vmem:[#allocation2 + $0x84] sm:$0xff]
    %v153 = vld [vmem:[#allocation2 + $0x8c] sm:$0xf]
    %v154 = vld [vmem:[#allocation2 + $0x90] sm:$0xff]
    %v155 = vld [vmem:[#allocation2 + $0x98] sm:$0xf]
    %v156 = vld [vmem:[#allocation2 + $0x9c] sm:$0xff]
    %v157 = vld [vmem:[#allocation2 + $0xa4] sm:$0xf]
    %v158 = vld [vmem:[#allocation2 + $0xa8] sm:$0xff]
    %v159 = vld [vmem:[#allocation2 + $0xb0] sm:$0xf]
    %v160 = vld [vmem:[#allocation2 + $0xb4] sm:$0xff]
    %v161 = vld [vmem:[#allocation2 + $0xbc] sm:$0xf]
    %v194 = vunpack.c.l.b16 %v130
    %v195 = vunpack.c.h.b16 %v130
    %v196 = vunpack.c.l.b16 %v131
    %v197 = vunpack.c.l.b16 %v132
    %v198 = vunpack.c.h.b16 %v132
    %v199 = vunpack.c.l.b16 %v133
    %v200 = vunpack.c.l.b16 %v134
    %v201 = vunpack.c.h.b16 %v134
    %v202 = vunpack.c.l.b16 %v135
    %v203 = vunpack.c.l.b16 %v136
    %v204 = vunpack.c.h.b16 %v136
    %v205 = vunpack.c.l.b16 %v137
    %v206 = vunpack.c.l.b16 %v138
    %v207 = vunpack.c.h.b16 %v138
    %v208 = vunpack.c.l.b16 %v139
    %v209 = vunpack.c.l.b16 %v140
    %v210 = vunpack.c.h.b16 %v140
    %v211 = vunpack.c.l.b16 %v141
    %v212 = vunpack.c.l.b16 %v142
    %v213 = vunpack.c.h.b16 %v142
    %v214 = vunpack.c.l.b16 %v143
    %v215 = vunpack.c.l.b16 %v144
    %v216 = vunpack.c.h.b16 %v144
    %v217 = vunpack.c.l.b16 %v145
    %v218 = vunpack.c.l.b16 %v146
    %v219 = vunpack.c.h.b16 %v146
    %v220 = vunpack.c.l.b16 %v147
    %v221 = vunpack.c.l.b16 %v148
    %v222 = vunpack.c.h.b16 %v148
    %v223 = vunpack.c.l.b16 %v149
    %v224 = vunpack.c.l.b16 %v150
    %v225 = vunpack.c.h.b16 %v150
    %v226 = vunpack.c.l.b16 %v151
    %v227 = vunpack.c.l.b16 %v152
    %v228 = vunpack.c.h.b16 %v152
    %v229 = vunpack.c.l.b16 %v153
    %v230 = vunpack.c.l.b16 %v154
    %v231 = vunpack.c.h.b16 %v154
    %v232 = vunpack.c.l.b16 %v155
    %v233 = vunpack.c.l.b16 %v156
    %v234 = vunpack.c.h.b16 %v156
    %v235 = vunpack.c.l.b16 %v157
    %v236 = vunpack.c.l.b16 %v158
    %v237 = vunpack.c.h.b16 %v158
    %v238 = vunpack.c.l.b16 %v159
    %v239 = vunpack.c.l.b16 %v160
    %v240 = vunpack.c.h.b16 %v160
    %v241 = vunpack.c.l.b16 %v161
    %v242 = vpack.c.b16 %v197, %v194
    %v243 = vpack.c.b16 %v198, %v195
    %v244 = vpack.c.b16 %v199, %v196
    %v245 = vpack.c.b16 %v203, %v200
    %v246 = vpack.c.b16 %v204, %v201
    %v247 = vpack.c.b16 %v205, %v202
    %v248 = vpack.c.b16 %v209, %v206
    %v249 = vpack.c.b16 %v210, %v207
    %v250 = vpack.c.b16 %v211, %v208
    %v251 = vpack.c.b16 %v215, %v212
    %v252 = vpack.c.b16 %v216, %v213
    %v253 = vpack.c.b16 %v217, %v214
    %v254 = vpack.c.b16 %v221, %v218
    %v255 = vpack.c.b16 %v222, %v219
    %v256 = vpack.c.b16 %v223, %v220
    %v257 = vpack.c.b16 %v227, %v224
    %v258 = vpack.c.b16 %v228, %v225
    %v259 = vpack.c.b16 %v229, %v226
    %v260 = vpack.c.b16 %v233, %v230
    %v261 = vpack.c.b16 %v234, %v231
    %v262 = vpack.c.b16 %v235, %v232
    %v263 = vpack.c.b16 %v239, %v236
    %v264 = vpack.c.b16 %v240, %v237
    %v265 = vpack.c.b16 %v241, %v238
    %290 = vmatprep.subr.bf16.mxu0 %v243
    %291 = vmatpush1.bf16.msra.mxu0 %v242
    %292 = vmatprep.subr.bf16.mxu0 %v246
    %293 = vmatpush1.bf16.msra.mxu0 %v245
    %294 = vmatprep.subr.bf16.mxu0 %v249
    %295 = vmatpush1.bf16.msra.mxu0 %v248
    %296 = vmatprep.subr.bf16.mxu0 %v252
    %297 = vmatpush1.bf16.msra.mxu0 %v251
    %298 = vmatprep.subr.bf16.mxu0 %v255
    %299 = vmatpush1.bf16.msra.mxu0 %v254
    %300 = vmatprep.subr.bf16.mxu0 %v258
    %301 = vmatpush1.bf16.msra.mxu0 %v257
    %302 = vmatprep.subr.bf16.mxu0 %v261
    %303 = vmatpush1.bf16.msra.mxu0 %v260
    %304 = vmatprep.subr.bf16.mxu0 %v264
    %305 = vmatpush1.bf16.msra.mxu0 %v263
    %306 = vmatprep.subr.bf16.mxu0 0
    %307 = vmatpush1.bf16.msra.mxu0 0
    %308 = vmatprep.subr.bf16.mxu0 0
    %309 = vmatpush1.bf16.msra.mxu0 0
    %310 = vmatprep.subr.bf16.mxu0 0
    %311 = vmatpush1.bf16.msra.mxu0 0
    %312 = vmatprep.subr.bf16.mxu0 0
    %313 = vmatpush1.bf16.msra.mxu0 0
    %314 = vmatprep.subr.bf16.mxu0 0
    %315 = vmatpush1.bf16.msra.mxu0 0
    %316 = vmatprep.subr.bf16.mxu0 0
    %317 = vmatpush1.bf16.msra.mxu0 0
    %318 = vmatprep.subr.bf16.mxu0 0
    %319 = vmatpush1.bf16.msra.mxu0 0
    %320 = vmatprep.subr.bf16.mxu0 0
    %321 = vmatpush1.bf16.msra.mxu0 0
    %322 = vmatprep.mubr.bf16.mxu0 0
    %323 = vmatmul.mubr.bf16.gmra.mrb[0].mxu0 %v129
    %v324 = vpop.f32.mrb[0].mxu0
    %v325 = vadd.f32 0.0, %v324
    %v326 = vpop.f32.mrb[0].mxu0
    %v327 = vadd.f32 0.0, %v326
    %v328 = vpop.f32.mrb[0].mxu0
    %v329 = vpop.f32.mrb[0].mxu0
    %330 = vdwg.mxu0
    %331 = vmatprep.subr.bf16.mxu0 0
    %332 = vmatpush1.bf16.msra.mxu0 %v244
    %333 = vmatprep.subr.bf16.mxu0 0
    %334 = vmatpush1.bf16.msra.mxu0 %v247
    %335 = vmatprep.subr.bf16.mxu0 0
    %336 = vmatpush1.bf16.msra.mxu0 %v250
    %337 = vmatprep.subr.bf16.mxu0 0
    %338 = vmatpush1.bf16.msra.mxu0 %v253
    %339 = vmatprep.subr.bf16.mxu0 0
    %340 = vmatpush1.bf16.msra.mxu0 %v256
    %341 = vmatprep.subr.bf16.mxu0 0
    %342 = vmatpush1.bf16.msra.mxu0 %v259
    %343 = vmatprep.subr.bf16.mxu0 0
    %344 = vmatpush1.bf16.msra.mxu0 %v262
    %345 = vmatprep.subr.bf16.mxu0 0
    %346 = vmatpush1.bf16.msra.mxu0 %v265
    %347 = vmatprep.subr.bf16.mxu0 0
    %348 = vmatpush1.bf16.msra.mxu0 0
    %349 = vmatprep.subr.bf16.mxu0 0
    %350 = vmatpush1.bf16.msra.mxu0 0
    %351 = vmatprep.subr.bf16.mxu0 0
    %352 = vmatpush1.bf16.msra.mxu0 0
    %353 = vmatprep.subr.bf16.mxu0 0
    %354 = vmatpush1.bf16.msra.mxu0 0
    %355 = vmatprep.subr.bf16.mxu0 0
    %356 = vmatpush1.bf16.msra.mxu0 0
    %357 = vmatprep.subr.bf16.mxu0 0
    %358 = vmatpush1.bf16.msra.mxu0 0
    %359 = vmatprep.subr.bf16.mxu0 0
    %360 = vmatpush1.bf16.msra.mxu0 0
    %361 = vmatprep.subr.bf16.mxu0 0
    %362 = vmatpush1.bf16.msra.mxu0 0
    %363 = vmatprep.mubr.bf16.mxu0 0
    %364 = vmatmul.mubr.bf16.gmra.mrb[0].mxu0 %v129
    %v365 = vpop.f32.mrb[0].mxu0
    %v366 = vadd.f32 0.0, %v365
    %v367 = vpop.f32.mrb[0].mxu0
    %v368 = vpop.f32.mrb[0].mxu0
    %v369 = vpop.f32.mrb[0].mxu0
    %370 = vdwg.mxu0
    %v371 = vadd.f32 %v126, %v325
    %v372 = vadd.f32 %v127, %v327
    %v373 = vxor.u32 %v371, 2147483648
    %v374 = vxor.u32 %v372, 2147483648
    %v375 = vmul.f32 %v373, 1.442695
    %v376 = vpow.pop %v375
    %v377 = vmul.f32 %v374, 1.442695
    %v378 = vpow.pop %v377
    %v379 = vadd.f32 %v376, 1.0
    %v380 = vadd.f32 %v378, 1.0
    %v381 = vrcp.pop %v379
    %v382 = vmul.f32 1.0, %v381
    %v383 = vrcp.pop %v380
    %v384 = vmul.f32 1.0, %v383
    %v385 = vadd.f32 %v366, %v115
    %v386 = vmul.f32 %v382, %v385
    %v387 = vadd.f32 %v128, %v386
    %v388 = vtanh.pop %v387
    %v389 = vsub.f32 1.0, %v384
    %v390 = vmul.f32 %v389, %v388
    %v391 = vmul.f32 %v384, %v124
    %v392 = vadd.f32 %v390, %v391
    %v393 = vpack.c.bf16 %v392, %v392
    %v394 = vpack.c.bf16 %v125, %v125
    %v395 = vld [vmem:[%s4] sm:$0xff]
    %v396 = vld [vmem:[%s4 + $0x8] sm:$0xff]
    %v397 = vld [vmem:[%s4 + $0x10] sm:$0xff]
    %v398 = vld [vmem:[%s4 + $0x18] sm:$0xff]
    %v399 = vld [vmem:[%s4 + $0x20] sm:$0xff]
    %v400 = vld [vmem:[%s4 + $0x28] sm:$0xff]
    %v401 = vld [vmem:[%s4 + $0x30] sm:$0xff]
    %v402 = vld [vmem:[%s4 + $0x38] sm:$0xff]
    %v403 = vld [vmem:[%s4 + $0x40] sm:$0xff]
    %v404 = vld [vmem:[%s4 + $0x48] sm:$0xff]
    %v405 = vld [vmem:[%s4 + $0x50] sm:$0xff]
    %v406 = vld [vmem:[%s4 + $0x58] sm:$0xff]
    %v407 = vld [vmem:[%s4 + $0x60] sm:$0xff]
    %v408 = vld [vmem:[%s4 + $0x68] sm:$0xff]
    %v409 = vld [vmem:[%s4 + $0x70] sm:$0xff]
    %v410 = vld [vmem:[%s4 + $0x78] sm:$0xff]
    %v411 = vld [vmem:[%s4 + $0x80] sm:$0xff]
    %v412 = vld [vmem:[%s4 + $0x88] sm:$0xff]
    %v413 = vld [vmem:[%s4 + $0x90] sm:$0xff]
    %v414 = vld [vmem:[%s4 + $0x98] sm:$0xff]
    %v415 = vld [vmem:[%s4 + $0xa0] sm:$0xff]
    %v416 = vld [vmem:[%s4 + $0xa8] sm:$0xff]
    %v417 = vld [vmem:[%s4 + $0xb0] sm:$0xff]
    %v418 = vld [vmem:[%s4 + $0xb8] sm:$0xff]
    %v419 = vld [vmem:[%s4 + $0xc0] sm:$0xff]
    %v420 = vld [vmem:[%s4 + $0xc8] sm:$0xff]
    %v421 = vld [vmem:[%s4 + $0xd0] sm:$0xff]
    %v422 = vld [vmem:[%s4 + $0xd8] sm:$0xff]
    %v423 = vld [vmem:[%s4 + $0xe0] sm:$0xff]
    %v424 = vld [vmem:[%s4 + $0xe8] sm:$0xff]
    %v425 = vld [vmem:[%s4 + $0xf0] sm:$0xff]
    %v426 = vld [vmem:[%s4 + $0xf8] sm:$0xff]
    %v459 = vunpack.c.l.b16 %v395
    %v460 = vunpack.c.h.b16 %v395
    %v461 = vunpack.c.l.b16 %v396
    %v462 = vunpack.c.h.b16 %v396
    %v463 = vunpack.c.l.b16 %v397
    %v464 = vunpack.c.h.b16 %v397
    %v465 = vunpack.c.l.b16 %v398
    %v466 = vunpack.c.h.b16 %v398
    %v467 = vunpack.c.l.b16 %v399
    %v468 = vunpack.c.h.b16 %v399
    %v469 = vunpack.c.l.b16 %v400
    %v470 = vunpack.c.h.b16 %v400
    %v471 = vunpack.c.l.b16 %v401
    %v472 = vunpack.c.h.b16 %v401
    %v473 = vunpack.c.l.b16 %v402
    %v474 = vunpack.c.h.b16 %v402
    %v475 = vunpack.c.l.b16 %v403
    %v476 = vunpack.c.h.b16 %v403
    %v477 = vunpack.c.l.b16 %v404
    %v478 = vunpack.c.h.b16 %v404
    %v479 = vunpack.c.l.b16 %v405
    %v480 = vunpack.c.h.b16 %v405
    %v481 = vunpack.c.l.b16 %v406
    %v482 = vunpack.c.h.b16 %v406
    %v483 = vunpack.c.l.b16 %v407
    %v484 = vunpack.c.h.b16 %v407
    %v485 = vunpack.c.l.b16 %v408
    %v486 = vunpack.c.h.b16 %v408
    %v487 = vunpack.c.l.b16 %v409
    %v488 = vunpack.c.h.b16 %v409
    %v489 = vunpack.c.l.b16 %v410
    %v490 = vunpack.c.h.b16 %v410
    %v491 = vunpack.c.l.b16 %v411
    %v492 = vunpack.c.h.b16 %v411
    %v493 = vunpack.c.l.b16 %v412
    %v494 = vunpack.c.h.b16 %v412
    %v495 = vunpack.c.l.b16 %v413
    %v496 = vunpack.c.h.b16 %v413
    %v497 = vunpack.c.l.b16 %v414
    %v498 = vunpack.c.h.b16 %v414
    %v499 = vunpack.c.l.b16 %v415
    %v500 = vunpack.c.h.b16 %v415
    %v501 = vunpack.c.l.b16 %v416
    %v502 = vunpack.c.h.b16 %v416
    %v503 = vunpack.c.l.b16 %v417
    %v504 = vunpack.c.h.b16 %v417
    %v505 = vunpack.c.l.b16 %v418
    %v506 = vunpack.c.h.b16 %v418
    %v507 = vunpack.c.l.b16 %v419
    %v508 = vunpack.c.h.b16 %v419
    %v509 = vunpack.c.l.b16 %v420
    %v510 = vunpack.c.h.b16 %v420
    %v511 = vunpack.c.l.b16 %v421
    %v512 = vunpack.c.h.b16 %v421
    %v513 = vunpack.c.l.b16 %v422
    %v514 = vunpack.c.h.b16 %v422
    %v515 = vunpack.c.l.b16 %v423
    %v516 = vunpack.c.h.b16 %v423
    %v517 = vunpack.c.l.b16 %v424
    %v518 = vunpack.c.h.b16 %v424
    %v519 = vunpack.c.l.b16 %v425
    %v520 = vunpack.c.h.b16 %v425
    %v521 = vunpack.c.l.b16 %v426
    %v522 = vunpack.c.h.b16 %v426
    %v523 = vpack.c.b16 %v461, %v459
    %v524 = vpack.c.b16 %v462, %v460
    %v525 = vpack.c.b16 %v465, %v463
    %v526 = vpack.c.b16 %v466, %v464
    %v527 = vpack.c.b16 %v469, %v467
    %v528 = vpack.c.b16 %v470, %v468
    %v529 = vpack.c.b16 %v473, %v471
    %v530 = vpack.c.b16 %v474, %v472
    %v531 = vpack.c.b16 %v477, %v475
    %v532 = vpack.c.b16 %v478, %v476
    %v533 = vpack.c.b16 %v481, %v479
    %v534 = vpack.c.b16 %v482, %v480
    %v535 = vpack.c.b16 %v485, %v483
    %v536 = vpack.c.b16 %v486, %v484
    %v537 = vpack.c.b16 %v489, %v487
    %v538 = vpack.c.b16 %v490, %v488
    %v539 = vpack.c.b16 %v493, %v491
    %v540 = vpack.c.b16 %v494, %v492
    %v541 = vpack.c.b16 %v497, %v495
    %v542 = vpack.c.b16 %v498, %v496
    %v543 = vpack.c.b16 %v501, %v499
    %v544 = vpack.c.b16 %v502, %v500
    %v545 = vpack.c.b16 %v505, %v503
    %v546 = vpack.c.b16 %v506, %v504
    %v547 = vpack.c.b16 %v509, %v507
    %v548 = vpack.c.b16 %v510, %v508
    %v549 = vpack.c.b16 %v513, %v511
    %v550 = vpack.c.b16 %v514, %v512
    %v551 = vpack.c.b16 %v517, %v515
    %v552 = vpack.c.b16 %v518, %v516
    %v553 = vpack.c.b16 %v521, %v519
    %v554 = vpack.c.b16 %v522, %v520
    %587 = vmatprep.subr.bf16.mxu0 %v524
    %588 = vmatpush1.bf16.msra.mxu0 %v523
    %589 = vmatprep.subr.bf16.mxu0 %v526
    %590 = vmatpush1.bf16.msra.mxu0 %v525
    %591 = vmatprep.subr.bf16.mxu0 %v528
    %592 = vmatpush1.bf16.msra.mxu0 %v527
    %593 = vmatprep.subr.bf16.mxu0 %v530
    %594 = vmatpush1.bf16.msra.mxu0 %v529
    %595 = vmatprep.subr.bf16.mxu0 %v532
    %596 = vmatpush1.bf16.msra.mxu0 %v531
    %597 = vmatprep.subr.bf16.mxu0 %v534
    %598 = vmatpush1.bf16.msra.mxu0 %v533
    %599 = vmatprep.subr.bf16.mxu0 %v536
    %600 = vmatpush1.bf16.msra.mxu0 %v535
    %601 = vmatprep.subr.bf16.mxu0 %v538
    %602 = vmatpush1.bf16.msra.mxu0 %v537
    %603 = vmatprep.subr.bf16.mxu0 %v540
    %604 = vmatpush1.bf16.msra.mxu0 %v539
    %605 = vmatprep.subr.bf16.mxu0 %v542
    %606 = vmatpush1.bf16.msra.mxu0 %v541
    %607 = vmatprep.subr.bf16.mxu0 %v544
    %608 = vmatpush1.bf16.msra.mxu0 %v543
    %609 = vmatprep.subr.bf16.mxu0 %v546
    %610 = vmatpush1.bf16.msra.mxu0 %v545
    %611 = vmatprep.subr.bf16.mxu0 %v548
    %612 = vmatpush1.bf16.msra.mxu0 %v547
    %613 = vmatprep.subr.bf16.mxu0 %v550
    %614 = vmatpush1.bf16.msra.mxu0 %v549
    %615 = vmatprep.subr.bf16.mxu0 %v552
    %616 = vmatpush1.bf16.msra.mxu0 %v551
    %617 = vmatprep.subr.bf16.mxu0 %v554
    %618 = vmatpush1.bf16.msra.mxu0 %v553
    %619 = vmatprep.mubr.bf16.mxu0 %v394
    %620 = vmatmul.mubr.bf16.gmra.mrb[0].mxu0 %v393
    %v621 = vpop.f32.mrb[0].mxu0
    %v622 = vadd.f32 %v96, %v621
    %v623 = vpop.f32.mrb[0].mxu0
    %v624 = vadd.f32 %v100, %v623
    %v625 = vpop.f32.mrb[0].mxu0
    %v626 = vpop.f32.mrb[0].mxu0
    %627 = vdwg.mxu0
    %v628 = vxor.u32 %v622, 2147483648
    %v629 = vxor.u32 %v624, 2147483648
    %v630 = vmul.f32 %v628, 1.442695
    %v631 = vpow.pop %v630
    %v632 = vmul.f32 %v629, 1.442695
    %v633 = vpow.pop %v632
    %v634 = vadd.f32 %v631, 1.0
    %v635 = vadd.f32 %v633, 1.0
    %v636 = vrcp.pop %v634
    %v637 = vmul.f32 1.0, %v636
    %v638 = vrcp.pop %v635
    %v639 = vmul.f32 1.0, %v638
    %v640 = vld [vmem:[#allocation4] sm:$0xf]
    %v641 = vld [vmem:[#allocation4 + $0x4] sm:$0xf]
    %v642 = vld [vmem:[#allocation4 + $0x8] sm:$0xf]
    %v643 = vld [vmem:[#allocation4 + $0xc] sm:$0xf]
    %v644 = vld [vmem:[#allocation4 + $0x10] sm:$0xf]
    %v645 = vld [vmem:[#allocation4 + $0x14] sm:$0xf]
    %v646 = vld [vmem:[#allocation4 + $0x18] sm:$0xf]
    %v647 = vld [vmem:[#allocation4 + $0x1c] sm:$0xf]
    %v648 = vld [vmem:[#allocation4 + $0x20] sm:$0xf]
    %v649 = vld [vmem:[#allocation4 + $0x24] sm:$0xf]
    %v650 = vld [vmem:[#allocation4 + $0x28] sm:$0xf]
    %v651 = vld [vmem:[#allocation4 + $0x2c] sm:$0xf]
    %v652 = vld [vmem:[#allocation4 + $0x30] sm:$0xf]
    %v653 = vld [vmem:[#allocation4 + $0x34] sm:$0xf]
    %v654 = vld [vmem:[#allocation4 + $0x38] sm:$0xf]
    %v655 = vld [vmem:[#allocation4 + $0x3c] sm:$0xf]
    %v672 = vunpack.c.l.b16 %v640
    %v673 = vunpack.c.l.b16 %v641
    %v674 = vunpack.c.l.b16 %v642
    %v675 = vunpack.c.l.b16 %v643
    %v676 = vunpack.c.l.b16 %v644
    %v677 = vunpack.c.l.b16 %v645
    %v678 = vunpack.c.l.b16 %v646
    %v679 = vunpack.c.l.b16 %v647
    %v680 = vunpack.c.l.b16 %v648
    %v681 = vunpack.c.l.b16 %v649
    %v682 = vunpack.c.l.b16 %v650
    %v683 = vunpack.c.l.b16 %v651
    %v684 = vunpack.c.l.b16 %v652
    %v685 = vunpack.c.l.b16 %v653
    %v686 = vunpack.c.l.b16 %v654
    %v687 = vunpack.c.l.b16 %v655
    %v688 = vpack.c.b16 %v673, %v672
    %v689 = vpack.c.b16 %v675, %v674
    %v690 = vpack.c.b16 %v677, %v676
    %v691 = vpack.c.b16 %v679, %v678
    %v692 = vpack.c.b16 %v681, %v680
    %v693 = vpack.c.b16 %v683, %v682
    %v694 = vpack.c.b16 %v685, %v684
    %v695 = vpack.c.b16 %v687, %v686
    %704 = vmatprep.subr.bf16.mxu0 0
    %705 = vmatpush1.bf16.msra.mxu0 %v688
    %706 = vmatprep.subr.bf16.mxu0 0
    %707 = vmatpush1.bf16.msra.mxu0 %v689
    %708 = vmatprep.subr.bf16.mxu0 0
    %709 = vmatpush1.bf16.msra.mxu0 %v690
    %710 = vmatprep.subr.bf16.mxu0 0
    %711 = vmatpush1.bf16.msra.mxu0 %v691
    %712 = vmatprep.subr.bf16.mxu0 0
    %713 = vmatpush1.bf16.msra.mxu0 %v692
    %714 = vmatprep.subr.bf16.mxu0 0
    %715 = vmatpush1.bf16.msra.mxu0 %v693
    %716 = vmatprep.subr.bf16.mxu0 0
    %717 = vmatpush1.bf16.msra.mxu0 %v694
    %718 = vmatprep.subr.bf16.mxu0 0
    %719 = vmatpush1.bf16.msra.mxu0 %v695
    %720 = vmatprep.subr.bf16.mxu0 0
    %721 = vmatpush1.bf16.msra.mxu0 0
    %722 = vmatprep.subr.bf16.mxu0 0
    %723 = vmatpush1.bf16.msra.mxu0 0
    %724 = vmatprep.subr.bf16.mxu0 0
    %725 = vmatpush1.bf16.msra.mxu0 0
    %726 = vmatprep.subr.bf16.mxu0 0
    %727 = vmatpush1.bf16.msra.mxu0 0
    %728 = vmatprep.subr.bf16.mxu0 0
    %729 = vmatpush1.bf16.msra.mxu0 0
    %730 = vmatprep.subr.bf16.mxu0 0
    %731 = vmatpush1.bf16.msra.mxu0 0
    %732 = vmatprep.subr.bf16.mxu0 0
    %733 = vmatpush1.bf16.msra.mxu0 0
    %734 = vmatprep.subr.bf16.mxu0 0
    %735 = vmatpush1.bf16.msra.mxu0 0
    %736 = vmatprep.mubr.bf16.mxu0 0
    %737 = vmatmul.mubr.bf16.gmra.mrb[0].mxu0 %v393
    %v738 = vpop.f32.mrb[0].mxu0
    %v739 = vadd.f32 %v108, %v738
    %v740 = vpop.f32.mrb[0].mxu0
    %v741 = vpop.f32.mrb[0].mxu0
    %v742 = vpop.f32.mrb[0].mxu0
    %743 = vdwg.mxu0
    %v744 = vld [vmem:[#allocation6] sm:$0xf]
    %v745 = vld [vmem:[#allocation6 + $0x4] sm:$0xf]
    %v746 = vld [vmem:[#allocation6 + $0x8] sm:$0xf]
    %v747 = vld [vmem:[#allocation6 + $0xc] sm:$0xf]
    %v748 = vld [vmem:[#allocation6 + $0x10] sm:$0xf]
    %v749 = vld [vmem:[#allocation6 + $0x14] sm:$0xf]
    %v750 = vld [vmem:[#allocation6 + $0x18] sm:$0xf]
    %v751 = vld [vmem:[#allocation6 + $0x1c] sm:$0xf]
    %v752 = vld [vmem:[#allocation6 + $0x20] sm:$0xf]
    %v753 = vld [vmem:[#allocation6 + $0x24] sm:$0xf]
    %v754 = vld [vmem:[#allocation6 + $0x28] sm:$0xf]
    %v755 = vld [vmem:[#allocation6 + $0x2c] sm:$0xf]
    %v756 = vld [vmem:[#allocation6 + $0x30] sm:$0xf]
    %v757 = vld [vmem:[#allocation6 + $0x34] sm:$0xf]
    %v758 = vld [vmem:[#allocation6 + $0x38] sm:$0xf]
    %v759 = vld [vmem:[#allocation6 + $0x3c] sm:$0xf]
    %v776 = vunpack.c.l.b16 %v744
    %v777 = vunpack.c.l.b16 %v745
    %v778 = vunpack.c.l.b16 %v746
    %v779 = vunpack.c.l.b16 %v747
    %v780 = vunpack.c.l.b16 %v748
    %v781 = vunpack.c.l.b16 %v749
    %v782 = vunpack.c.l.b16 %v750
    %v783 = vunpack.c.l.b16 %v751
    %v784 = vunpack.c.l.b16 %v752
    %v785 = vunpack.c.l.b16 %v753
    %v786 = vunpack.c.l.b16 %v754
    %v787 = vunpack.c.l.b16 %v755
    %v788 = vunpack.c.l.b16 %v756
    %v789 = vunpack.c.l.b16 %v757
    %v790 = vunpack.c.l.b16 %v758
    %v791 = vunpack.c.l.b16 %v759
    %v792 = vpack.c.b16 %v777, %v776
    %v793 = vpack.c.b16 %v779, %v778
    %v794 = vpack.c.b16 %v781, %v780
    %v795 = vpack.c.b16 %v783, %v782
    %v796 = vpack.c.b16 %v785, %v784
    %v797 = vpack.c.b16 %v787, %v786
    %v798 = vpack.c.b16 %v789, %v788
    %v799 = vpack.c.b16 %v791, %v790
    %808 = vmatprep.subr.bf16.mxu0 0
    %809 = vmatpush1.bf16.msra.mxu0 %v792
    %810 = vmatprep.subr.bf16.mxu0 0
    %811 = vmatpush1.bf16.msra.mxu0 %v793
    %812 = vmatprep.subr.bf16.mxu0 0
    %813 = vmatpush1.bf16.msra.mxu0 %v794
    %814 = vmatprep.subr.bf16.mxu0 0
    %815 = vmatpush1.bf16.msra.mxu0 %v795
    %816 = vmatprep.subr.bf16.mxu0 0
    %817 = vmatpush1.bf16.msra.mxu0 %v796
    %818 = vmatprep.subr.bf16.mxu0 0
    %819 = vmatpush1.bf16.msra.mxu0 %v797
    %820 = vmatprep.subr.bf16.mxu0 0
    %821 = vmatpush1.bf16.msra.mxu0 %v798
    %822 = vmatprep.subr.bf16.mxu0 0
    %823 = vmatpush1.bf16.msra.mxu0 %v799
    %824 = vmatprep.subr.bf16.mxu0 0
    %825 = vmatpush1.bf16.msra.mxu0 0
    %826 = vmatprep.subr.bf16.mxu0 0
    %827 = vmatpush1.bf16.msra.mxu0 0
    %828 = vmatprep.subr.bf16.mxu0 0
    %829 = vmatpush1.bf16.msra.mxu0 0
    %830 = vmatprep.subr.bf16.mxu0 0
    %831 = vmatpush1.bf16.msra.mxu0 0
    %832 = vmatprep.subr.bf16.mxu0 0
    %833 = vmatpush1.bf16.msra.mxu0 0
    %834 = vmatprep.subr.bf16.mxu0 0
    %835 = vmatpush1.bf16.msra.mxu0 0
    %836 = vmatprep.subr.bf16.mxu0 0
    %837 = vmatpush1.bf16.msra.mxu0 0
    %838 = vmatprep.subr.bf16.mxu0 0
    %839 = vmatpush1.bf16.msra.mxu0 0
    %840 = vmatprep.mubr.bf16.mxu0 0
    %841 = vmatmul.mubr.bf16.gmra.mrb[0].mxu0 %v394
    %v842 = vpop.f32.mrb[0].mxu0
    %v843 = vadd.f32 %v122, %v842
    %v844 = vpop.f32.mrb[0].mxu0
    %v845 = vpop.f32.mrb[0].mxu0
    %v846 = vpop.f32.mrb[0].mxu0
    %847 = vdwg.mxu0
    %v848 = vmul.f32 %v637, %v843
    %v849 = vadd.f32 %v739, %v848
    %v850 = vtanh.pop %v849
    %v851 = vsub.f32 1.0, %v639
    %v852 = vmul.f32 %v851, %v850
    %v853 = vmul.f32 %v639, %v125
    %v854 = vadd.f32 %v852, %v853
    %855 = vst [vmem:[%s11] sm:$0xff] %v854
    %s856 = scalar_lea.vmem %s0, 24
    %v857 = vld [vmem:[%s856] sm:$0xff]
    %v858 = vld [vmem:[%s856 + $0x8] sm:$0xff]
    %v859 = vld [vmem:[%s856 + $0x10] sm:$0xff]
    %v860 = vld [vmem:[#allocation2] sm:$0xff]
    %v861 = vld [vmem:[#allocation2 + $0x8] sm:$0xf]
    %v862 = vld [vmem:[#allocation2 + $0xc] sm:$0xff]
    %v863 = vld [vmem:[#allocation2 + $0x14] sm:$0xf]
    %v864 = vld [vmem:[#allocation2 + $0x18] sm:$0xff]
    %v865 = vld [vmem:[#allocation2 + $0x20] sm:$0xf]
    %v866 = vld [vmem:[#allocation2 + $0x24] sm:$0xff]
    %v867 = vld [vmem:[#allocation2 + $0x2c] sm:$0xf]
    %v868 = vld [vmem:[#allocation2 + $0x30] sm:$0xff]
    %v869 = vld [vmem:[#allocation2 + $0x38] sm:$0xf]
    %v870 = vld [vmem:[#allocation2 + $0x3c] sm:$0xff]
    %v871 = vld [vmem:[#allocation2 + $0x44] sm:$0xf]
    %v872 = vld [vmem:[#allocation2 + $0x48] sm:$0xff]
    %v873 = vld [vmem:[#allocation2 + $0x50] sm:$0xf]
    %v874 = vld [vmem:[#allocation2 + $0x54] sm:$0xff]
    %v875 = vld [vmem:[#allocation2 + $0x5c] sm:$0xf]
    %v876 = vld [vmem:[#allocation2 + $0x60] sm:$0xff]
    %v877 = vld [vmem:[#allocation2 + $0x68] sm:$0xf]
    %v878 = vld [vmem:[#allocation2 + $0x6c] sm:$0xff]
    %v879 = vld [vmem:[#allocation2 + $0x74] sm:$0xf]
    %v880 = vld [vmem:[#allocation2 + $0x78] sm:$0xff]
    %v881 = vld [vmem:[#allocation2 + $0x80] sm:$0xf]
    %v882 = vld [vmem:[#allocation2 + $0x84] sm:$0xff]
    %v883 = vld [vmem:[#allocation2 + $0x8c] sm:$0xf]
    %v884 = vld [vmem:[#allocation2 + $0x90] sm:$0xff]
    %v885 = vld [vmem:[#allocation2 + $0x98] sm:$0xf]
    %v886 = vld [vmem:[#allocation2 + $0x9c] sm:$0xff]
    %v887 = vld [vmem:[#allocation2 + $0xa4] sm:$0xf]
    %v888 = vld [vmem:[#allocation2 + $0xa8] sm:$0xff]
    %v889 = vld [vmem:[#allocation2 + $0xb0] sm:$0xf]
    %v890 = vld [vmem:[#allocation2 + $0xb4] sm:$0xff]
    %v891 = vld [vmem:[#allocation2 + $0xbc] sm:$0xf]
    %v924 = vunpack.c.l.b16 %v860
    %v925 = vunpack.c.h.b16 %v860
    %v926 = vunpack.c.l.b16 %v861
    %v927 = vunpack.c.l.b16 %v862
    %v928 = vunpack.c.h.b16 %v862
    %v929 = vunpack.c.l.b16 %v863
    %v930 = vunpack.c.l.b16 %v864
    %v931 = vunpack.c.h.b16 %v864
    %v932 = vunpack.c.l.b16 %v865
    %v933 = vunpack.c.l.b16 %v866
    %v934 = vunpack.c.h.b16 %v866
    %v935 = vunpack.c.l.b16 %v867
    %v936 = vunpack.c.l.b16 %v868
    %v937 = vunpack.c.h.b16 %v868
    %v938 = vunpack.c.l.b16 %v869
    %v939 = vunpack.c.l.b16 %v870
    %v940 = vunpack.c.h.b16 %v870
    %v941 = vunpack.c.l.b16 %v871
    %v942 = vunpack.c.l.b16 %v872
    %v943 = vunpack.c.h.b16 %v872
    %v944 = vunpack.c.l.b16 %v873
    %v945 = vunpack.c.l.b16 %v874
    %v946 = vunpack.c.h.b16 %v874
    %v947 = vunpack.c.l.b16 %v875
    %v948 = vunpack.c.l.b16 %v876
    %v949 = vunpack.c.h.b16 %v876
    %v950 = vunpack.c.l.b16 %v877
    %v951 = vunpack.c.l.b16 %v878
    %v952 = vunpack.c.h.b16 %v878
    %v953 = vunpack.c.l.b16 %v879
    %v954 = vunpack.c.l.b16 %v880
    %v955 = vunpack.c.h.b16 %v880
    %v956 = vunpack.c.l.b16 %v881
    %v957 = vunpack.c.l.b16 %v882
    %v958 = vunpack.c.h.b16 %v882
    %v959 = vunpack.c.l.b16 %v883
    %v960 = vunpack.c.l.b16 %v884
    %v961 = vunpack.c.h.b16 %v884
    %v962 = vunpack.c.l.b16 %v885
    %v963 = vunpack.c.l.b16 %v886
    %v964 = vunpack.c.h.b16 %v886
    %v965 = vunpack.c.l.b16 %v887
    %v966 = vunpack.c.l.b16 %v888
    %v967 = vunpack.c.h.b16 %v888
    %v968 = vunpack.c.l.b16 %v889
    %v969 = vunpack.c.l.b16 %v890
    %v970 = vunpack.c.h.b16 %v890
    %v971 = vunpack.c.l.b16 %v891
    %v972 = vpack.c.b16 %v927, %v924
    %v973 = vpack.c.b16 %v928, %v925
    %v974 = vpack.c.b16 %v929, %v926
    %v975 = vpack.c.b16 %v933, %v930
    %v976 = vpack.c.b16 %v934, %v931
    %v977 = vpack.c.b16 %v935, %v932
    %v978 = vpack.c.b16 %v939, %v936
    %v979 = vpack.c.b16 %v940, %v937
    %v980 = vpack.c.b16 %v941, %v938
    %v981 = vpack.c.b16 %v945, %v942
    %v982 = vpack.c.b16 %v946, %v943
    %v983 = vpack.c.b16 %v947, %v944
    %v984 = vpack.c.b16 %v951, %v948
    %v985 = vpack.c.b16 %v952, %v949
    %v986 = vpack.c.b16 %v953, %v950
    %v987 = vpack.c.b16 %v957, %v954
    %v988 = vpack.c.b16 %v958, %v955
    %v989 = vpack.c.b16 %v959, %v956
    %v990 = vpack.c.b16 %v963, %v960
    %v991 = vpack.c.b16 %v964, %v961
    %v992 = vpack.c.b16 %v965, %v962
    %v993 = vpack.c.b16 %v969, %v966
    %v994 = vpack.c.b16 %v970, %v967
    %v995 = vpack.c.b16 %v971, %v968
    %1020 = vmatprep.subr.bf16.mxu0 %v973
    %1021 = vmatpush1.bf16.msra.mxu0 %v972
    %1022 = vmatprep.subr.bf16.mxu0 %v976
    %1023 = vmatpush1.bf16.msra.mxu0 %v975
    %1024 = vmatprep.subr.bf16.mxu0 %v979
    %1025 = vmatpush1.bf16.msra.mxu0 %v978
    %1026 = vmatprep.subr.bf16.mxu0 %v982
    %1027 = vmatpush1.bf16.msra.mxu0 %v981
    %1028 = vmatprep.subr.bf16.mxu0 %v985
    %1029 = vmatpush1.bf16.msra.mxu0 %v984
    %1030 = vmatprep.subr.bf16.mxu0 %v988
    %1031 = vmatpush1.bf16.msra.mxu0 %v987
    %1032 = vmatprep.subr.bf16.mxu0 %v991
    %1033 = vmatpush1.bf16.msra.mxu0 %v990
    %1034 = vmatprep.subr.bf16.mxu0 %v994
    %1035 = vmatpush1.bf16.msra.mxu0 %v993
    %1036 = vmatprep.subr.bf16.mxu0 0
    %1037 = vmatpush1.bf16.msra.mxu0 0
    %1038 = vmatprep.subr.bf16.mxu0 0
    %1039 = vmatpush1.bf16.msra.mxu0 0
    %1040 = vmatprep.subr.bf16.mxu0 0
    %1041 = vmatpush1.bf16.msra.mxu0 0
    %1042 = vmatprep.subr.bf16.mxu0 0
    %1043 = vmatpush1.bf16.msra.mxu0 0
    %1044 = vmatprep.subr.bf16.mxu0 0
    %1045 = vmatpush1.bf16.msra.mxu0 0
    %1046 = vmatprep.subr.bf16.mxu0 0
    %1047 = vmatpush1.bf16.msra.mxu0 0
    %1048 = vmatprep.subr.bf16.mxu0 0
    %1049 = vmatpush1.bf16.msra.mxu0 0
    %1050 = vmatprep.subr.bf16.mxu0 0
    %1051 = vmatpush1.bf16.msra.mxu0 0
    %1052 = vmatprep.mubr.bf16.mxu0 0
    %1053 = vmatmul.mubr.bf16.gmra.mrb[0].mxu0 %v393
    %v1054 = vpop.f32.mrb[0].mxu0
    %v1055 = vadd.f32 0.0, %v1054
    %v1056 = vpop.f32.mrb[0].mxu0
    %v1057 = vadd.f32 0.0, %v1056
    %v1058 = vpop.f32.mrb[0].mxu0
    %v1059 = vpop.f32.mrb[0].mxu0
    %1060 = vdwg.mxu0
    %1061 = vmatprep.subr.bf16.mxu0 0
    %1062 = vmatpush1.bf16.msra.mxu0 %v974
    %1063 = vmatprep.subr.bf16.mxu0 0
    %1064 = vmatpush1.bf16.msra.mxu0 %v977
    %1065 = vmatprep.subr.bf16.mxu0 0
    %1066 = vmatpush1.bf16.msra.mxu0 %v980
    %1067 = vmatprep.subr.bf16.mxu0 0
    %1068 = vmatpush1.bf16.msra.mxu0 %v983
    %1069 = vmatprep.subr.bf16.mxu0 0
    %1070 = vmatpush1.bf16.msra.mxu0 %v986
    %1071 = vmatprep.subr.bf16.mxu0 0
    %1072 = vmatpush1.bf16.msra.mxu0 %v989
    %1073 = vmatprep.subr.bf16.mxu0 0
    %1074 = vmatpush1.bf16.msra.mxu0 %v992
    %1075 = vmatprep.subr.bf16.mxu0 0
    %1076 = vmatpush1.bf16.msra.mxu0 %v995
    %1077 = vmatprep.subr.bf16.mxu0 0
    %1078 = vmatpush1.bf16.msra.mxu0 0
    %1079 = vmatprep.subr.bf16.mxu0 0
    %1080 = vmatpush1.bf16.msra.mxu0 0
    %1081 = vmatprep.subr.bf16.mxu0 0
    %1082 = vmatpush1.bf16.msra.mxu0 0
    %1083 = vmatprep.subr.bf16.mxu0 0
    %1084 = vmatpush1.bf16.msra.mxu0 0
    %1085 = vmatprep.subr.bf16.mxu0 0
    %1086 = vmatpush1.bf16.msra.mxu0 0
    %1087 = vmatprep.subr.bf16.mxu0 0
    %1088 = vmatpush1.bf16.msra.mxu0 0
    %1089 = vmatprep.subr.bf16.mxu0 0
    %1090 = vmatpush1.bf16.msra.mxu0 0
    %1091 = vmatprep.subr.bf16.mxu0 0
    %1092 = vmatpush1.bf16.msra.mxu0 0
    %1093 = vmatprep.mubr.bf16.mxu0 0
    %1094 = vmatmul.mubr.bf16.gmra.mrb[0].mxu0 %v393
    %v1095 = vpop.f32.mrb[0].mxu0
    %v1096 = vadd.f32 0.0, %v1095
    %v1097 = vpop.f32.mrb[0].mxu0
    %v1098 = vpop.f32.mrb[0].mxu0
    %v1099 = vpop.f32.mrb[0].mxu0
    %1100 = vdwg.mxu0
    %v1101 = vadd.f32 %v857, %v1055
    %v1102 = vadd.f32 %v858, %v1057
    %v1103 = vxor.u32 %v1101, 2147483648
    %v1104 = vxor.u32 %v1102, 2147483648
    %v1105 = vmul.f32 %v1103, 1.442695
    %v1106 = vpow.pop %v1105
    %v1107 = vmul.f32 %v1104, 1.442695
    %v1108 = vpow.pop %v1107
    %v1109 = vadd.f32 %v1106, 1.0
    %v1110 = vadd.f32 %v1108, 1.0
    %v1111 = vrcp.pop %v1109
    %v1112 = vmul.f32 1.0, %v1111
    %v1113 = vrcp.pop %v1110
    %v1114 = vmul.f32 1.0, %v1113
    %v1115 = vadd.f32 %v1096, %v115
    %v1116 = vmul.f32 %v1112, %v1115
    %v1117 = vadd.f32 %v859, %v1116
    %v1118 = vtanh.pop %v1117
    %v1119 = vsub.f32 1.0, %v1114
    %v1120 = vmul.f32 %v1119, %v1118
    %v1121 = vmul.f32 %v1114, %v392
    %v1122 = vadd.f32 %v1120, %v1121
    %v1123 = vpack.c.bf16 %v1122, %v1122
    %v1124 = vpack.c.bf16 %v854, %v854
    %v1125 = vld [vmem:[%s4] sm:$0xff]
    %v1126 = vld [vmem:[%s4 + $0x8] sm:$0xff]
    %v1127 = vld [vmem:[%s4 + $0x10] sm:$0xff]
    %v1128 = vld [vmem:[%s4 + $0x18] sm:$0xff]
    %v1129 = vld [vmem:[%s4 + $0x20] sm:$0xff]
    %v1130 = vld [vmem:[%s4 + $0x28] sm:$0xff]
    %v1131 = vld [vmem:[%s4 + $0x30] sm:$0xff]
    %v1132 = vld [vmem:[%s4 + $0x38] sm:$0xff]
    %v1133 = vld [vmem:[%s4 + $0x40] sm:$0xff]
    %v1134 = vld [vmem:[%s4 + $0x48] sm:$0xff]
    %v1135 = vld [vmem:[%s4 + $0x50] sm:$0xff]
    %v1136 = vld [vmem:[%s4 + $0x58] sm:$0xff]
    %v1137 = vld [vmem:[%s4 + $0x60] sm:$0xff]
    %v1138 = vld [vmem:[%s4 + $0x68] sm:$0xff]
    %v1139 = vld [vmem:[%s4 + $0x70] sm:$0xff]
    %v1140 = vld [vmem:[%s4 + $0x78] sm:$0xff]
    %v1141 = vld [vmem:[%s4 + $0x80] sm:$0xff]
    %v1142 = vld [vmem:[%s4 + $0x88] sm:$0xff]
    %v1143 = vld [vmem:[%s4 + $0x90] sm:$0xff]
    %v1144 = vld [vmem:[%s4 + $0x98] sm:$0xff]
    %v1145 = vld [vmem:[%s4 + $0xa0] sm:$0xff]
    %v1146 = vld [vmem:[%s4 + $0xa8] sm:$0xff]
    %v1147 = vld [vmem:[%s4 + $0xb0] sm:$0xff]
    %v1148 = vld [vmem:[%s4 + $0xb8] sm:$0xff]
    %v1149 = vld [vmem:[%s4 + $0xc0] sm:$0xff]
    %v1150 = vld [vmem:[%s4 + $0xc8] sm:$0xff]
    %v1151 = vld [vmem:[%s4 + $0xd0] sm:$0xff]
    %v1152 = vld [vmem:[%s4 + $0xd8] sm:$0xff]
    %v1153 = vld [vmem:[%s4 + $0xe0] sm:$0xff]
    %v1154 = vld [vmem:[%s4 + $0xe8] sm:$0xff]
    %v1155 = vld [vmem:[%s4 + $0xf0] sm:$0xff]
    %v1156 = vld [vmem:[%s4 + $0xf8] sm:$0xff]
    %v1189 = vunpack.c.l.b16 %v1125
    %v1190 = vunpack.c.h.b16 %v1125
    %v1191 = vunpack.c.l.b16 %v1126
    %v1192 = vunpack.c.h.b16 %v1126
    %v1193 = vunpack.c.l.b16 %v1127
    %v1194 = vunpack.c.h.b16 %v1127
    %v1195 = vunpack.c.l.b16 %v1128
    %v1196 = vunpack.c.h.b16 %v1128
    %v1197 = vunpack.c.l.b16 %v1129
    %v1198 = vunpack.c.h.b16 %v1129
    %v1199 = vunpack.c.l.b16 %v1130
    %v1200 = vunpack.c.h.b16 %v1130
    %v1201 = vunpack.c.l.b16 %v1131
    %v1202 = vunpack.c.h.b16 %v1131
    %v1203 = vunpack.c.l.b16 %v1132
    %v1204 = vunpack.c.h.b16 %v1132
    %v1205 = vunpack.c.l.b16 %v1133
    %v1206 = vunpack.c.h.b16 %v1133
    %v1207 = vunpack.c.l.b16 %v1134
    %v1208 = vunpack.c.h.b16 %v1134
    %v1209 = vunpack.c.l.b16 %v1135
    %v1210 = vunpack.c.h.b16 %v1135
    %v1211 = vunpack.c.l.b16 %v1136
    %v1212 = vunpack.c.h.b16 %v1136
    %v1213 = vunpack.c.l.b16 %v1137
    %v1214 = vunpack.c.h.b16 %v1137
    %v1215 = vunpack.c.l.b16 %v1138
    %v1216 = vunpack.c.h.b16 %v1138
    %v1217 = vunpack.c.l.b16 %v1139
    %v1218 = vunpack.c.h.b16 %v1139
    %v1219 = vunpack.c.l.b16 %v1140
    %v1220 = vunpack.c.h.b16 %v1140
    %v1221 = vunpack.c.l.b16 %v1141
    %v1222 = vunpack.c.h.b16 %v1141
    %v1223 = vunpack.c.l.b16 %v1142
    %v1224 = vunpack.c.h.b16 %v1142
    %v1225 = vunpack.c.l.b16 %v1143
    %v1226 = vunpack.c.h.b16 %v1143
    %v1227 = vunpack.c.l.b16 %v1144
    %v1228 = vunpack.c.h.b16 %v1144
    %v1229 = vunpack.c.l.b16 %v1145
    %v1230 = vunpack.c.h.b16 %v1145
    %v1231 = vunpack.c.l.b16 %v1146
    %v1232 = vunpack.c.h.b16 %v1146
    %v1233 = vunpack.c.l.b16 %v1147
    %v1234 = vunpack.c.h.b16 %v1147
    %v1235 = vunpack.c.l.b16 %v1148
    %v1236 = vunpack.c.h.b16 %v1148
    %v1237 = vunpack.c.l.b16 %v1149
    %v1238 = vunpack.c.h.b16 %v1149
    %v1239 = vunpack.c.l.b16 %v1150
    %v1240 = vunpack.c.h.b16 %v1150
    %v1241 = vunpack.c.l.b16 %v1151
    %v1242 = vunpack.c.h.b16 %v1151
    %v1243 = vunpack.c.l.b16 %v1152
    %v1244 = vunpack.c.h.b16 %v1152
    %v1245 = vunpack.c.l.b16 %v1153
    %v1246 = vunpack.c.h.b16 %v1153
    %v1247 = vunpack.c.l.b16 %v1154
    %v1248 = vunpack.c.h.b16 %v1154
    %v1249 = vunpack.c.l.b16 %v1155
    %v1250 = vunpack.c.h.b16 %v1155
    %v1251 = vunpack.c.l.b16 %v1156
    %v1252 = vunpack.c.h.b16 %v1156
    %v1253 = vpack.c.b16 %v1191, %v1189
    %v1254 = vpack.c.b16 %v1192, %v1190
    %v1255 = vpack.c.b16 %v1195, %v1193
    %v1256 = vpack.c.b16 %v1196, %v1194
    %v1257 = vpack.c.b16 %v1199, %v1197
    %v1258 = vpack.c.b16 %v1200, %v1198
    %v1259 = vpack.c.b16 %v1203, %v1201
    %v1260 = vpack.c.b16 %v1204, %v1202
    %v1261 = vpack.c.b16 %v1207, %v1205
    %v1262 = vpack.c.b16 %v1208, %v1206
    %v1263 = vpack.c.b16 %v1211, %v1209
    %v1264 = vpack.c.b16 %v1212, %v1210
    %v1265 = vpack.c.b16 %v1215, %v1213
    %v1266 = vpack.c.b16 %v1216, %v1214
    %v1267 = vpack.c.b16 %v1219, %v1217
    %v1268 = vpack.c.b16 %v1220, %v1218
    %v1269 = vpack.c.b16 %v1223, %v1221
    %v1270 = vpack.c.b16 %v1224, %v1222
    %v1271 = vpack.c.b16 %v1227, %v1225
    %v1272 = vpack.c.b16 %v1228, %v1226
    %v1273 = vpack.c.b16 %v1231, %v1229
    %v1274 = vpack.c.b16 %v1232, %v1230
    %v1275 = vpack.c.b16 %v1235, %v1233
    %v1276 = vpack.c.b16 %v1236, %v1234
    %v1277 = vpack.c.b16 %v1239, %v1237
    %v1278 = vpack.c.b16 %v1240, %v1238
    %v1279 = vpack.c.b16 %v1243, %v1241
    %v1280 = vpack.c.b16 %v1244, %v1242
    %v1281 = vpack.c.b16 %v1247, %v1245
    %v1282 = vpack.c.b16 %v1248, %v1246
    %v1283 = vpack.c.b16 %v1251, %v1249
    %v1284 = vpack.c.b16 %v1252, %v1250
    %1317 = vmatprep.subr.bf16.mxu0 %v1254
    %1318 = vmatpush1.bf16.msra.mxu0 %v1253
    %1319 = vmatprep.subr.bf16.mxu0 %v1256
    %1320 = vmatpush1.bf16.msra.mxu0 %v1255
    %1321 = vmatprep.subr.bf16.mxu0 %v1258
    %1322 = vmatpush1.bf16.msra.mxu0 %v1257
    %1323 = vmatprep.subr.bf16.mxu0 %v1260
    %1324 = vmatpush1.bf16.msra.mxu0 %v1259
    %1325 = vmatprep.subr.bf16.mxu0 %v1262
    %1326 = vmatpush1.bf16.msra.mxu0 %v1261
    %1327 = vmatprep.subr.bf16.mxu0 %v1264
    %1328 = vmatpush1.bf16.msra.mxu0 %v1263
    %1329 = vmatprep.subr.bf16.mxu0 %v1266
    %1330 = vmatpush1.bf16.msra.mxu0 %v1265
    %1331 = vmatprep.subr.bf16.mxu0 %v1268
    %1332 = vmatpush1.bf16.msra.mxu0 %v1267
    %1333 = vmatprep.subr.bf16.mxu0 %v1270
    %1334 = vmatpush1.bf16.msra.mxu0 %v1269
    %1335 = vmatprep.subr.bf16.mxu0 %v1272
    %1336 = vmatpush1.bf16.msra.mxu0 %v1271
    %1337 = vmatprep.subr.bf16.mxu0 %v1274
    %1338 = vmatpush1.bf16.msra.mxu0 %v1273
    %1339 = vmatprep.subr.bf16.mxu0 %v1276
    %1340 = vmatpush1.bf16.msra.mxu0 %v1275
    %1341 = vmatprep.subr.bf16.mxu0 %v1278
    %1342 = vmatpush1.bf16.msra.mxu0 %v1277
    %1343 = vmatprep.subr.bf16.mxu0 %v1280
    %1344 = vmatpush1.bf16.msra.mxu0 %v1279
    %1345 = vmatprep.subr.bf16.mxu0 %v1282
    %1346 = vmatpush1.bf16.msra.mxu0 %v1281
    %1347 = vmatprep.subr.bf16.mxu0 %v1284
    %1348 = vmatpush1.bf16.msra.mxu0 %v1283
    %1349 = vmatprep.mubr.bf16.mxu0 %v1124
    %1350 = vmatmul.mubr.bf16.gmra.mrb[0].mxu0 %v1123
    %v1351 = vpop.f32.mrb[0].mxu0
    %v1352 = vadd.f32 %v96, %v1351
    %v1353 = vpop.f32.mrb[0].mxu0
    %v1354 = vadd.f32 %v100, %v1353
    %v1355 = vpop.f32.mrb[0].mxu0
    %v1356 = vpop.f32.mrb[0].mxu0
    %1357 = vdwg.mxu0
    %v1358 = vxor.u32 %v1352, 2147483648
    %v1359 = vxor.u32 %v1354, 2147483648
    %v1360 = vmul.f32 %v1358, 1.442695
    %v1361 = vpow.pop %v1360
    %v1362 = vmul.f32 %v1359, 1.442695
    %v1363 = vpow.pop %v1362
    %v1364 = vadd.f32 %v1361, 1.0
    %v1365 = vadd.f32 %v1363, 1.0
    %v1366 = vrcp.pop %v1364
    %v1367 = vmul.f32 1.0, %v1366
    %v1368 = vrcp.pop %v1365
    %v1369 = vmul.f32 1.0, %v1368
    %v1370 = vld [vmem:[#allocation4] sm:$0xf]
    %v1371 = vld [vmem:[#allocation4 + $0x4] sm:$0xf]
    %v1372 = vld [vmem:[#allocation4 + $0x8] sm:$0xf]
    %v1373 = vld [vmem:[#allocation4 + $0xc] sm:$0xf]
    %v1374 = vld [vmem:[#allocation4 + $0x10] sm:$0xf]
    %v1375 = vld [vmem:[#allocation4 + $0x14] sm:$0xf]
    %v1376 = vld [vmem:[#allocation4 + $0x18] sm:$0xf]
    %v1377 = vld [vmem:[#allocation4 + $0x1c] sm:$0xf]
    %v1378 = vld [vmem:[#allocation4 + $0x20] sm:$0xf]
    %v1379 = vld [vmem:[#allocation4 + $0x24] sm:$0xf]
    %v1380 = vld [vmem:[#allocation4 + $0x28] sm:$0xf]
    %v1381 = vld [vmem:[#allocation4 + $0x2c] sm:$0xf]
    %v1382 = vld [vmem:[#allocation4 + $0x30] sm:$0xf]
    %v1383 = vld [vmem:[#allocation4 + $0x34] sm:$0xf]
    %v1384 = vld [vmem:[#allocation4 + $0x38] sm:$0xf]
    %v1385 = vld [vmem:[#allocation4 + $0x3c] sm:$0xf]
    %v1402 = vunpack.c.l.b16 %v1370
    %v1403 = vunpack.c.l.b16 %v1371
    %v1404 = vunpack.c.l.b16 %v1372
    %v1405 = vunpack.c.l.b16 %v1373
    %v1406 = vunpack.c.l.b16 %v1374
    %v1407 = vunpack.c.l.b16 %v1375
    %v1408 = vunpack.c.l.b16 %v1376
    %v1409 = vunpack.c.l.b16 %v1377
    %v1410 = vunpack.c.l.b16 %v1378
    %v1411 = vunpack.c.l.b16 %v1379
    %v1412 = vunpack.c.l.b16 %v1380
    %v1413 = vunpack.c.l.b16 %v1381
    %v1414 = vunpack.c.l.b16 %v1382
    %v1415 = vunpack.c.l.b16 %v1383
    %v1416 = vunpack.c.l.b16 %v1384
    %v1417 = vunpack.c.l.b16 %v1385
    %v1418 = vpack.c.b16 %v1403, %v1402
    %v1419 = vpack.c.b16 %v1405, %v1404
    %v1420 = vpack.c.b16 %v1407, %v1406
    %v1421 = vpack.c.b16 %v1409, %v1408
    %v1422 = vpack.c.b16 %v1411, %v1410
    %v1423 = vpack.c.b16 %v1413, %v1412
    %v1424 = vpack.c.b16 %v1415, %v1414
    %v1425 = vpack.c.b16 %v1417, %v1416
    %1434 = vmatprep.subr.bf16.mxu0 0
    %1435 = vmatpush1.bf16.msra.mxu0 %v1418
    %1436 = vmatprep.subr.bf16.mxu0 0
    %1437 = vmatpush1.bf16.msra.mxu0 %v1419
    %1438 = vmatprep.subr.bf16.mxu0 0
    %1439 = vmatpush1.bf16.msra.mxu0 %v1420
    %1440 = vmatprep.subr.bf16.mxu0 0
    %1441 = vmatpush1.bf16.msra.mxu0 %v1421
    %1442 = vmatprep.subr.bf16.mxu0 0
    %1443 = vmatpush1.bf16.msra.mxu0 %v1422
    %1444 = vmatprep.subr.bf16.mxu0 0
    %1445 = vmatpush1.bf16.msra.mxu0 %v1423
    %1446 = vmatprep.subr.bf16.mxu0 0
    %1447 = vmatpush1.bf16.msra.mxu0 %v1424
    %1448 = vmatprep.subr.bf16.mxu0 0
    %1449 = vmatpush1.bf16.msra.mxu0 %v1425
    %1450 = vmatprep.subr.bf16.mxu0 0
    %1451 = vmatpush1.bf16.msra.mxu0 0
    %1452 = vmatprep.subr.bf16.mxu0 0
    %1453 = vmatpush1.bf16.msra.mxu0 0
    %1454 = vmatprep.subr.bf16.mxu0 0
    %1455 = vmatpush1.bf16.msra.mxu0 0
    %1456 = vmatprep.subr.bf16.mxu0 0
    %1457 = vmatpush1.bf16.msra.mxu0 0
    %1458 = vmatprep.subr.bf16.mxu0 0
    %1459 = vmatpush1.bf16.msra.mxu0 0
    %1460 = vmatprep.subr.bf16.mxu0 0
    %1461 = vmatpush1.bf16.msra.mxu0 0
    %1462 = vmatprep.subr.bf16.mxu0 0
    %1463 = vmatpush1.bf16.msra.mxu0 0
    %1464 = vmatprep.subr.bf16.mxu0 0
    %1465 = vmatpush1.bf16.msra.mxu0 0
    %1466 = vmatprep.mubr.bf16.mxu0 0
    %1467 = vmatmul.mubr.bf16.gmra.mrb[0].mxu0 %v1123
    %v1468 = vpop.f32.mrb[0].mxu0
    %v1469 = vadd.f32 %v108, %v1468
    %v1470 = vpop.f32.mrb[0].mxu0
    %v1471 = vpop.f32.mrb[0].mxu0
    %v1472 = vpop.f32.mrb[0].mxu0
    %1473 = vdwg.mxu0
    %v1474 = vld [vmem:[#allocation6] sm:$0xf]
    %v1475 = vld [vmem:[#allocation6 + $0x4] sm:$0xf]
    %v1476 = vld [vmem:[#allocation6 + $0x8] sm:$0xf]
    %v1477 = vld [vmem:[#allocation6 + $0xc] sm:$0xf]
    %v1478 = vld [vmem:[#allocation6 + $0x10] sm:$0xf]
    %v1479 = vld [vmem:[#allocation6 + $0x14] sm:$0xf]
    %v1480 = vld [vmem:[#allocation6 + $0x18] sm:$0xf]
    %v1481 = vld [vmem:[#allocation6 + $0x1c] sm:$0xf]
    %v1482 = vld [vmem:[#allocation6 + $0x20] sm:$0xf]
    %v1483 = vld [vmem:[#allocation6 + $0x24] sm:$0xf]
    %v1484 = vld [vmem:[#allocation6 + $0x28] sm:$0xf]
    %v1485 = vld [vmem:[#allocation6 + $0x2c] sm:$0xf]
    %v1486 = vld [vmem:[#allocation6 + $0x30] sm:$0xf]
    %v1487 = vld [vmem:[#allocation6 + $0x34] sm:$0xf]
    %v1488 = vld [vmem:[#allocation6 + $0x38] sm:$0xf]
    %v1489 = vld [vmem:[#allocation6 + $0x3c] sm:$0xf]
    %v1506 = vunpack.c.l.b16 %v1474
    %v1507 = vunpack.c.l.b16 %v1475
    %v1508 = vunpack.c.l.b16 %v1476
    %v1509 = vunpack.c.l.b16 %v1477
    %v1510 = vunpack.c.l.b16 %v1478
    %v1511 = vunpack.c.l.b16 %v1479
    %v1512 = vunpack.c.l.b16 %v1480
    %v1513 = vunpack.c.l.b16 %v1481
    %v1514 = vunpack.c.l.b16 %v1482
    %v1515 = vunpack.c.l.b16 %v1483
    %v1516 = vunpack.c.l.b16 %v1484
    %v1517 = vunpack.c.l.b16 %v1485
    %v1518 = vunpack.c.l.b16 %v1486
    %v1519 = vunpack.c.l.b16 %v1487
    %v1520 = vunpack.c.l.b16 %v1488
    %v1521 = vunpack.c.l.b16 %v1489
    %v1522 = vpack.c.b16 %v1507, %v1506
    %v1523 = vpack.c.b16 %v1509, %v1508
    %v1524 = vpack.c.b16 %v1511, %v1510
    %v1525 = vpack.c.b16 %v1513, %v1512
    %v1526 = vpack.c.b16 %v1515, %v1514
    %v1527 = vpack.c.b16 %v1517, %v1516
    %v1528 = vpack.c.b16 %v1519, %v1518
    %v1529 = vpack.c.b16 %v1521, %v1520
    %1538 = vmatprep.subr.bf16.mxu0 0
    %1539 = vmatpush1.bf16.msra.mxu0 %v1522
    %1540 = vmatprep.subr.bf16.mxu0 0
    %1541 = vmatpush1.bf16.msra.mxu0 %v1523
    %1542 = vmatprep.subr.bf16.mxu0 0
    %1543 = vmatpush1.bf16.msra.mxu0 %v1524
    %1544 = vmatprep.subr.bf16.mxu0 0
    %1545 = vmatpush1.bf16.msra.mxu0 %v1525
    %1546 = vmatprep.subr.bf16.mxu0 0
    %1547 = vmatpush1.bf16.msra.mxu0 %v1526
    %1548 = vmatprep.subr.bf16.mxu0 0
    %1549 = vmatpush1.bf16.msra.mxu0 %v1527
    %1550 = vmatprep.subr.bf16.mxu0 0
    %1551 = vmatpush1.bf16.msra.mxu0 %v1528
    %1552 = vmatprep.subr.bf16.mxu0 0
    %1553 = vmatpush1.bf16.msra.mxu0 %v1529
    %1554 = vmatprep.subr.bf16.mxu0 0
    %1555 = vmatpush1.bf16.msra.mxu0 0
    %1556 = vmatprep.subr.bf16.mxu0 0
    %1557 = vmatpush1.bf16.msra.mxu0 0
    %1558 = vmatprep.subr.bf16.mxu0 0
    %1559 = vmatpush1.bf16.msra.mxu0 0
    %1560 = vmatprep.subr.bf16.mxu0 0
    %1561 = vmatpush1.bf16.msra.mxu0 0
    %1562 = vmatprep.subr.bf16.mxu0 0
    %1563 = vmatpush1.bf16.msra.mxu0 0
    %1564 = vmatprep.subr.bf16.mxu0 0
    %1565 = vmatpush1.bf16.msra.mxu0 0
    %1566 = vmatprep.subr.bf16.mxu0 0
    %1567 = vmatpush1.bf16.msra.mxu0 0
    %1568 = vmatprep.subr.bf16.mxu0 0
    %1569 = vmatpush1.bf16.msra.mxu0 0
    %1570 = vmatprep.mubr.bf16.mxu0 0
    %1571 = vmatmul.mubr.bf16.gmra.mrb[0].mxu0 %v1124
    %v1572 = vpop.f32.mrb[0].mxu0
    %v1573 = vadd.f32 %v122, %v1572
    %v1574 = vpop.f32.mrb[0].mxu0
    %v1575 = vpop.f32.mrb[0].mxu0
    %v1576 = vpop.f32.mrb[0].mxu0
    %1577 = vdwg.mxu0
    %v1578 = vmul.f32 %v1367, %v1573
    %v1579 = vadd.f32 %v1469, %v1578
    %v1580 = vtanh.pop %v1579
    %v1581 = vsub.f32 1.0, %v1369
    %v1582 = vmul.f32 %v1581, %v1580
    %v1583 = vmul.f32 %v1369, %v854
    %v1584 = vadd.f32 %v1582, %v1583
    %s1585 = scalar_lea.vmem %s11, 8
    %1586 = vst [vmem:[%s1585] sm:$0xff] %v1584
    %s1587 = scalar_lea.vmem %s0, 48
    %v1588 = vld [vmem:[%s1587] sm:$0xff]
    %v1589 = vld [vmem:[%s1587 + $0x8] sm:$0xff]
    %v1590 = vld [vmem:[%s1587 + $0x10] sm:$0xff]
    %v1591 = vld [vmem:[#allocation2] sm:$0xff]
    %v1592 = vld [vmem:[#allocation2 + $0x8] sm:$0xf]
    %v1593 = vld [vmem:[#allocation2 + $0xc] sm:$0xff]
    %v1594 = vld [vmem:[#allocation2 + $0x14] sm:$0xf]
    %v1595 = vld [vmem:[#allocation2 + $0x18] sm:$0xff]
    %v1596 = vld [vmem:[#allocation2 + $0x20] sm:$0xf]
    %v1597 = vld [vmem:[#allocation2 + $0x24] sm:$0xff]
    %v1598 = vld [vmem:[#allocation2 + $0x2c] sm:$0xf]
    %v1599 = vld [vmem:[#allocation2 + $0x30] sm:$0xff]
    %v1600 = vld [vmem:[#allocation2 + $0x38] sm:$0xf]
    %v1601 = vld [vmem:[#allocation2 + $0x3c] sm:$0xff]
    %v1602 = vld [vmem:[#allocation2 + $0x44] sm:$0xf]
    %v1603 = vld [vmem:[#allocation2 + $0x48] sm:$0xff]
    %v1604 = vld [vmem:[#allocation2 + $0x50] sm:$0xf]
    %v1605 = vld [vmem:[#allocation2 + $0x54] sm:$0xff]
    %v1606 = vld [vmem:[#allocation2 + $0x5c] sm:$0xf]
    %v1607 = vld [vmem:[#allocation2 + $0x60] sm:$0xff]
    %v1608 = vld [vmem:[#allocation2 + $0x68] sm:$0xf]
    %v1609 = vld [vmem:[#allocation2 + $0x6c] sm:$0xff]
    %v1610 = vld [vmem:[#allocation2 + $0x74] sm:$0xf]
    %v1611 = vld [vmem:[#allocation2 + $0x78] sm:$0xff]
    %v1612 = vld [vmem:[#allocation2 + $0x80] sm:$0xf]
    %v1613 = vld [vmem:[#allocation2 + $0x84] sm:$0xff]
    %v1614 = vld [vmem:[#allocation2 + $0x8c] sm:$0xf]
    %v1615 = vld [vmem:[#allocation2 + $0x90] sm:$0xff]
    %v1616 = vld [vmem:[#allocation2 + $0x98] sm:$0xf]
    %v1617 = vld [vmem:[#allocation2 + $0x9c] sm:$0xff]
    %v1618 = vld [vmem:[#allocation2 + $0xa4] sm:$0xf]
    %v1619 = vld [vmem:[#allocation2 + $0xa8] sm:$0xff]
    %v1620 = vld [vmem:[#allocation2 + $0xb0] sm:$0xf]
    %v1621 = vld [vmem:[#allocation2 + $0xb4] sm:$0xff]
    %v1622 = vld [vmem:[#allocation2 + $0xbc] sm:$0xf]
    %v1655 = vunpack.c.l.b16 %v1591
    %v1656 = vunpack.c.h.b16 %v1591
    %v1657 = vunpack.c.l.b16 %v1592
    %v1658 = vunpack.c.l.b16 %v1593
    %v1659 = vunpack.c.h.b16 %v1593
    %v1660 = vunpack.c.l.b16 %v1594
    %v1661 = vunpack.c.l.b16 %v1595
    %v1662 = vunpack.c.h.b16 %v1595
    %v1663 = vunpack.c.l.b16 %v1596
    %v1664 = vunpack.c.l.b16 %v1597
    %v1665 = vunpack.c.h.b16 %v1597
    %v1666 = vunpack.c.l.b16 %v1598
    %v1667 = vunpack.c.l.b16 %v1599
    %v1668 = vunpack.c.h.b16 %v1599
    %v1669 = vunpack.c.l.b16 %v1600
    %v1670 = vunpack.c.l.b16 %v1601
    %v1671 = vunpack.c.h.b16 %v1601
    %v1672 = vunpack.c.l.b16 %v1602
    %v1673 = vunpack.c.l.b16 %v1603
    %v1674 = vunpack.c.h.b16 %v1603
    %v1675 = vunpack.c.l.b16 %v1604
    %v1676 = vunpack.c.l.b16 %v1605
    %v1677 = vunpack.c.h.b16 %v1605
    %v1678 = vunpack.c.l.b16 %v1606
    %v1679 = vunpack.c.l.b16 %v1607
    %v1680 = vunpack.c.h.b16 %v1607
    %v1681 = vunpack.c.l.b16 %v1608
    %v1682 = vunpack.c.l.b16 %v1609
    %v1683 = vunpack.c.h.b16 %v1609
    %v1684 = vunpack.c.l.b16 %v1610
    %v1685 = vunpack.c.l.b16 %v1611
    %v1686 = vunpack.c.h.b16 %v1611
    %v1687 = vunpack.c.l.b16 %v1612
    %v1688 = vunpack.c.l.b16 %v1613
    %v1689 = vunpack.c.h.b16 %v1613
    %v1690 = vunpack.c.l.b16 %v1614
    %v1691 = vunpack.c.l.b16 %v1615
    %v1692 = vunpack.c.h.b16 %v1615
    %v1693 = vunpack.c.l.b16 %v1616
    %v1694 = vunpack.c.l.b16 %v1617
    %v1695 = vunpack.c.h.b16 %v1617
    %v1696 = vunpack.c.l.b16 %v1618
    %v1697 = vunpack.c.l.b16 %v1619
    %v1698 = vunpack.c.h.b16 %v1619
    %v1699 = vunpack.c.l.b16 %v1620
    %v1700 = vunpack.c.l.b16 %v1621
    %v1701 = vunpack.c.h.b16 %v1621
    %v1702 = vunpack.c.l.b16 %v1622
    %v1703 = vpack.c.b16 %v1658, %v1655
    %v1704 = vpack.c.b16 %v1659, %v1656
    %v1705 = vpack.c.b16 %v1660, %v1657
    %v1706 = vpack.c.b16 %v1664, %v1661
    %v1707 = vpack.c.b16 %v1665, %v1662
    %v1708 = vpack.c.b16 %v1666, %v1663
    %v1709 = vpack.c.b16 %v1670, %v1667
    %v1710 = vpack.c.b16 %v1671, %v1668
    %v1711 = vpack.c.b16 %v1672, %v1669
    %v1712 = vpack.c.b16 %v1676, %v1673
    %v1713 = vpack.c.b16 %v1677, %v1674
    %v1714 = vpack.c.b16 %v1678, %v1675
    %v1715 = vpack.c.b16 %v1682, %v1679
    %v1716 = vpack.c.b16 %v1683, %v1680
    %v1717 = vpack.c.b16 %v1684, %v1681
    %v1718 = vpack.c.b16 %v1688, %v1685
    %v1719 = vpack.c.b16 %v1689, %v1686
    %v1720 = vpack.c.b16 %v1690, %v1687
    %v1721 = vpack.c.b16 %v1694, %v1691
    %v1722 = vpack.c.b16 %v1695, %v1692
    %v1723 = vpack.c.b16 %v1696, %v1693
    %v1724 = vpack.c.b16 %v1700, %v1697
    %v1725 = vpack.c.b16 %v1701, %v1698
    %v1726 = vpack.c.b16 %v1702, %v1699
    %1751 = vmatprep.subr.bf16.mxu0 %v1704
    %1752 = vmatpush1.bf16.msra.mxu0 %v1703
    %1753 = vmatprep.subr.bf16.mxu0 %v1707
    %1754 = vmatpush1.bf16.msra.mxu0 %v1706
    %1755 = vmatprep.subr.bf16.mxu0 %v1710
    %1756 = vmatpush1.bf16.msra.mxu0 %v1709
    %1757 = vmatprep.subr.bf16.mxu0 %v1713
    %1758 = vmatpush1.bf16.msra.mxu0 %v1712
    %1759 = vmatprep.subr.bf16.mxu0 %v1716
    %1760 = vmatpush1.bf16.msra.mxu0 %v1715
    %1761 = vmatprep.subr.bf16.mxu0 %v1719
    %1762 = vmatpush1.bf16.msra.mxu0 %v1718
    %1763 = vmatprep.subr.bf16.mxu0 %v1722
    %1764 = vmatpush1.bf16.msra.mxu0 %v1721
    %1765 = vmatprep.subr.bf16.mxu0 %v1725
    %1766 = vmatpush1.bf16.msra.mxu0 %v1724
    %1767 = vmatprep.subr.bf16.mxu0 0
    %1768 = vmatpush1.bf16.msra.mxu0 0
    %1769 = vmatprep.subr.bf16.mxu0 0
    %1770 = vmatpush1.bf16.msra.mxu0 0
    %1771 = vmatprep.subr.bf16.mxu0 0
    %1772 = vmatpush1.bf16.msra.mxu0 0
    %1773 = vmatprep.subr.bf16.mxu0 0
    %1774 = vmatpush1.bf16.msra.mxu0 0
    %1775 = vmatprep.subr.bf16.mxu0 0
    %1776 = vmatpush1.bf16.msra.mxu0 0
    %1777 = vmatprep.subr.bf16.mxu0 0
    %1778 = vmatpush1.bf16.msra.mxu0 0
    %1779 = vmatprep.subr.bf16.mxu0 0
    %1780 = vmatpush1.bf16.msra.mxu0 0
    %1781 = vmatprep.subr.bf16.mxu0 0
    %1782 = vmatpush1.bf16.msra.mxu0 0
    %1783 = vmatprep.mubr.bf16.mxu0 0
    %1784 = vmatmul.mubr.bf16.gmra.mrb[0].mxu0 %v1123
    %v1785 = vpop.f32.mrb[0].mxu0
    %v1786 = vadd.f32 0.0, %v1785
    %v1787 = vpop.f32.mrb[0].mxu0
    %v1788 = vadd.f32 0.0, %v1787
    %v1789 = vpop.f32.mrb[0].mxu0
    %v1790 = vpop.f32.mrb[0].mxu0
    %1791 = vdwg.mxu0
    %1792 = vmatprep.subr.bf16.mxu0 0
    %1793 = vmatpush1.bf16.msra.mxu0 %v1705
    %1794 = vmatprep.subr.bf16.mxu0 0
    %1795 = vmatpush1.bf16.msra.mxu0 %v1708
    %1796 = vmatprep.subr.bf16.mxu0 0
    %1797 = vmatpush1.bf16.msra.mxu0 %v1711
    %1798 = vmatprep.subr.bf16.mxu0 0
    %1799 = vmatpush1.bf16.msra.mxu0 %v1714
    %1800 = vmatprep.subr.bf16.mxu0 0
    %1801 = vmatpush1.bf16.msra.mxu0 %v1717
    %1802 = vmatprep.subr.bf16.mxu0 0
    %1803 = vmatpush1.bf16.msra.mxu0 %v1720
    %1804 = vmatprep.subr.bf16.mxu0 0
    %1805 = vmatpush1.bf16.msra.mxu0 %v1723
    %1806 = vmatprep.subr.bf16.mxu0 0
    %1807 = vmatpush1.bf16.msra.mxu0 %v1726
    %1808 = vmatprep.subr.bf16.mxu0 0
    %1809 = vmatpush1.bf16.msra.mxu0 0
    %1810 = vmatprep.subr.bf16.mxu0 0
    %1811 = vmatpush1.bf16.msra.mxu0 0
    %1812 = vmatprep.subr.bf16.mxu0 0
    %1813 = vmatpush1.bf16.msra.mxu0 0
    %1814 = vmatprep.subr.bf16.mxu0 0
    %1815 = vmatpush1.bf16.msra.mxu0 0
    %1816 = vmatprep.subr.bf16.mxu0 0
    %1817 = vmatpush1.bf16.msra.mxu0 0
    %1818 = vmatprep.subr.bf16.mxu0 0
    %1819 = vmatpush1.bf16.msra.mxu0 0
    %1820 = vmatprep.subr.bf16.mxu0 0
    %1821 = vmatpush1.bf16.msra.mxu0 0
    %1822 = vmatprep.subr.bf16.mxu0 0
    %1823 = vmatpush1.bf16.msra.mxu0 0
    %1824 = vmatprep.mubr.bf16.mxu0 0
    %1825 = vmatmul.mubr.bf16.gmra.mrb[0].mxu0 %v1123
    %v1826 = vpop.f32.mrb[0].mxu0
    %v1827 = vadd.f32 0.0, %v1826
    %v1828 = vpop.f32.mrb[0].mxu0
    %v1829 = vpop.f32.mrb[0].mxu0
    %v1830 = vpop.f32.mrb[0].mxu0
    %1831 = vdwg.mxu0
    %v1832 = vadd.f32 %v1588, %v1786
    %v1833 = vadd.f32 %v1589, %v1788
    %v1834 = vxor.u32 %v1832, 2147483648
    %v1835 = vxor.u32 %v1833, 2147483648
    %v1836 = vmul.f32 %v1834, 1.442695
    %v1837 = vpow.pop %v1836
    %v1838 = vmul.f32 %v1835, 1.442695
    %v1839 = vpow.pop %v1838
    %v1840 = vadd.f32 %v1837, 1.0
    %v1841 = vadd.f32 %v1839, 1.0
    %v1842 = vrcp.pop %v1840
    %v1843 = vmul.f32 1.0, %v1842
    %v1844 = vrcp.pop %v1841
    %v1845 = vmul.f32 1.0, %v1844
    %v1846 = vadd.f32 %v1827, %v115
    %v1847 = vmul.f32 %v1843, %v1846
    %v1848 = vadd.f32 %v1590, %v1847
    %v1849 = vtanh.pop %v1848
    %v1850 = vsub.f32 1.0, %v1845
    %v1851 = vmul.f32 %v1850, %v1849
    %v1852 = vmul.f32 %v1845, %v1122
    %v1853 = vadd.f32 %v1851, %v1852
    %v1854 = vpack.c.bf16 %v1853, %v1853
    %v1855 = vpack.c.bf16 %v1584, %v1584
    %v1856 = vld [vmem:[%s4] sm:$0xff]
    %v1857 = vld [vmem:[%s4 + $0x8] sm:$0xff]
    %v1858 = vld [vmem:[%s4 + $0x10] sm:$0xff]
    %v1859 = vld [vmem:[%s4 + $0x18] sm:$0xff]
    %v1860 = vld [vmem:[%s4 + $0x20] sm:$0xff]
    %v1861 = vld [vmem:[%s4 + $0x28] sm:$0xff]
    %v1862 = vld [vmem:[%s4 + $0x30] sm:$0xff]
    %v1863 = vld [vmem:[%s4 + $0x38] sm:$0xff]
    %v1864 = vld [vmem:[%s4 + $0x40] sm:$0xff]
    %v1865 = vld [vmem:[%s4 + $0x48] sm:$0xff]
    %v1866 = vld [vmem:[%s4 + $0x50] sm:$0xff]
    %v1867 = vld [vmem:[%s4 + $0x58] sm:$0xff]
    %v1868 = vld [vmem:[%s4 + $0x60] sm:$0xff]
    %v1869 = vld [vmem:[%s4 + $0x68] sm:$0xff]
    %v1870 = vld [vmem:[%s4 + $0x70] sm:$0xff]
    %v1871 = vld [vmem:[%s4 + $0x78] sm:$0xff]
    %v1872 = vld [vmem:[%s4 + $0x80] sm:$0xff]
    %v1873 = vld [vmem:[%s4 + $0x88] sm:$0xff]
    %v1874 = vld [vmem:[%s4 + $0x90] sm:$0xff]
    %v1875 = vld [vmem:[%s4 + $0x98] sm:$0xff]
    %v1876 = vld [vmem:[%s4 + $0xa0] sm:$0xff]
    %v1877 = vld [vmem:[%s4 + $0xa8] sm:$0xff]
    %v1878 = vld [vmem:[%s4 + $0xb0] sm:$0xff]
    %v1879 = vld [vmem:[%s4 + $0xb8] sm:$0xff]
    %v1880 = vld [vmem:[%s4 + $0xc0] sm:$0xff]
    %v1881 = vld [vmem:[%s4 + $0xc8] sm:$0xff]
    %v1882 = vld [vmem:[%s4 + $0xd0] sm:$0xff]
    %v1883 = vld [vmem:[%s4 + $0xd8] sm:$0xff]
    %v1884 = vld [vmem:[%s4 + $0xe0] sm:$0xff]
    %v1885 = vld [vmem:[%s4 + $0xe8] sm:$0xff]
    %v1886 = vld [vmem:[%s4 + $0xf0] sm:$0xff]
    %v1887 = vld [vmem:[%s4 + $0xf8] sm:$0xff]
    %v1920 = vunpack.c.l.b16 %v1856
    %v1921 = vunpack.c.h.b16 %v1856
    %v1922 = vunpack.c.l.b16 %v1857
    %v1923 = vunpack.c.h.b16 %v1857
    %v1924 = vunpack.c.l.b16 %v1858
    %v1925 = vunpack.c.h.b16 %v1858
    %v1926 = vunpack.c.l.b16 %v1859
    %v1927 = vunpack.c.h.b16 %v1859
    %v1928 = vunpack.c.l.b16 %v1860
    %v1929 = vunpack.c.h.b16 %v1860
    %v1930 = vunpack.c.l.b16 %v1861
    %v1931 = vunpack.c.h.b16 %v1861
    %v1932 = vunpack.c.l.b16 %v1862
    %v1933 = vunpack.c.h.b16 %v1862
    %v1934 = vunpack.c.l.b16 %v1863
    %v1935 = vunpack.c.h.b16 %v1863
    %v1936 = vunpack.c.l.b16 %v1864
    %v1937 = vunpack.c.h.b16 %v1864
    %v1938 = vunpack.c.l.b16 %v1865
    %v1939 = vunpack.c.h.b16 %v1865
    %v1940 = vunpack.c.l.b16 %v1866
    %v1941 = vunpack.c.h.b16 %v1866
    %v1942 = vunpack.c.l.b16 %v1867
    %v1943 = vunpack.c.h.b16 %v1867
    %v1944 = vunpack.c.l.b16 %v1868
    %v1945 = vunpack.c.h.b16 %v1868
    %v1946 = vunpack.c.l.b16 %v1869
    %v1947 = vunpack.c.h.b16 %v1869
    %v1948 = vunpack.c.l.b16 %v1870
    %v1949 = vunpack.c.h.b16 %v1870
    %v1950 = vunpack.c.l.b16 %v1871
    %v1951 = vunpack.c.h.b16 %v1871
    %v1952 = vunpack.c.l.b16 %v1872
    %v1953 = vunpack.c.h.b16 %v1872
    %v1954 = vunpack.c.l.b16 %v1873
    %v1955 = vunpack.c.h.b16 %v1873
    %v1956 = vunpack.c.l.b16 %v1874
    %v1957 = vunpack.c.h.b16 %v1874
    %v1958 = vunpack.c.l.b16 %v1875
    %v1959 = vunpack.c.h.b16 %v1875
    %v1960 = vunpack.c.l.b16 %v1876
    %v1961 = vunpack.c.h.b16 %v1876
    %v1962 = vunpack.c.l.b16 %v1877
    %v1963 = vunpack.c.h.b16 %v1877
    %v1964 = vunpack.c.l.b16 %v1878
    %v1965 = vunpack.c.h.b16 %v1878
    %v1966 = vunpack.c.l.b16 %v1879
    %v1967 = vunpack.c.h.b16 %v1879
    %v1968 = vunpack.c.l.b16 %v1880
    %v1969 = vunpack.c.h.b16 %v1880
    %v1970 = vunpack.c.l.b16 %v1881
    %v1971 = vunpack.c.h.b16 %v1881
    %v1972 = vunpack.c.l.b16 %v1882
    %v1973 = vunpack.c.h.b16 %v1882
    %v1974 = vunpack.c.l.b16 %v1883
    %v1975 = vunpack.c.h.b16 %v1883
    %v1976 = vunpack.c.l.b16 %v1884
    %v1977 = vunpack.c.h.b16 %v1884
    %v1978 = vunpack.c.l.b16 %v1885
    %v1979 = vunpack.c.h.b16 %v1885
    %v1980 = vunpack.c.l.b16 %v1886
    %v1981 = vunpack.c.h.b16 %v1886
    %v1982 = vunpack.c.l.b16 %v1887
    %v1983 = vunpack.c.h.b16 %v1887
    %v1984 = vpack.c.b16 %v1922, %v1920
    %v1985 = vpack.c.b16 %v1923, %v1921
    %v1986 = vpack.c.b16 %v1926, %v1924
    %v1987 = vpack.c.b16 %v1927, %v1925
    %v1988 = vpack.c.b16 %v1930, %v1928
    %v1989 = vpack.c.b16 %v1931, %v1929
    %v1990 = vpack.c.b16 %v1934, %v1932
    %v1991 = vpack.c.b16 %v1935, %v1933
    %v1992 = vpack.c.b16 %v1938, %v1936
    %v1993 = vpack.c.b16 %v1939, %v1937
    %v1994 = vpack.c.b16 %v1942, %v1940
    %v1995 = vpack.c.b16 %v1943, %v1941
    %v1996 = vpack.c.b16 %v1946, %v1944
    %v1997 = vpack.c.b16 %v1947, %v1945
    %v1998 = vpack.c.b16 %v1950, %v1948
    %v1999 = vpack.c.b16 %v1951, %v1949
    %v2000 = vpack.c.b16 %v1954, %v1952
    %v2001 = vpack.c.b16 %v1955, %v1953
    %v2002 = vpack.c.b16 %v1958, %v1956
    %v2003 = vpack.c.b16 %v1959, %v1957
    %v2004 = vpack.c.b16 %v1962, %v1960
    %v2005 = vpack.c.b16 %v1963, %v1961
    %v2006 = vpack.c.b16 %v1966, %v1964
    %v2007 = vpack.c.b16 %v1967, %v1965
    %v2008 = vpack.c.b16 %v1970, %v1968
    %v2009 = vpack.c.b16 %v1971, %v1969
    %v2010 = vpack.c.b16 %v1974, %v1972
    %v2011 = vpack.c.b16 %v1975, %v1973
    %v2012 = vpack.c.b16 %v1978, %v1976
    %v2013 = vpack.c.b16 %v1979, %v1977
    %v2014 = vpack.c.b16 %v1982, %v1980
    %v2015 = vpack.c.b16 %v1983, %v1981
    %2048 = vmatprep.subr.bf16.mxu0 %v1985
    %2049 = vmatpush1.bf16.msra.mxu0 %v1984
    %2050 = vmatprep.subr.bf16.mxu0 %v1987
    %2051 = vmatpush1.bf16.msra.mxu0 %v1986
    %2052 = vmatprep.subr.bf16.mxu0 %v1989
    %2053 = vmatpush1.bf16.msra.mxu0 %v1988
    %2054 = vmatprep.subr.bf16.mxu0 %v1991
    %2055 = vmatpush1.bf16.msra.mxu0 %v1990
    %2056 = vmatprep.subr.bf16.mxu0 %v1993
    %2057 = vmatpush1.bf16.msra.mxu0 %v1992
    %2058 = vmatprep.subr.bf16.mxu0 %v1995
    %2059 = vmatpush1.bf16.msra.mxu0 %v1994
    %2060 = vmatprep.subr.bf16.mxu0 %v1997
    %2061 = vmatpush1.bf16.msra.mxu0 %v1996
    %2062 = vmatprep.subr.bf16.mxu0 %v1999
    %2063 = vmatpush1.bf16.msra.mxu0 %v1998
    %2064 = vmatprep.subr.bf16.mxu0 %v2001
    %2065 = vmatpush1.bf16.msra.mxu0 %v2000
    %2066 = vmatprep.subr.bf16.mxu0 %v2003
    %2067 = vmatpush1.bf16.msra.mxu0 %v2002
    %2068 = vmatprep.subr.bf16.mxu0 %v2005
    %2069 = vmatpush1.bf16.msra.mxu0 %v2004
    %2070 = vmatprep.subr.bf16.mxu0 %v2007
    %2071 = vmatpush1.bf16.msra.mxu0 %v2006
    %2072 = vmatprep.subr.bf16.mxu0 %v2009
    %2073 = vmatpush1.bf16.msra.mxu0 %v2008
    %2074 = vmatprep.subr.bf16.mxu0 %v2011
    %2075 = vmatpush1.bf16.msra.mxu0 %v2010
    %2076 = vmatprep.subr.bf16.mxu0 %v2013
    %2077 = vmatpush1.bf16.msra.mxu0 %v2012
    %2078 = vmatprep.subr.bf16.mxu0 %v2015
    %2079 = vmatpush1.bf16.msra.mxu0 %v2014
    %2080 = vmatprep.mubr.bf16.mxu0 %v1855
    %2081 = vmatmul.mubr.bf16.gmra.mrb[0].mxu0 %v1854
    %v2082 = vpop.f32.mrb[0].mxu0
    %v2083 = vadd.f32 %v96, %v2082
    %v2084 = vpop.f32.mrb[0].mxu0
    %v2085 = vadd.f32 %v100, %v2084
    %v2086 = vpop.f32.mrb[0].mxu0
    %v2087 = vpop.f32.mrb[0].mxu0
    %2088 = vdwg.mxu0
    %v2089 = vxor.u32 %v2083, 2147483648
    %v2090 = vxor.u32 %v2085, 2147483648
    %v2091 = vmul.f32 %v2089, 1.442695
    %v2092 = vpow.pop %v2091
    %v2093 = vmul.f32 %v2090, 1.442695
    %v2094 = vpow.pop %v2093
    %v2095 = vadd.f32 %v2092, 1.0
    %v2096 = vadd.f32 %v2094, 1.0
    %v2097 = vrcp.pop %v2095
    %v2098 = vmul.f32 1.0, %v2097
    %v2099 = vrcp.pop %v2096
    %v2100 = vmul.f32 1.0, %v2099
    %v2101 = vld [vmem:[#allocation4] sm:$0xf]
    %v2102 = vld [vmem:[#allocation4 + $0x4] sm:$0xf]
    %v2103 = vld [vmem:[#allocation4 + $0x8] sm:$0xf]
    %v2104 = vld [vmem:[#allocation4 + $0xc] sm:$0xf]
    %v2105 = vld [vmem:[#allocation4 + $0x10] sm:$0xf]
    %v2106 = vld [vmem:[#allocation4 + $0x14] sm:$0xf]
    %v2107 = vld [vmem:[#allocation4 + $0x18] sm:$0xf]
    %v2108 = vld [vmem:[#allocation4 + $0x1c] sm:$0xf]
    %v2109 = vld [vmem:[#allocation4 + $0x20] sm:$0xf]
    %v2110 = vld [vmem:[#allocation4 + $0x24] sm:$0xf]
    %v2111 = vld [vmem:[#allocation4 + $0x28] sm:$0xf]
    %v2112 = vld [vmem:[#allocation4 + $0x2c] sm:$0xf]
    %v2113 = vld [vmem:[#allocation4 + $0x30] sm:$0xf]
    %v2114 = vld [vmem:[#allocation4 + $0x34] sm:$0xf]
    %v2115 = vld [vmem:[#allocation4 + $0x38] sm:$0xf]
    %v2116 = vld [vmem:[#allocation4 + $0x3c] sm:$0xf]
    %v2133 = vunpack.c.l.b16 %v2101
    %v2134 = vunpack.c.l.b16 %v2102
    %v2135 = vunpack.c.l.b16 %v2103
    %v2136 = vunpack.c.l.b16 %v2104
    %v2137 = vunpack.c.l.b16 %v2105
    %v2138 = vunpack.c.l.b16 %v2106
    %v2139 = vunpack.c.l.b16 %v2107
    %v2140 = vunpack.c.l.b16 %v2108
    %v2141 = vunpack.c.l.b16 %v2109
    %v2142 = vunpack.c.l.b16 %v2110
    %v2143 = vunpack.c.l.b16 %v2111
    %v2144 = vunpack.c.l.b16 %v2112
    %v2145 = vunpack.c.l.b16 %v2113
    %v2146 = vunpack.c.l.b16 %v2114
    %v2147 = vunpack.c.l.b16 %v2115
    %v2148 = vunpack.c.l.b16 %v2116
    %v2149 = vpack.c.b16 %v2134, %v2133
    %v2150 = vpack.c.b16 %v2136, %v2135
    %v2151 = vpack.c.b16 %v2138, %v2137
    %v2152 = vpack.c.b16 %v2140, %v2139
    %v2153 = vpack.c.b16 %v2142, %v2141
    %v2154 = vpack.c.b16 %v2144, %v2143
    %v2155 = vpack.c.b16 %v2146, %v2145
    %v2156 = vpack.c.b16 %v2148, %v2147
    %2165 = vmatprep.subr.bf16.mxu0 0
    %2166 = vmatpush1.bf16.msra.mxu0 %v2149
    %2167 = vmatprep.subr.bf16.mxu0 0
    %2168 = vmatpush1.bf16.msra.mxu0 %v2150
    %2169 = vmatprep.subr.bf16.mxu0 0
    %2170 = vmatpush1.bf16.msra.mxu0 %v2151
    %2171 = vmatprep.subr.bf16.mxu0 0
    %2172 = vmatpush1.bf16.msra.mxu0 %v2152
    %2173 = vmatprep.subr.bf16.mxu0 0
    %2174 = vmatpush1.bf16.msra.mxu0 %v2153
    %2175 = vmatprep.subr.bf16.mxu0 0
    %2176 = vmatpush1.bf16.msra.mxu0 %v2154
    %2177 = vmatprep.subr.bf16.mxu0 0
    %2178 = vmatpush1.bf16.msra.mxu0 %v2155
    %2179 = vmatprep.subr.bf16.mxu0 0
    %2180 = vmatpush1.bf16.msra.mxu0 %v2156
    %2181 = vmatprep.subr.bf16.mxu0 0
    %2182 = vmatpush1.bf16.msra.mxu0 0
    %2183 = vmatprep.subr.bf16.mxu0 0
    %2184 = vmatpush1.bf16.msra.mxu0 0
    %2185 = vmatprep.subr.bf16.mxu0 0
    %2186 = vmatpush1.bf16.msra.mxu0 0
    %2187 = vmatprep.subr.bf16.mxu0 0
    %2188 = vmatpush1.bf16.msra.mxu0 0
    %2189 = vmatprep.subr.bf16.mxu0 0
    %2190 = vmatpush1.bf16.msra.mxu0 0
    %2191 = vmatprep.subr.bf16.mxu0 0
    %2192 = vmatpush1.bf16.msra.mxu0 0
    %2193 = vmatprep.subr.bf16.mxu0 0
    %2194 = vmatpush1.bf16.msra.mxu0 0
    %2195 = vmatprep.subr.bf16.mxu0 0
    %2196 = vmatpush1.bf16.msra.mxu0 0
    %2197 = vmatprep.mubr.bf16.mxu0 0
    %2198 = vmatmul.mubr.bf16.gmra.mrb[0].mxu0 %v1854
    %v2199 = vpop.f32.mrb[0].mxu0
    %v2200 = vadd.f32 %v108, %v2199
    %v2201 = vpop.f32.mrb[0].mxu0
    %v2202 = vpop.f32.mrb[0].mxu0
    %v2203 = vpop.f32.mrb[0].mxu0
    %2204 = vdwg.mxu0
    %v2205 = vld [vmem:[#allocation6] sm:$0xf]
    %v2206 = vld [vmem:[#allocation6 + $0x4] sm:$0xf]
    %v2207 = vld [vmem:[#allocation6 + $0x8] sm:$0xf]
    %v2208 = vld [vmem:[#allocation6 + $0xc] sm:$0xf]
    %v2209 = vld [vmem:[#allocation6 + $0x10] sm:$0xf]
    %v2210 = vld [vmem:[#allocation6 + $0x14] sm:$0xf]
    %v2211 = vld [vmem:[#allocation6 + $0x18] sm:$0xf]
    %v2212 = vld [vmem:[#allocation6 + $0x1c] sm:$0xf]
    %v2213 = vld [vmem:[#allocation6 + $0x20] sm:$0xf]
    %v2214 = vld [vmem:[#allocation6 + $0x24] sm:$0xf]
    %v2215 = vld [vmem:[#allocation6 + $0x28] sm:$0xf]
    %v2216 = vld [vmem:[#allocation6 + $0x2c] sm:$0xf]
    %v2217 = vld [vmem:[#allocation6 + $0x30] sm:$0xf]
    %v2218 = vld [vmem:[#allocation6 + $0x34] sm:$0xf]
    %v2219 = vld [vmem:[#allocation6 + $0x38] sm:$0xf]
    %v2220 = vld [vmem:[#allocation6 + $0x3c] sm:$0xf]
    %v2237 = vunpack.c.l.b16 %v2205
    %v2238 = vunpack.c.l.b16 %v2206
    %v2239 = vunpack.c.l.b16 %v2207
    %v2240 = vunpack.c.l.b16 %v2208
    %v2241 = vunpack.c.l.b16 %v2209
    %v2242 = vunpack.c.l.b16 %v2210
    %v2243 = vunpack.c.l.b16 %v2211
    %v2244 = vunpack.c.l.b16 %v2212
    %v2245 = vunpack.c.l.b16 %v2213
    %v2246 = vunpack.c.l.b16 %v2214
    %v2247 = vunpack.c.l.b16 %v2215
    %v2248 = vunpack.c.l.b16 %v2216
    %v2249 = vunpack.c.l.b16 %v2217
    %v2250 = vunpack.c.l.b16 %v2218
    %v2251 = vunpack.c.l.b16 %v2219
    %v2252 = vunpack.c.l.b16 %v2220
    %v2253 = vpack.c.b16 %v2238, %v2237
    %v2254 = vpack.c.b16 %v2240, %v2239
    %v2255 = vpack.c.b16 %v2242, %v2241
    %v2256 = vpack.c.b16 %v2244, %v2243
    %v2257 = vpack.c.b16 %v2246, %v2245
    %v2258 = vpack.c.b16 %v2248, %v2247
    %v2259 = vpack.c.b16 %v2250, %v2249
    %v2260 = vpack.c.b16 %v2252, %v2251
    %2269 = vmatprep.subr.bf16.mxu0 0
    %2270 = vmatpush1.bf16.msra.mxu0 %v2253
    %2271 = vmatprep.subr.bf16.mxu0 0
    %2272 = vmatpush1.bf16.msra.mxu0 %v2254
    %2273 = vmatprep.subr.bf16.mxu0 0
    %2274 = vmatpush1.bf16.msra.mxu0 %v2255
    %2275 = vmatprep.subr.bf16.mxu0 0
    %2276 = vmatpush1.bf16.msra.mxu0 %v2256
    %2277 = vmatprep.subr.bf16.mxu0 0
    %2278 = vmatpush1.bf16.msra.mxu0 %v2257
    %2279 = vmatprep.subr.bf16.mxu0 0
    %2280 = vmatpush1.bf16.msra.mxu0 %v2258
    %2281 = vmatprep.subr.bf16.mxu0 0
    %2282 = vmatpush1.bf16.msra.mxu0 %v2259
    %2283 = vmatprep.subr.bf16.mxu0 0
    %2284 = vmatpush1.bf16.msra.mxu0 %v2260
    %2285 = vmatprep.subr.bf16.mxu0 0
    %2286 = vmatpush1.bf16.msra.mxu0 0
    %2287 = vmatprep.subr.bf16.mxu0 0
    %2288 = vmatpush1.bf16.msra.mxu0 0
    %2289 = vmatprep.subr.bf16.mxu0 0
    %2290 = vmatpush1.bf16.msra.mxu0 0
    %2291 = vmatprep.subr.bf16.mxu0 0
    %2292 = vmatpush1.bf16.msra.mxu0 0
    %2293 = vmatprep.subr.bf16.mxu0 0
    %2294 = vmatpush1.bf16.msra.mxu0 0
    %2295 = vmatprep.subr.bf16.mxu0 0
    %2296 = vmatpush1.bf16.msra.mxu0 0
    %2297 = vmatprep.subr.bf16.mxu0 0
    %2298 = vmatpush1.bf16.msra.mxu0 0
    %2299 = vmatprep.subr.bf16.mxu0 0
    %2300 = vmatpush1.bf16.msra.mxu0 0
    %2301 = vmatprep.mubr.bf16.mxu0 0
    %2302 = vmatmul.mubr.bf16.gmra.mrb[0].mxu0 %v1855
    %v2303 = vpop.f32.mrb[0].mxu0
    %v2304 = vadd.f32 %v122, %v2303
    %v2305 = vpop.f32.mrb[0].mxu0
    %v2306 = vpop.f32.mrb[0].mxu0
    %v2307 = vpop.f32.mrb[0].mxu0
    %2308 = vdwg.mxu0
    %v2309 = vmul.f32 %v2098, %v2304
    %v2310 = vadd.f32 %v2200, %v2309
    %v2311 = vtanh.pop %v2310
    %v2312 = vsub.f32 1.0, %v2100
    %v2313 = vmul.f32 %v2312, %v2311
    %v2314 = vmul.f32 %v2100, %v1584
    %v2315 = vadd.f32 %v2313, %v2314
    %s2316 = scalar_lea.vmem %s11, 16
    %2317 = vst [vmem:[%s2316] sm:$0xff] %v2315
    %s2318 = scalar_lea.vmem %s0, 72
    %v2319 = vld [vmem:[%s2318] sm:$0xff]
    %v2320 = vld [vmem:[%s2318 + $0x8] sm:$0xff]
    %v2321 = vld [vmem:[%s2318 + $0x10] sm:$0xff]
    %v2322 = vld [vmem:[#allocation2] sm:$0xff]
    %v2323 = vld [vmem:[#allocation2 + $0x8] sm:$0xf]
    %v2324 = vld [vmem:[#allocation2 + $0xc] sm:$0xff]
    %v2325 = vld [vmem:[#allocation2 + $0x14] sm:$0xf]
    %v2326 = vld [vmem:[#allocation2 + $0x18] sm:$0xff]
    %v2327 = vld [vmem:[#allocation2 + $0x20] sm:$0xf]
    %v2328 = vld [vmem:[#allocation2 + $0x24] sm:$0xff]
    %v2329 = vld [vmem:[#allocation2 + $0x2c] sm:$0xf]
    %v2330 = vld [vmem:[#allocation2 + $0x30] sm:$0xff]
    %v2331 = vld [vmem:[#allocation2 + $0x38] sm:$0xf]
    %v2332 = vld [vmem:[#allocation2 + $0x3c] sm:$0xff]
    %v2333 = vld [vmem:[#allocation2 + $0x44] sm:$0xf]
    %v2334 = vld [vmem:[#allocation2 + $0x48] sm:$0xff]
    %v2335 = vld [vmem:[#allocation2 + $0x50] sm:$0xf]
    %v2336 = vld [vmem:[#allocation2 + $0x54] sm:$0xff]
    %v2337 = vld [vmem:[#allocation2 + $0x5c] sm:$0xf]
    %v2338 = vld [vmem:[#allocation2 + $0x60] sm:$0xff]
    %v2339 = vld [vmem:[#allocation2 + $0x68] sm:$0xf]
    %v2340 = vld [vmem:[#allocation2 + $0x6c] sm:$0xff]
    %v2341 = vld [vmem:[#allocation2 + $0x74] sm:$0xf]
    %v2342 = vld [vmem:[#allocation2 + $0x78] sm:$0xff]
    %v2343 = vld [vmem:[#allocation2 + $0x80] sm:$0xf]
    %v2344 = vld [vmem:[#allocation2 + $0x84] sm:$0xff]
    %v2345 = vld [vmem:[#allocation2 + $0x8c] sm:$0xf]
    %v2346 = vld [vmem:[#allocation2 + $0x90] sm:$0xff]
    %v2347 = vld [vmem:[#allocation2 + $0x98] sm:$0xf]
    %v2348 = vld [vmem:[#allocation2 + $0x9c] sm:$0xff]
    %v2349 = vld [vmem:[#allocation2 + $0xa4] sm:$0xf]
    %v2350 = vld [vmem:[#allocation2 + $0xa8] sm:$0xff]
    %v2351 = vld [vmem:[#allocation2 + $0xb0] sm:$0xf]
    %v2352 = vld [vmem:[#allocation2 + $0xb4] sm:$0xff]
    %v2353 = vld [vmem:[#allocation2 + $0xbc] sm:$0xf]
    %v2386 = vunpack.c.l.b16 %v2322
    %v2387 = vunpack.c.h.b16 %v2322
    %v2388 = vunpack.c.l.b16 %v2323
    %v2389 = vunpack.c.l.b16 %v2324
    %v2390 = vunpack.c.h.b16 %v2324
    %v2391 = vunpack.c.l.b16 %v2325
    %v2392 = vunpack.c.l.b16 %v2326
    %v2393 = vunpack.c.h.b16 %v2326
    %v2394 = vunpack.c.l.b16 %v2327
    %v2395 = vunpack.c.l.b16 %v2328
    %v2396 = vunpack.c.h.b16 %v2328
    %v2397 = vunpack.c.l.b16 %v2329
    %v2398 = vunpack.c.l.b16 %v2330
    %v2399 = vunpack.c.h.b16 %v2330
    %v2400 = vunpack.c.l.b16 %v2331
    %v2401 = vunpack.c.l.b16 %v2332
    %v2402 = vunpack.c.h.b16 %v2332
    %v2403 = vunpack.c.l.b16 %v2333
    %v2404 = vunpack.c.l.b16 %v2334
    %v2405 = vunpack.c.h.b16 %v2334
    %v2406 = vunpack.c.l.b16 %v2335
    %v2407 = vunpack.c.l.b16 %v2336
    %v2408 = vunpack.c.h.b16 %v2336
    %v2409 = vunpack.c.l.b16 %v2337
    %v2410 = vunpack.c.l.b16 %v2338
    %v2411 = vunpack.c.h.b16 %v2338
    %v2412 = vunpack.c.l.b16 %v2339
    %v2413 = vunpack.c.l.b16 %v2340
    %v2414 = vunpack.c.h.b16 %v2340
    %v2415 = vunpack.c.l.b16 %v2341
    %v2416 = vunpack.c.l.b16 %v2342
    %v2417 = vunpack.c.h.b16 %v2342
    %v2418 = vunpack.c.l.b16 %v2343
    %v2419 = vunpack.c.l.b16 %v2344
    %v2420 = vunpack.c.h.b16 %v2344
    %v2421 = vunpack.c.l.b16 %v2345
    %v2422 = vunpack.c.l.b16 %v2346
    %v2423 = vunpack.c.h.b16 %v2346
    %v2424 = vunpack.c.l.b16 %v2347
    %v2425 = vunpack.c.l.b16 %v2348
    %v2426 = vunpack.c.h.b16 %v2348
    %v2427 = vunpack.c.l.b16 %v2349
    %v2428 = vunpack.c.l.b16 %v2350
    %v2429 = vunpack.c.h.b16 %v2350
    %v2430 = vunpack.c.l.b16 %v2351
    %v2431 = vunpack.c.l.b16 %v2352
    %v2432 = vunpack.c.h.b16 %v2352
    %v2433 = vunpack.c.l.b16 %v2353
    %v2434 = vpack.c.b16 %v2389, %v2386
    %v2435 = vpack.c.b16 %v2390, %v2387
    %v2436 = vpack.c.b16 %v2391, %v2388
    %v2437 = vpack.c.b16 %v2395, %v2392
    %v2438 = vpack.c.b16 %v2396, %v2393
    %v2439 = vpack.c.b16 %v2397, %v2394
    %v2440 = vpack.c.b16 %v2401, %v2398
    %v2441 = vpack.c.b16 %v2402, %v2399
    %v2442 = vpack.c.b16 %v2403, %v2400
    %v2443 = vpack.c.b16 %v2407, %v2404
    %v2444 = vpack.c.b16 %v2408, %v2405
    %v2445 = vpack.c.b16 %v2409, %v2406
    %v2446 = vpack.c.b16 %v2413, %v2410
    %v2447 = vpack.c.b16 %v2414, %v2411
    %v2448 = vpack.c.b16 %v2415, %v2412
    %v2449 = vpack.c.b16 %v2419, %v2416
    %v2450 = vpack.c.b16 %v2420, %v2417
    %v2451 = vpack.c.b16 %v2421, %v2418
    %v2452 = vpack.c.b16 %v2425, %v2422
    %v2453 = vpack.c.b16 %v2426, %v2423
    %v2454 = vpack.c.b16 %v2427, %v2424
    %v2455 = vpack.c.b16 %v2431, %v2428
    %v2456 = vpack.c.b16 %v2432, %v2429
    %v2457 = vpack.c.b16 %v2433, %v2430
    %2482 = vmatprep.subr.bf16.mxu0 %v2435
    %2483 = vmatpush1.bf16.msra.mxu0 %v2434
    %2484 = vmatprep.subr.bf16.mxu0 %v2438
    %2485 = vmatpush1.bf16.msra.mxu0 %v2437
    %2486 = vmatprep.subr.bf16.mxu0 %v2441
    %2487 = vmatpush1.bf16.msra.mxu0 %v2440
    %2488 = vmatprep.subr.bf16.mxu0 %v2444
    %2489 = vmatpush1.bf16.msra.mxu0 %v2443
    %2490 = vmatprep.subr.bf16.mxu0 %v2447
    %2491 = vmatpush1.bf16.msra.mxu0 %v2446
    %2492 = vmatprep.subr.bf16.mxu0 %v2450
    %2493 = vmatpush1.bf16.msra.mxu0 %v2449
    %2494 = vmatprep.subr.bf16.mxu0 %v2453
    %2495 = vmatpush1.bf16.msra.mxu0 %v2452
    %2496 = vmatprep.subr.bf16.mxu0 %v2456
    %2497 = vmatpush1.bf16.msra.mxu0 %v2455
    %2498 = vmatprep.subr.bf16.mxu0 0
    %2499 = vmatpush1.bf16.msra.mxu0 0
    %2500 = vmatprep.subr.bf16.mxu0 0
    %2501 = vmatpush1.bf16.msra.mxu0 0
    %2502 = vmatprep.subr.bf16.mxu0 0
    %2503 = vmatpush1.bf16.msra.mxu0 0
    %2504 = vmatprep.subr.bf16.mxu0 0
    %2505 = vmatpush1.bf16.msra.mxu0 0
    %2506 = vmatprep.subr.bf16.mxu0 0
    %2507 = vmatpush1.bf16.msra.mxu0 0
    %2508 = vmatprep.subr.bf16.mxu0 0
    %2509 = vmatpush1.bf16.msra.mxu0 0
    %2510 = vmatprep.subr.bf16.mxu0 0
    %2511 = vmatpush1.bf16.msra.mxu0 0
    %2512 = vmatprep.subr.bf16.mxu0 0
    %2513 = vmatpush1.bf16.msra.mxu0 0
    %2514 = vmatprep.mubr.bf16.mxu0 0
    %2515 = vmatmul.mubr.bf16.gmra.mrb[0].mxu0 %v1854
    %v2516 = vpop.f32.mrb[0].mxu0
    %v2517 = vadd.f32 0.0, %v2516
    %v2518 = vpop.f32.mrb[0].mxu0
    %v2519 = vadd.f32 0.0, %v2518
    %v2520 = vpop.f32.mrb[0].mxu0
    %v2521 = vpop.f32.mrb[0].mxu0
    %2522 = vdwg.mxu0
    %2523 = vmatprep.subr.bf16.mxu0 0
    %2524 = vmatpush1.bf16.msra.mxu0 %v2436
    %2525 = vmatprep.subr.bf16.mxu0 0
    %2526 = vmatpush1.bf16.msra.mxu0 %v2439
    %2527 = vmatprep.subr.bf16.mxu0 0
    %2528 = vmatpush1.bf16.msra.mxu0 %v2442
    %2529 = vmatprep.subr.bf16.mxu0 0
    %2530 = vmatpush1.bf16.msra.mxu0 %v2445
    %2531 = vmatprep.subr.bf16.mxu0 0
    %2532 = vmatpush1.bf16.msra.mxu0 %v2448
    %2533 = vmatprep.subr.bf16.mxu0 0
    %2534 = vmatpush1.bf16.msra.mxu0 %v2451
    %2535 = vmatprep.subr.bf16.mxu0 0
    %2536 = vmatpush1.bf16.msra.mxu0 %v2454
    %2537 = vmatprep.subr.bf16.mxu0 0
    %2538 = vmatpush1.bf16.msra.mxu0 %v2457
    %2539 = vmatprep.subr.bf16.mxu0 0
    %2540 = vmatpush1.bf16.msra.mxu0 0
    %2541 = vmatprep.subr.bf16.mxu0 0
    %2542 = vmatpush1.bf16.msra.mxu0 0
    %2543 = vmatprep.subr.bf16.mxu0 0
    %2544 = vmatpush1.bf16.msra.mxu0 0
    %2545 = vmatprep.subr.bf16.mxu0 0
    %2546 = vmatpush1.bf16.msra.mxu0 0
    %2547 = vmatprep.subr.bf16.mxu0 0
    %2548 = vmatpush1.bf16.msra.mxu0 0
    %2549 = vmatprep.subr.bf16.mxu0 0
    %2550 = vmatpush1.bf16.msra.mxu0 0
    %2551 = vmatprep.subr.bf16.mxu0 0
    %2552 = vmatpush1.bf16.msra.mxu0 0
    %2553 = vmatprep.subr.bf16.mxu0 0
    %2554 = vmatpush1.bf16.msra.mxu0 0
    %2555 = vmatprep.mubr.bf16.mxu0 0
    %2556 = vmatmul.mubr.bf16.gmra.mrb[0].mxu0 %v1854
    %v2557 = vpop.f32.mrb[0].mxu0
    %v2558 = vadd.f32 0.0, %v2557
    %v2559 = vpop.f32.mrb[0].mxu0
    %v2560 = vpop.f32.mrb[0].mxu0
    %v2561 = vpop.f32.mrb[0].mxu0
    %2562 = vdwg.mxu0
    %v2563 = vadd.f32 %v2319, %v2517
    %v2564 = vadd.f32 %v2320, %v2519
    %v2565 = vxor.u32 %v2563, 2147483648
    %v2566 = vxor.u32 %v2564, 2147483648
    %v2567 = vmul.f32 %v2565, 1.442695
    %v2568 = vpow.pop %v2567
    %v2569 = vmul.f32 %v2566, 1.442695
    %v2570 = vpow.pop %v2569
    %v2571 = vadd.f32 %v2568, 1.0
    %v2572 = vadd.f32 %v2570, 1.0
    %v2573 = vrcp.pop %v2571
    %v2574 = vmul.f32 1.0, %v2573
    %v2575 = vrcp.pop %v2572
    %v2576 = vmul.f32 1.0, %v2575
    %v2577 = vadd.f32 %v2558, %v115
    %v2578 = vmul.f32 %v2574, %v2577
    %v2579 = vadd.f32 %v2321, %v2578
    %v2580 = vtanh.pop %v2579
    %v2581 = vsub.f32 1.0, %v2576
    %v2582 = vmul.f32 %v2581, %v2580
    %v2583 = vmul.f32 %v2576, %v1853
    %v2584 = vadd.f32 %v2582, %v2583
    %v2585 = vpack.c.bf16 %v2584, %v2584
    %v2586 = vpack.c.bf16 %v2315, %v2315
    %v2587 = vld [vmem:[%s4] sm:$0xff]
    %v2588 = vld [vmem:[%s4 + $0x8] sm:$0xff]
    %v2589 = vld [vmem:[%s4 + $0x10] sm:$0xff]
    %v2590 = vld [vmem:[%s4 + $0x18] sm:$0xff]
    %v2591 = vld [vmem:[%s4 + $0x20] sm:$0xff]
    %v2592 = vld [vmem:[%s4 + $0x28] sm:$0xff]
    %v2593 = vld [vmem:[%s4 + $0x30] sm:$0xff]
    %v2594 = vld [vmem:[%s4 + $0x38] sm:$0xff]
    %v2595 = vld [vmem:[%s4 + $0x40] sm:$0xff]
    %v2596 = vld [vmem:[%s4 + $0x48] sm:$0xff]
    %v2597 = vld [vmem:[%s4 + $0x50] sm:$0xff]
    %v2598 = vld [vmem:[%s4 + $0x58] sm:$0xff]
    %v2599 = vld [vmem:[%s4 + $0x60] sm:$0xff]
    %v2600 = vld [vmem:[%s4 + $0x68] sm:$0xff]
    %v2601 = vld [vmem:[%s4 + $0x70] sm:$0xff]
    %v2602 = vld [vmem:[%s4 + $0x78] sm:$0xff]
    %v2603 = vld [vmem:[%s4 + $0x80] sm:$0xff]
    %v2604 = vld [vmem:[%s4 + $0x88] sm:$0xff]
    %v2605 = vld [vmem:[%s4 + $0x90] sm:$0xff]
    %v2606 = vld [vmem:[%s4 + $0x98] sm:$0xff]
    %v2607 = vld [vmem:[%s4 + $0xa0] sm:$0xff]
    %v2608 = vld [vmem:[%s4 + $0xa8] sm:$0xff]
    %v2609 = vld [vmem:[%s4 + $0xb0] sm:$0xff]
    %v2610 = vld [vmem:[%s4 + $0xb8] sm:$0xff]
    %v2611 = vld [vmem:[%s4 + $0xc0] sm:$0xff]
    %v2612 = vld [vmem:[%s4 + $0xc8] sm:$0xff]
    %v2613 = vld [vmem:[%s4 + $0xd0] sm:$0xff]
    %v2614 = vld [vmem:[%s4 + $0xd8] sm:$0xff]
    %v2615 = vld [vmem:[%s4 + $0xe0] sm:$0xff]
    %v2616 = vld [vmem:[%s4 + $0xe8] sm:$0xff]
    %v2617 = vld [vmem:[%s4 + $0xf0] sm:$0xff]
    %v2618 = vld [vmem:[%s4 + $0xf8] sm:$0xff]
    %v2651 = vunpack.c.l.b16 %v2587
    %v2652 = vunpack.c.h.b16 %v2587
    %v2653 = vunpack.c.l.b16 %v2588
    %v2654 = vunpack.c.h.b16 %v2588
    %v2655 = vunpack.c.l.b16 %v2589
    %v2656 = vunpack.c.h.b16 %v2589
    %v2657 = vunpack.c.l.b16 %v2590
    %v2658 = vunpack.c.h.b16 %v2590
    %v2659 = vunpack.c.l.b16 %v2591
    %v2660 = vunpack.c.h.b16 %v2591
    %v2661 = vunpack.c.l.b16 %v2592
    %v2662 = vunpack.c.h.b16 %v2592
    %v2663 = vunpack.c.l.b16 %v2593
    %v2664 = vunpack.c.h.b16 %v2593
    %v2665 = vunpack.c.l.b16 %v2594
    %v2666 = vunpack.c.h.b16 %v2594
    %v2667 = vunpack.c.l.b16 %v2595
    %v2668 = vunpack.c.h.b16 %v2595
    %v2669 = vunpack.c.l.b16 %v2596
    %v2670 = vunpack.c.h.b16 %v2596
    %v2671 = vunpack.c.l.b16 %v2597
    %v2672 = vunpack.c.h.b16 %v2597
    %v2673 = vunpack.c.l.b16 %v2598
    %v2674 = vunpack.c.h.b16 %v2598
    %v2675 = vunpack.c.l.b16 %v2599
    %v2676 = vunpack.c.h.b16 %v2599
    %v2677 = vunpack.c.l.b16 %v2600
    %v2678 = vunpack.c.h.b16 %v2600
    %v2679 = vunpack.c.l.b16 %v2601
    %v2680 = vunpack.c.h.b16 %v2601
    %v2681 = vunpack.c.l.b16 %v2602
    %v2682 = vunpack.c.h.b16 %v2602
    %v2683 = vunpack.c.l.b16 %v2603
    %v2684 = vunpack.c.h.b16 %v2603
    %v2685 = vunpack.c.l.b16 %v2604
    %v2686 = vunpack.c.h.b16 %v2604
    %v2687 = vunpack.c.l.b16 %v2605
    %v2688 = vunpack.c.h.b16 %v2605
    %v2689 = vunpack.c.l.b16 %v2606
    %v2690 = vunpack.c.h.b16 %v2606
    %v2691 = vunpack.c.l.b16 %v2607
    %v2692 = vunpack.c.h.b16 %v2607
    %v2693 = vunpack.c.l.b16 %v2608
    %v2694 = vunpack.c.h.b16 %v2608
    %v2695 = vunpack.c.l.b16 %v2609
    %v2696 = vunpack.c.h.b16 %v2609
    %v2697 = vunpack.c.l.b16 %v2610
    %v2698 = vunpack.c.h.b16 %v2610
    %v2699 = vunpack.c.l.b16 %v2611
    %v2700 = vunpack.c.h.b16 %v2611
    %v2701 = vunpack.c.l.b16 %v2612
    %v2702 = vunpack.c.h.b16 %v2612
    %v2703 = vunpack.c.l.b16 %v2613
    %v2704 = vunpack.c.h.b16 %v2613
    %v2705 = vunpack.c.l.b16 %v2614
    %v2706 = vunpack.c.h.b16 %v2614
    %v2707 = vunpack.c.l.b16 %v2615
    %v2708 = vunpack.c.h.b16 %v2615
    %v2709 = vunpack.c.l.b16 %v2616
    %v2710 = vunpack.c.h.b16 %v2616
    %v2711 = vunpack.c.l.b16 %v2617
    %v2712 = vunpack.c.h.b16 %v2617
    %v2713 = vunpack.c.l.b16 %v2618
    %v2714 = vunpack.c.h.b16 %v2618
    %v2715 = vpack.c.b16 %v2653, %v2651
    %v2716 = vpack.c.b16 %v2654, %v2652
    %v2717 = vpack.c.b16 %v2657, %v2655
    %v2718 = vpack.c.b16 %v2658, %v2656
    %v2719 = vpack.c.b16 %v2661, %v2659
    %v2720 = vpack.c.b16 %v2662, %v2660
    %v2721 = vpack.c.b16 %v2665, %v2663
    %v2722 = vpack.c.b16 %v2666, %v2664
    %v2723 = vpack.c.b16 %v2669, %v2667
    %v2724 = vpack.c.b16 %v2670, %v2668
    %v2725 = vpack.c.b16 %v2673, %v2671
    %v2726 = vpack.c.b16 %v2674, %v2672
    %v2727 = vpack.c.b16 %v2677, %v2675
    %v2728 = vpack.c.b16 %v2678, %v2676
    %v2729 = vpack.c.b16 %v2681, %v2679
    %v2730 = vpack.c.b16 %v2682, %v2680
    %v2731 = vpack.c.b16 %v2685, %v2683
    %v2732 = vpack.c.b16 %v2686, %v2684
    %v2733 = vpack.c.b16 %v2689, %v2687
    %v2734 = vpack.c.b16 %v2690, %v2688
    %v2735 = vpack.c.b16 %v2693, %v2691
    %v2736 = vpack.c.b16 %v2694, %v2692
    %v2737 = vpack.c.b16 %v2697, %v2695
    %v2738 = vpack.c.b16 %v2698, %v2696
    %v2739 = vpack.c.b16 %v2701, %v2699
    %v2740 = vpack.c.b16 %v2702, %v2700
    %v2741 = vpack.c.b16 %v2705, %v2703
    %v2742 = vpack.c.b16 %v2706, %v2704
    %v2743 = vpack.c.b16 %v2709, %v2707
    %v2744 = vpack.c.b16 %v2710, %v2708
    %v2745 = vpack.c.b16 %v2713, %v2711
    %v2746 = vpack.c.b16 %v2714, %v2712
    %2779 = vmatprep.subr.bf16.mxu0 %v2716
    %2780 = vmatpush1.bf16.msra.mxu0 %v2715
    %2781 = vmatprep.subr.bf16.mxu0 %v2718
    %2782 = vmatpush1.bf16.msra.mxu0 %v2717
    %2783 = vmatprep.subr.bf16.mxu0 %v2720
    %2784 = vmatpush1.bf16.msra.mxu0 %v2719
    %2785 = vmatprep.subr.bf16.mxu0 %v2722
    %2786 = vmatpush1.bf16.msra.mxu0 %v2721
    %2787 = vmatprep.subr.bf16.mxu0 %v2724
    %2788 = vmatpush1.bf16.msra.mxu0 %v2723
    %2789 = vmatprep.subr.bf16.mxu0 %v2726
    %2790 = vmatpush1.bf16.msra.mxu0 %v2725
    %2791 = vmatprep.subr.bf16.mxu0 %v2728
    %2792 = vmatpush1.bf16.msra.mxu0 %v2727
    %2793 = vmatprep.subr.bf16.mxu0 %v2730
    %2794 = vmatpush1.bf16.msra.mxu0 %v2729
    %2795 = vmatprep.subr.bf16.mxu0 %v2732
    %2796 = vmatpush1.bf16.msra.mxu0 %v2731
    %2797 = vmatprep.subr.bf16.mxu0 %v2734
    %2798 = vmatpush1.bf16.msra.mxu0 %v2733
    %2799 = vmatprep.subr.bf16.mxu0 %v2736
    %2800 = vmatpush1.bf16.msra.mxu0 %v2735
    %2801 = vmatprep.subr.bf16.mxu0 %v2738
    %2802 = vmatpush1.bf16.msra.mxu0 %v2737
    %2803 = vmatprep.subr.bf16.mxu0 %v2740
    %2804 = vmatpush1.bf16.msra.mxu0 %v2739
    %2805 = vmatprep.subr.bf16.mxu0 %v2742
    %2806 = vmatpush1.bf16.msra.mxu0 %v2741
    %2807 = vmatprep.subr.bf16.mxu0 %v2744
    %2808 = vmatpush1.bf16.msra.mxu0 %v2743
    %2809 = vmatprep.subr.bf16.mxu0 %v2746
    %2810 = vmatpush1.bf16.msra.mxu0 %v2745
    %2811 = vmatprep.mubr.bf16.mxu0 %v2586
    %2812 = vmatmul.mubr.bf16.gmra.mrb[0].mxu0 %v2585
    %v2813 = vpop.f32.mrb[0].mxu0
    %v2814 = vadd.f32 %v96, %v2813
    %v2815 = vpop.f32.mrb[0].mxu0
    %v2816 = vadd.f32 %v100, %v2815
    %v2817 = vpop.f32.mrb[0].mxu0
    %v2818 = vpop.f32.mrb[0].mxu0
    %2819 = vdwg.mxu0
    %v2820 = vxor.u32 %v2814, 2147483648
    %v2821 = vxor.u32 %v2816, 2147483648
    %v2822 = vmul.f32 %v2820, 1.442695
    %v2823 = vpow.pop %v2822
    %v2824 = vmul.f32 %v2821, 1.442695
    %v2825 = vpow.pop %v2824
    %v2826 = vadd.f32 %v2823, 1.0
    %v2827 = vadd.f32 %v2825, 1.0
    %v2828 = vrcp.pop %v2826
    %v2829 = vmul.f32 1.0, %v2828
    %v2830 = vrcp.pop %v2827
    %v2831 = vmul.f32 1.0, %v2830
    %v2832 = vld [vmem:[#allocation4] sm:$0xf]
    %v2833 = vld [vmem:[#allocation4 + $0x4] sm:$0xf]
    %v2834 = vld [vmem:[#allocation4 + $0x8] sm:$0xf]
    %v2835 = vld [vmem:[#allocation4 + $0xc] sm:$0xf]
    %v2836 = vld [vmem:[#allocation4 + $0x10] sm:$0xf]
    %v2837 = vld [vmem:[#allocation4 + $0x14] sm:$0xf]
    %v2838 = vld [vmem:[#allocation4 + $0x18] sm:$0xf]
    %v2839 = vld [vmem:[#allocation4 + $0x1c] sm:$0xf]
    %v2840 = vld [vmem:[#allocation4 + $0x20] sm:$0xf]
    %v2841 = vld [vmem:[#allocation4 + $0x24] sm:$0xf]
    %v2842 = vld [vmem:[#allocation4 + $0x28] sm:$0xf]
    %v2843 = vld [vmem:[#allocation4 + $0x2c] sm:$0xf]
    %v2844 = vld [vmem:[#allocation4 + $0x30] sm:$0xf]
    %v2845 = vld [vmem:[#allocation4 + $0x34] sm:$0xf]
    %v2846 = vld [vmem:[#allocation4 + $0x38] sm:$0xf]
    %v2847 = vld [vmem:[#allocation4 + $0x3c] sm:$0xf]
    %v2864 = vunpack.c.l.b16 %v2832
    %v2865 = vunpack.c.l.b16 %v2833
    %v2866 = vunpack.c.l.b16 %v2834
    %v2867 = vunpack.c.l.b16 %v2835
    %v2868 = vunpack.c.l.b16 %v2836
    %v2869 = vunpack.c.l.b16 %v2837
    %v2870 = vunpack.c.l.b16 %v2838
    %v2871 = vunpack.c.l.b16 %v2839
    %v2872 = vunpack.c.l.b16 %v2840
    %v2873 = vunpack.c.l.b16 %v2841
    %v2874 = vunpack.c.l.b16 %v2842
    %v2875 = vunpack.c.l.b16 %v2843
    %v2876 = vunpack.c.l.b16 %v2844
    %v2877 = vunpack.c.l.b16 %v2845
    %v2878 = vunpack.c.l.b16 %v2846
    %v2879 = vunpack.c.l.b16 %v2847
    %v2880 = vpack.c.b16 %v2865, %v2864
    %v2881 = vpack.c.b16 %v2867, %v2866
    %v2882 = vpack.c.b16 %v2869, %v2868
    %v2883 = vpack.c.b16 %v2871, %v2870
    %v2884 = vpack.c.b16 %v2873, %v2872
    %v2885 = vpack.c.b16 %v2875, %v2874
    %v2886 = vpack.c.b16 %v2877, %v2876
    %v2887 = vpack.c.b16 %v2879, %v2878
    %2896 = vmatprep.subr.bf16.mxu0 0
    %2897 = vmatpush1.bf16.msra.mxu0 %v2880
    %2898 = vmatprep.subr.bf16.mxu0 0
    %2899 = vmatpush1.bf16.msra.mxu0 %v2881
    %2900 = vmatprep.subr.bf16.mxu0 0
    %2901 = vmatpush1.bf16.msra.mxu0 %v2882
    %2902 = vmatprep.subr.bf16.mxu0 0
    %2903 = vmatpush1.bf16.msra.mxu0 %v2883
    %2904 = vmatprep.subr.bf16.mxu0 0
    %2905 = vmatpush1.bf16.msra.mxu0 %v2884
    %2906 = vmatprep.subr.bf16.mxu0 0
    %2907 = vmatpush1.bf16.msra.mxu0 %v2885
    %2908 = vmatprep.subr.bf16.mxu0 0
    %2909 = vmatpush1.bf16.msra.mxu0 %v2886
    %2910 = vmatprep.subr.bf16.mxu0 0
    %2911 = vmatpush1.bf16.msra.mxu0 %v2887
    %2912 = vmatprep.subr.bf16.mxu0 0
    %2913 = vmatpush1.bf16.msra.mxu0 0
    %2914 = vmatprep.subr.bf16.mxu0 0
    %2915 = vmatpush1.bf16.msra.mxu0 0
    %2916 = vmatprep.subr.bf16.mxu0 0
    %2917 = vmatpush1.bf16.msra.mxu0 0
    %2918 = vmatprep.subr.bf16.mxu0 0
    %2919 = vmatpush1.bf16.msra.mxu0 0
    %2920 = vmatprep.subr.bf16.mxu0 0
    %2921 = vmatpush1.bf16.msra.mxu0 0
    %2922 = vmatprep.subr.bf16.mxu0 0
    %2923 = vmatpush1.bf16.msra.mxu0 0
    %2924 = vmatprep.subr.bf16.mxu0 0
    %2925 = vmatpush1.bf16.msra.mxu0 0
    %2926 = vmatprep.subr.bf16.mxu0 0
    %2927 = vmatpush1.bf16.msra.mxu0 0
    %2928 = vmatprep.mubr.bf16.mxu0 0
    %2929 = vmatmul.mubr.bf16.gmra.mrb[0].mxu0 %v2585
    %v2930 = vpop.f32.mrb[0].mxu0
    %v2931 = vadd.f32 %v108, %v2930
    %v2932 = vpop.f32.mrb[0].mxu0
    %v2933 = vpop.f32.mrb[0].mxu0
    %v2934 = vpop.f32.mrb[0].mxu0
    %2935 = vdwg.mxu0
    %v2936 = vld [vmem:[#allocation6] sm:$0xf]
    %v2937 = vld [vmem:[#allocation6 + $0x4] sm:$0xf]
    %v2938 = vld [vmem:[#allocation6 + $0x8] sm:$0xf]
    %v2939 = vld [vmem:[#allocation6 + $0xc] sm:$0xf]
    %v2940 = vld [vmem:[#allocation6 + $0x10] sm:$0xf]
    %v2941 = vld [vmem:[#allocation6 + $0x14] sm:$0xf]
    %v2942 = vld [vmem:[#allocation6 + $0x18] sm:$0xf]
    %v2943 = vld [vmem:[#allocation6 + $0x1c] sm:$0xf]
    %v2944 = vld [vmem:[#allocation6 + $0x20] sm:$0xf]
    %v2945 = vld [vmem:[#allocation6 + $0x24] sm:$0xf]
    %v2946 = vld [vmem:[#allocation6 + $0x28] sm:$0xf]
    %v2947 = vld [vmem:[#allocation6 + $0x2c] sm:$0xf]
    %v2948 = vld [vmem:[#allocation6 + $0x30] sm:$0xf]
    %v2949 = vld [vmem:[#allocation6 + $0x34] sm:$0xf]
    %v2950 = vld [vmem:[#allocation6 + $0x38] sm:$0xf]
    %v2951 = vld [vmem:[#allocation6 + $0x3c] sm:$0xf]
    %v2968 = vunpack.c.l.b16 %v2936
    %v2969 = vunpack.c.l.b16 %v2937
    %v2970 = vunpack.c.l.b16 %v2938
    %v2971 = vunpack.c.l.b16 %v2939
    %v2972 = vunpack.c.l.b16 %v2940
    %v2973 = vunpack.c.l.b16 %v2941
    %v2974 = vunpack.c.l.b16 %v2942
    %v2975 = vunpack.c.l.b16 %v2943
    %v2976 = vunpack.c.l.b16 %v2944
    %v2977 = vunpack.c.l.b16 %v2945
    %v2978 = vunpack.c.l.b16 %v2946
    %v2979 = vunpack.c.l.b16 %v2947
    %v2980 = vunpack.c.l.b16 %v2948
    %v2981 = vunpack.c.l.b16 %v2949
    %v2982 = vunpack.c.l.b16 %v2950
    %v2983 = vunpack.c.l.b16 %v2951
    %v2984 = vpack.c.b16 %v2969, %v2968
    %v2985 = vpack.c.b16 %v2971, %v2970
    %v2986 = vpack.c.b16 %v2973, %v2972
    %v2987 = vpack.c.b16 %v2975, %v2974
    %v2988 = vpack.c.b16 %v2977, %v2976
    %v2989 = vpack.c.b16 %v2979, %v2978
    %v2990 = vpack.c.b16 %v2981, %v2980
    %v2991 = vpack.c.b16 %v2983, %v2982
    %3000 = vmatprep.subr.bf16.mxu0 0
    %3001 = vmatpush1.bf16.msra.mxu0 %v2984
    %3002 = vmatprep.subr.bf16.mxu0 0
    %3003 = vmatpush1.bf16.msra.mxu0 %v2985
    %3004 = vmatprep.subr.bf16.mxu0 0
    %3005 = vmatpush1.bf16.msra.mxu0 %v2986
    %3006 = vmatprep.subr.bf16.mxu0 0
    %3007 = vmatpush1.bf16.msra.mxu0 %v2987
    %3008 = vmatprep.subr.bf16.mxu0 0
    %3009 = vmatpush1.bf16.msra.mxu0 %v2988
    %3010 = vmatprep.subr.bf16.mxu0 0
    %3011 = vmatpush1.bf16.msra.mxu0 %v2989
    %3012 = vmatprep.subr.bf16.mxu0 0
    %3013 = vmatpush1.bf16.msra.mxu0 %v2990
    %3014 = vmatprep.subr.bf16.mxu0 0
    %3015 = vmatpush1.bf16.msra.mxu0 %v2991
    %3016 = vmatprep.subr.bf16.mxu0 0
    %3017 = vmatpush1.bf16.msra.mxu0 0
    %3018 = vmatprep.subr.bf16.mxu0 0
    %3019 = vmatpush1.bf16.msra.mxu0 0
    %3020 = vmatprep.subr.bf16.mxu0 0
    %3021 = vmatpush1.bf16.msra.mxu0 0
    %3022 = vmatprep.subr.bf16.mxu0 0
    %3023 = vmatpush1.bf16.msra.mxu0 0
    %3024 = vmatprep.subr.bf16.mxu0 0
    %3025 = vmatpush1.bf16.msra.mxu0 0
    %3026 = vmatprep.subr.bf16.mxu0 0
    %3027 = vmatpush1.bf16.msra.mxu0 0
    %3028 = vmatprep.subr.bf16.mxu0 0
    %3029 = vmatpush1.bf16.msra.mxu0 0
    %3030 = vmatprep.subr.bf16.mxu0 0
    %3031 = vmatpush1.bf16.msra.mxu0 0
    %3032 = vmatprep.mubr.bf16.mxu0 0
    %3033 = vmatmul.mubr.bf16.gmra.mrb[0].mxu0 %v2586
    %v3034 = vpop.f32.mrb[0].mxu0
    %v3035 = vadd.f32 %v122, %v3034
    %v3036 = vpop.f32.mrb[0].mxu0
    %v3037 = vpop.f32.mrb[0].mxu0
    %v3038 = vpop.f32.mrb[0].mxu0
    %3039 = vdwg.mxu0
    %v3040 = vmul.f32 %v2829, %v3035
    %v3041 = vadd.f32 %v2931, %v3040
    %v3042 = vtanh.pop %v3041
    %v3043 = vsub.f32 1.0, %v2831
    %v3044 = vmul.f32 %v3043, %v3042
    %v3045 = vmul.f32 %v2831, %v2315
    %v3046 = vadd.f32 %v3044, %v3045
    %s3047 = scalar_lea.vmem %s11, 24
    %3048 = vst [vmem:[%s3047] sm:$0xff] %v3046
    %s3049 = scalar_lea.vmem %s0, 96
    %v3050 = vld [vmem:[%s3049] sm:$0xff]
    %v3051 = vld [vmem:[%s3049 + $0x8] sm:$0xff]
    %v3052 = vld [vmem:[%s3049 + $0x10] sm:$0xff]
    %v3053 = vld [vmem:[#allocation2] sm:$0xff]
    %v3054 = vld [vmem:[#allocation2 + $0x8] sm:$0xf]
    %v3055 = vld [vmem:[#allocation2 + $0xc] sm:$0xff]
    %v3056 = vld [vmem:[#allocation2 + $0x14] sm:$0xf]
    %v3057 = vld [vmem:[#allocation2 + $0x18] sm:$0xff]
    %v3058 = vld [vmem:[#allocation2 + $0x20] sm:$0xf]
    %v3059 = vld [vmem:[#allocation2 + $0x24] sm:$0xff]
    %v3060 = vld [vmem:[#allocation2 + $0x2c] sm:$0xf]
    %v3061 = vld [vmem:[#allocation2 + $0x30] sm:$0xff]
    %v3062 = vld [vmem:[#allocation2 + $0x38] sm:$0xf]
    %v3063 = vld [vmem:[#allocation2 + $0x3c] sm:$0xff]
    %v3064 = vld [vmem:[#allocation2 + $0x44] sm:$0xf]
    %v3065 = vld [vmem:[#allocation2 + $0x48] sm:$0xff]
    %v3066 = vld [vmem:[#allocation2 + $0x50] sm:$0xf]
    %v3067 = vld [vmem:[#allocation2 + $0x54] sm:$0xff]
    %v3068 = vld [vmem:[#allocation2 + $0x5c] sm:$0xf]
    %v3069 = vld [vmem:[#allocation2 + $0x60] sm:$0xff]
    %v3070 = vld [vmem:[#allocation2 + $0x68] sm:$0xf]
    %v3071 = vld [vmem:[#allocation2 + $0x6c] sm:$0xff]
    %v3072 = vld [vmem:[#allocation2 + $0x74] sm:$0xf]
    %v3073 = vld [vmem:[#allocation2 + $0x78] sm:$0xff]
    %v3074 = vld [vmem:[#allocation2 + $0x80] sm:$0xf]
    %v3075 = vld [vmem:[#allocation2 + $0x84] sm:$0xff]
    %v3076 = vld [vmem:[#allocation2 + $0x8c] sm:$0xf]
    %v3077 = vld [vmem:[#allocation2 + $0x90] sm:$0xff]
    %v3078 = vld [vmem:[#allocation2 + $0x98] sm:$0xf]
    %v3079 = vld [vmem:[#allocation2 + $0x9c] sm:$0xff]
    %v3080 = vld [vmem:[#allocation2 + $0xa4] sm:$0xf]
    %v3081 = vld [vmem:[#allocation2 + $0xa8] sm:$0xff]
    %v3082 = vld [vmem:[#allocation2 + $0xb0] sm:$0xf]
    %v3083 = vld [vmem:[#allocation2 + $0xb4] sm:$0xff]
    %v3084 = vld [vmem:[#allocation2 + $0xbc] sm:$0xf]
    %v3117 = vunpack.c.l.b16 %v3053
    %v3118 = vunpack.c.h.b16 %v3053
    %v3119 = vunpack.c.l.b16 %v3054
    %v3120 = vunpack.c.l.b16 %v3055
    %v3121 = vunpack.c.h.b16 %v3055
    %v3122 = vunpack.c.l.b16 %v3056
    %v3123 = vunpack.c.l.b16 %v3057
    %v3124 = vunpack.c.h.b16 %v3057
    %v3125 = vunpack.c.l.b16 %v3058
    %v3126 = vunpack.c.l.b16 %v3059
    %v3127 = vunpack.c.h.b16 %v3059
    %v3128 = vunpack.c.l.b16 %v3060
    %v3129 = vunpack.c.l.b16 %v3061
    %v3130 = vunpack.c.h.b16 %v3061
    %v3131 = vunpack.c.l.b16 %v3062
    %v3132 = vunpack.c.l.b16 %v3063
    %v3133 = vunpack.c.h.b16 %v3063
    %v3134 = vunpack.c.l.b16 %v3064
    %v3135 = vunpack.c.l.b16 %v3065
    %v3136 = vunpack.c.h.b16 %v3065
    %v3137 = vunpack.c.l.b16 %v3066
    %v3138 = vunpack.c.l.b16 %v3067
    %v3139 = vunpack.c.h.b16 %v3067
    %v3140 = vunpack.c.l.b16 %v3068
    %v3141 = vunpack.c.l.b16 %v3069
    %v3142 = vunpack.c.h.b16 %v3069
    %v3143 = vunpack.c.l.b16 %v3070
    %v3144 = vunpack.c.l.b16 %v3071
    %v3145 = vunpack.c.h.b16 %v3071
    %v3146 = vunpack.c.l.b16 %v3072
    %v3147 = vunpack.c.l.b16 %v3073
    %v3148 = vunpack.c.h.b16 %v3073
    %v3149 = vunpack.c.l.b16 %v3074
    %v3150 = vunpack.c.l.b16 %v3075
    %v3151 = vunpack.c.h.b16 %v3075
    %v3152 = vunpack.c.l.b16 %v3076
    %v3153 = vunpack.c.l.b16 %v3077
    %v3154 = vunpack.c.h.b16 %v3077
    %v3155 = vunpack.c.l.b16 %v3078
    %v3156 = vunpack.c.l.b16 %v3079
    %v3157 = vunpack.c.h.b16 %v3079
    %v3158 = vunpack.c.l.b16 %v3080
    %v3159 = vunpack.c.l.b16 %v3081
    %v3160 = vunpack.c.h.b16 %v3081
    %v3161 = vunpack.c.l.b16 %v3082
    %v3162 = vunpack.c.l.b16 %v3083
    %v3163 = vunpack.c.h.b16 %v3083
    %v3164 = vunpack.c.l.b16 %v3084
    %v3165 = vpack.c.b16 %v3120, %v3117
    %v3166 = vpack.c.b16 %v3121, %v3118
    %v3167 = vpack.c.b16 %v3122, %v3119
    %v3168 = vpack.c.b16 %v3126, %v3123
    %v3169 = vpack.c.b16 %v3127, %v3124
    %v3170 = vpack.c.b16 %v3128, %v3125
    %v3171 = vpack.c.b16 %v3132, %v3129
    %v3172 = vpack.c.b16 %v3133, %v3130
    %v3173 = vpack.c.b16 %v3134, %v3131
    %v3174 = vpack.c.b16 %v3138, %v3135
    %v3175 = vpack.c.b16 %v3139, %v3136
    %v3176 = vpack.c.b16 %v3140, %v3137
    %v3177 = vpack.c.b16 %v3144, %v3141
    %v3178 = vpack.c.b16 %v3145, %v3142
    %v3179 = vpack.c.b16 %v3146, %v3143
    %v3180 = vpack.c.b16 %v3150, %v3147
    %v3181 = vpack.c.b16 %v3151, %v3148
    %v3182 = vpack.c.b16 %v3152, %v3149
    %v3183 = vpack.c.b16 %v3156, %v3153
    %v3184 = vpack.c.b16 %v3157, %v3154
    %v3185 = vpack.c.b16 %v3158, %v3155
    %v3186 = vpack.c.b16 %v3162, %v3159
    %v3187 = vpack.c.b16 %v3163, %v3160
    %v3188 = vpack.c.b16 %v3164, %v3161
    %3213 = vmatprep.subr.bf16.mxu0 %v3166
    %3214 = vmatpush1.bf16.msra.mxu0 %v3165
    %3215 = vmatprep.subr.bf16.mxu0 %v3169
    %3216 = vmatpush1.bf16.msra.mxu0 %v3168
    %3217 = vmatprep.subr.bf16.mxu0 %v3172
    %3218 = vmatpush1.bf16.msra.mxu0 %v3171
    %3219 = vmatprep.subr.bf16.mxu0 %v3175
    %3220 = vmatpush1.bf16.msra.mxu0 %v3174
    %3221 = vmatprep.subr.bf16.mxu0 %v3178
    %3222 = vmatpush1.bf16.msra.mxu0 %v3177
    %3223 = vmatprep.subr.bf16.mxu0 %v3181
    %3224 = vmatpush1.bf16.msra.mxu0 %v3180
    %3225 = vmatprep.subr.bf16.mxu0 %v3184
    %3226 = vmatpush1.bf16.msra.mxu0 %v3183
    %3227 = vmatprep.subr.bf16.mxu0 %v3187
    %3228 = vmatpush1.bf16.msra.mxu0 %v3186
    %3229 = vmatprep.subr.bf16.mxu0 0
    %3230 = vmatpush1.bf16.msra.mxu0 0
    %3231 = vmatprep.subr.bf16.mxu0 0
    %3232 = vmatpush1.bf16.msra.mxu0 0
    %3233 = vmatprep.subr.bf16.mxu0 0
    %3234 = vmatpush1.bf16.msra.mxu0 0
    %3235 = vmatprep.subr.bf16.mxu0 0
    %3236 = vmatpush1.bf16.msra.mxu0 0
    %3237 = vmatprep.subr.bf16.mxu0 0
    %3238 = vmatpush1.bf16.msra.mxu0 0
    %3239 = vmatprep.subr.bf16.mxu0 0
    %3240 = vmatpush1.bf16.msra.mxu0 0
    %3241 = vmatprep.subr.bf16.mxu0 0
    %3242 = vmatpush1.bf16.msra.mxu0 0
    %3243 = vmatprep.subr.bf16.mxu0 0
    %3244 = vmatpush1.bf16.msra.mxu0 0
    %3245 = vmatprep.mubr.bf16.mxu0 0
    %3246 = vmatmul.mubr.bf16.gmra.mrb[0].mxu0 %v2585
    %v3247 = vpop.f32.mrb[0].mxu0
    %v3248 = vadd.f32 0.0, %v3247
    %v3249 = vpop.f32.mrb[0].mxu0
    %v3250 = vadd.f32 0.0, %v3249
    %v3251 = vpop.f32.mrb[0].mxu0
    %v3252 = vpop.f32.mrb[0].mxu0
    %3253 = vdwg.mxu0
    %3254 = vmatprep.subr.bf16.mxu0 0
    %3255 = vmatpush1.bf16.msra.mxu0 %v3167
    %3256 = vmatprep.subr.bf16.mxu0 0
    %3257 = vmatpush1.bf16.msra.mxu0 %v3170
    %3258 = vmatprep.subr.bf16.mxu0 0
    %3259 = vmatpush1.bf16.msra.mxu0 %v3173
    %3260 = vmatprep.subr.bf16.mxu0 0
    %3261 = vmatpush1.bf16.msra.mxu0 %v3176
    %3262 = vmatprep.subr.bf16.mxu0 0
    %3263 = vmatpush1.bf16.msra.mxu0 %v3179
    %3264 = vmatprep.subr.bf16.mxu0 0
    %3265 = vmatpush1.bf16.msra.mxu0 %v3182
    %3266 = vmatprep.subr.bf16.mxu0 0
    %3267 = vmatpush1.bf16.msra.mxu0 %v3185
    %3268 = vmatprep.subr.bf16.mxu0 0
    %3269 = vmatpush1.bf16.msra.mxu0 %v3188
    %3270 = vmatprep.subr.bf16.mxu0 0
    %3271 = vmatpush1.bf16.msra.mxu0 0
    %3272 = vmatprep.subr.bf16.mxu0 0
    %3273 = vmatpush1.bf16.msra.mxu0 0
    %3274 = vmatprep.subr.bf16.mxu0 0
    %3275 = vmatpush1.bf16.msra.mxu0 0
    %3276 = vmatprep.subr.bf16.mxu0 0
    %3277 = vmatpush1.bf16.msra.mxu0 0
    %3278 = vmatprep.subr.bf16.mxu0 0
    %3279 = vmatpush1.bf16.msra.mxu0 0
    %3280 = vmatprep.subr.bf16.mxu0 0
    %3281 = vmatpush1.bf16.msra.mxu0 0
    %3282 = vmatprep.subr.bf16.mxu0 0
    %3283 = vmatpush1.bf16.msra.mxu0 0
    %3284 = vmatprep.subr.bf16.mxu0 0
    %3285 = vmatpush1.bf16.msra.mxu0 0
    %3286 = vmatprep.mubr.bf16.mxu0 0
    %3287 = vmatmul.mubr.bf16.gmra.mrb[0].mxu0 %v2585
    %v3288 = vpop.f32.mrb[0].mxu0
    %v3289 = vadd.f32 0.0, %v3288
    %v3290 = vpop.f32.mrb[0].mxu0
    %v3291 = vpop.f32.mrb[0].mxu0
    %v3292 = vpop.f32.mrb[0].mxu0
    %3293 = vdwg.mxu0
    %v3294 = vadd.f32 %v3050, %v3248
    %v3295 = vadd.f32 %v3051, %v3250
    %v3296 = vxor.u32 %v3294, 2147483648
    %v3297 = vxor.u32 %v3295, 2147483648
    %v3298 = vmul.f32 %v3296, 1.442695
    %v3299 = vpow.pop %v3298
    %v3300 = vmul.f32 %v3297, 1.442695
    %v3301 = vpow.pop %v3300
    %v3302 = vadd.f32 %v3299, 1.0
    %v3303 = vadd.f32 %v3301, 1.0
    %v3304 = vrcp.pop %v3302
    %v3305 = vmul.f32 1.0, %v3304
    %v3306 = vrcp.pop %v3303
    %v3307 = vmul.f32 1.0, %v3306
    %v3308 = vadd.f32 %v3289, %v115
    %v3309 = vmul.f32 %v3305, %v3308
    %v3310 = vadd.f32 %v3052, %v3309
    %v3311 = vtanh.pop %v3310
    %v3312 = vsub.f32 1.0, %v3307
    %v3313 = vmul.f32 %v3312, %v3311
    %v3314 = vmul.f32 %v3307, %v2584
    %v3315 = vadd.f32 %v3313, %v3314
    %v3316 = vpack.c.bf16 %v3315, %v3315
    %v3317 = vpack.c.bf16 %v3046, %v3046
    %v3318 = vld [vmem:[%s4] sm:$0xff]
    %v3319 = vld [vmem:[%s4 + $0x8] sm:$0xff]
    %v3320 = vld [vmem:[%s4 + $0x10] sm:$0xff]
    %v3321 = vld [vmem:[%s4 + $0x18] sm:$0xff]
    %v3322 = vld [vmem:[%s4 + $0x20] sm:$0xff]
    %v3323 = vld [vmem:[%s4 + $0x28] sm:$0xff]
    %v3324 = vld [vmem:[%s4 + $0x30] sm:$0xff]
    %v3325 = vld [vmem:[%s4 + $0x38] sm:$0xff]
    %v3326 = vld [vmem:[%s4 + $0x40] sm:$0xff]
    %v3327 = vld [vmem:[%s4 + $0x48] sm:$0xff]
    %v3328 = vld [vmem:[%s4 + $0x50] sm:$0xff]
    %v3329 = vld [vmem:[%s4 + $0x58] sm:$0xff]
    %v3330 = vld [vmem:[%s4 + $0x60] sm:$0xff]
    %v3331 = vld [vmem:[%s4 + $0x68] sm:$0xff]
    %v3332 = vld [vmem:[%s4 + $0x70] sm:$0xff]
    %v3333 = vld [vmem:[%s4 + $0x78] sm:$0xff]
    %v3334 = vld [vmem:[%s4 + $0x80] sm:$0xff]
    %v3335 = vld [vmem:[%s4 + $0x88] sm:$0xff]
    %v3336 = vld [vmem:[%s4 + $0x90] sm:$0xff]
    %v3337 = vld [vmem:[%s4 + $0x98] sm:$0xff]
    %v3338 = vld [vmem:[%s4 + $0xa0] sm:$0xff]
    %v3339 = vld [vmem:[%s4 + $0xa8] sm:$0xff]
    %v3340 = vld [vmem:[%s4 + $0xb0] sm:$0xff]
    %v3341 = vld [vmem:[%s4 + $0xb8] sm:$0xff]
    %v3342 = vld [vmem:[%s4 + $0xc0] sm:$0xff]
    %v3343 = vld [vmem:[%s4 + $0xc8] sm:$0xff]
    %v3344 = vld [vmem:[%s4 + $0xd0] sm:$0xff]
    %v3345 = vld [vmem:[%s4 + $0xd8] sm:$0xff]
    %v3346 = vld [vmem:[%s4 + $0xe0] sm:$0xff]
    %v3347 = vld [vmem:[%s4 + $0xe8] sm:$0xff]
    %v3348 = vld [vmem:[%s4 + $0xf0] sm:$0xff]
    %v3349 = vld [vmem:[%s4 + $0xf8] sm:$0xff]
    %v3382 = vunpack.c.l.b16 %v3318
    %v3383 = vunpack.c.h.b16 %v3318
    %v3384 = vunpack.c.l.b16 %v3319
    %v3385 = vunpack.c.h.b16 %v3319
    %v3386 = vunpack.c.l.b16 %v3320
    %v3387 = vunpack.c.h.b16 %v3320
    %v3388 = vunpack.c.l.b16 %v3321
    %v3389 = vunpack.c.h.b16 %v3321
    %v3390 = vunpack.c.l.b16 %v3322
    %v3391 = vunpack.c.h.b16 %v3322
    %v3392 = vunpack.c.l.b16 %v3323
    %v3393 = vunpack.c.h.b16 %v3323
    %v3394 = vunpack.c.l.b16 %v3324
    %v3395 = vunpack.c.h.b16 %v3324
    %v3396 = vunpack.c.l.b16 %v3325
    %v3397 = vunpack.c.h.b16 %v3325
    %v3398 = vunpack.c.l.b16 %v3326
    %v3399 = vunpack.c.h.b16 %v3326
    %v3400 = vunpack.c.l.b16 %v3327
    %v3401 = vunpack.c.h.b16 %v3327
    %v3402 = vunpack.c.l.b16 %v3328
    %v3403 = vunpack.c.h.b16 %v3328
    %v3404 = vunpack.c.l.b16 %v3329
    %v3405 = vunpack.c.h.b16 %v3329
    %v3406 = vunpack.c.l.b16 %v3330
    %v3407 = vunpack.c.h.b16 %v3330
    %v3408 = vunpack.c.l.b16 %v3331
    %v3409 = vunpack.c.h.b16 %v3331
    %v3410 = vunpack.c.l.b16 %v3332
    %v3411 = vunpack.c.h.b16 %v3332
    %v3412 = vunpack.c.l.b16 %v3333
    %v3413 = vunpack.c.h.b16 %v3333
    %v3414 = vunpack.c.l.b16 %v3334
    %v3415 = vunpack.c.h.b16 %v3334
    %v3416 = vunpack.c.l.b16 %v3335
    %v3417 = vunpack.c.h.b16 %v3335
    %v3418 = vunpack.c.l.b16 %v3336
    %v3419 = vunpack.c.h.b16 %v3336
    %v3420 = vunpack.c.l.b16 %v3337
    %v3421 = vunpack.c.h.b16 %v3337
    %v3422 = vunpack.c.l.b16 %v3338
    %v3423 = vunpack.c.h.b16 %v3338
    %v3424 = vunpack.c.l.b16 %v3339
    %v3425 = vunpack.c.h.b16 %v3339
    %v3426 = vunpack.c.l.b16 %v3340
    %v3427 = vunpack.c.h.b16 %v3340
    %v3428 = vunpack.c.l.b16 %v3341
    %v3429 = vunpack.c.h.b16 %v3341
    %v3430 = vunpack.c.l.b16 %v3342
    %v3431 = vunpack.c.h.b16 %v3342
    %v3432 = vunpack.c.l.b16 %v3343
    %v3433 = vunpack.c.h.b16 %v3343
    %v3434 = vunpack.c.l.b16 %v3344
    %v3435 = vunpack.c.h.b16 %v3344
    %v3436 = vunpack.c.l.b16 %v3345
    %v3437 = vunpack.c.h.b16 %v3345
    %v3438 = vunpack.c.l.b16 %v3346
    %v3439 = vunpack.c.h.b16 %v3346
    %v3440 = vunpack.c.l.b16 %v3347
    %v3441 = vunpack.c.h.b16 %v3347
    %v3442 = vunpack.c.l.b16 %v3348
    %v3443 = vunpack.c.h.b16 %v3348
    %v3444 = vunpack.c.l.b16 %v3349
    %v3445 = vunpack.c.h.b16 %v3349
    %v3446 = vpack.c.b16 %v3384, %v3382
    %v3447 = vpack.c.b16 %v3385, %v3383
    %v3448 = vpack.c.b16 %v3388, %v3386
    %v3449 = vpack.c.b16 %v3389, %v3387
    %v3450 = vpack.c.b16 %v3392, %v3390
    %v3451 = vpack.c.b16 %v3393, %v3391
    %v3452 = vpack.c.b16 %v3396, %v3394
    %v3453 = vpack.c.b16 %v3397, %v3395
    %v3454 = vpack.c.b16 %v3400, %v3398
    %v3455 = vpack.c.b16 %v3401, %v3399
    %v3456 = vpack.c.b16 %v3404, %v3402
    %v3457 = vpack.c.b16 %v3405, %v3403
    %v3458 = vpack.c.b16 %v3408, %v3406
    %v3459 = vpack.c.b16 %v3409, %v3407
    %v3460 = vpack.c.b16 %v3412, %v3410
    %v3461 = vpack.c.b16 %v3413, %v3411
    %v3462 = vpack.c.b16 %v3416, %v3414
    %v3463 = vpack.c.b16 %v3417, %v3415
    %v3464 = vpack.c.b16 %v3420, %v3418
    %v3465 = vpack.c.b16 %v3421, %v3419
    %v3466 = vpack.c.b16 %v3424, %v3422
    %v3467 = vpack.c.b16 %v3425, %v3423
    %v3468 = vpack.c.b16 %v3428, %v3426
    %v3469 = vpack.c.b16 %v3429, %v3427
    %v3470 = vpack.c.b16 %v3432, %v3430
    %v3471 = vpack.c.b16 %v3433, %v3431
    %v3472 = vpack.c.b16 %v3436, %v3434
    %v3473 = vpack.c.b16 %v3437, %v3435
    %v3474 = vpack.c.b16 %v3440, %v3438
    %v3475 = vpack.c.b16 %v3441, %v3439
    %v3476 = vpack.c.b16 %v3444, %v3442
    %v3477 = vpack.c.b16 %v3445, %v3443
    %3510 = vmatprep.subr.bf16.mxu0 %v3447
    %3511 = vmatpush1.bf16.msra.mxu0 %v3446
    %3512 = vmatprep.subr.bf16.mxu0 %v3449
    %3513 = vmatpush1.bf16.msra.mxu0 %v3448
    %3514 = vmatprep.subr.bf16.mxu0 %v3451
    %3515 = vmatpush1.bf16.msra.mxu0 %v3450
    %3516 = vmatprep.subr.bf16.mxu0 %v3453
    %3517 = vmatpush1.bf16.msra.mxu0 %v3452
    %3518 = vmatprep.subr.bf16.mxu0 %v3455
    %3519 = vmatpush1.bf16.msra.mxu0 %v3454
    %3520 = vmatprep.subr.bf16.mxu0 %v3457
    %3521 = vmatpush1.bf16.msra.mxu0 %v3456
    %3522 = vmatprep.subr.bf16.mxu0 %v3459
    %3523 = vmatpush1.bf16.msra.mxu0 %v3458
    %3524 = vmatprep.subr.bf16.mxu0 %v3461
    %3525 = vmatpush1.bf16.msra.mxu0 %v3460
    %3526 = vmatprep.subr.bf16.mxu0 %v3463
    %3527 = vmatpush1.bf16.msra.mxu0 %v3462
    %3528 = vmatprep.subr.bf16.mxu0 %v3465
    %3529 = vmatpush1.bf16.msra.mxu0 %v3464
    %3530 = vmatprep.subr.bf16.mxu0 %v3467
    %3531 = vmatpush1.bf16.msra.mxu0 %v3466
    %3532 = vmatprep.subr.bf16.mxu0 %v3469
    %3533 = vmatpush1.bf16.msra.mxu0 %v3468
    %3534 = vmatprep.subr.bf16.mxu0 %v3471
    %3535 = vmatpush1.bf16.msra.mxu0 %v3470
    %3536 = vmatprep.subr.bf16.mxu0 %v3473
    %3537 = vmatpush1.bf16.msra.mxu0 %v3472
    %3538 = vmatprep.subr.bf16.mxu0 %v3475
    %3539 = vmatpush1.bf16.msra.mxu0 %v3474
    %3540 = vmatprep.subr.bf16.mxu0 %v3477
    %3541 = vmatpush1.bf16.msra.mxu0 %v3476
    %3542 = vmatprep.mubr.bf16.mxu0 %v3317
    %3543 = vmatmul.mubr.bf16.gmra.mrb[0].mxu0 %v3316
    %v3544 = vpop.f32.mrb[0].mxu0
    %v3545 = vadd.f32 %v96, %v3544
    %v3546 = vpop.f32.mrb[0].mxu0
    %v3547 = vadd.f32 %v100, %v3546
    %v3548 = vpop.f32.mrb[0].mxu0
    %v3549 = vpop.f32.mrb[0].mxu0
    %3550 = vdwg.mxu0
    %v3551 = vxor.u32 %v3545, 2147483648
    %v3552 = vxor.u32 %v3547, 2147483648
    %v3553 = vmul.f32 %v3551, 1.442695
    %v3554 = vpow.pop %v3553
    %v3555 = vmul.f32 %v3552, 1.442695
    %v3556 = vpow.pop %v3555
    %v3557 = vadd.f32 %v3554, 1.0
    %v3558 = vadd.f32 %v3556, 1.0
    %v3559 = vrcp.pop %v3557
    %v3560 = vmul.f32 1.0, %v3559
    %v3561 = vrcp.pop %v3558
    %v3562 = vmul.f32 1.0, %v3561
    %v3563 = vld [vmem:[#allocation4] sm:$0xf]
    %v3564 = vld [vmem:[#allocation4 + $0x4] sm:$0xf]
    %v3565 = vld [vmem:[#allocation4 + $0x8] sm:$0xf]
    %v3566 = vld [vmem:[#allocation4 + $0xc] sm:$0xf]
    %v3567 = vld [vmem:[#allocation4 + $0x10] sm:$0xf]
    %v3568 = vld [vmem:[#allocation4 + $0x14] sm:$0xf]
    %v3569 = vld [vmem:[#allocation4 + $0x18] sm:$0xf]
    %v3570 = vld [vmem:[#allocation4 + $0x1c] sm:$0xf]
    %v3571 = vld [vmem:[#allocation4 + $0x20] sm:$0xf]
    %v3572 = vld [vmem:[#allocation4 + $0x24] sm:$0xf]
    %v3573 = vld [vmem:[#allocation4 + $0x28] sm:$0xf]
    %v3574 = vld [vmem:[#allocation4 + $0x2c] sm:$0xf]
    %v3575 = vld [vmem:[#allocation4 + $0x30] sm:$0xf]
    %v3576 = vld [vmem:[#allocation4 + $0x34] sm:$0xf]
    %v3577 = vld [vmem:[#allocation4 + $0x38] sm:$0xf]
    %v3578 = vld [vmem:[#allocation4 + $0x3c] sm:$0xf]
    %v3595 = vunpack.c.l.b16 %v3563
    %v3596 = vunpack.c.l.b16 %v3564
    %v3597 = vunpack.c.l.b16 %v3565
    %v3598 = vunpack.c.l.b16 %v3566
    %v3599 = vunpack.c.l.b16 %v3567
    %v3600 = vunpack.c.l.b16 %v3568
    %v3601 = vunpack.c.l.b16 %v3569
    %v3602 = vunpack.c.l.b16 %v3570
    %v3603 = vunpack.c.l.b16 %v3571
    %v3604 = vunpack.c.l.b16 %v3572
    %v3605 = vunpack.c.l.b16 %v3573
    %v3606 = vunpack.c.l.b16 %v3574
    %v3607 = vunpack.c.l.b16 %v3575
    %v3608 = vunpack.c.l.b16 %v3576
    %v3609 = vunpack.c.l.b16 %v3577
    %v3610 = vunpack.c.l.b16 %v3578
    %v3611 = vpack.c.b16 %v3596, %v3595
    %v3612 = vpack.c.b16 %v3598, %v3597
    %v3613 = vpack.c.b16 %v3600, %v3599
    %v3614 = vpack.c.b16 %v3602, %v3601
    %v3615 = vpack.c.b16 %v3604, %v3603
    %v3616 = vpack.c.b16 %v3606, %v3605
    %v3617 = vpack.c.b16 %v3608, %v3607
    %v3618 = vpack.c.b16 %v3610, %v3609
    %3627 = vmatprep.subr.bf16.mxu0 0
    %3628 = vmatpush1.bf16.msra.mxu0 %v3611
    %3629 = vmatprep.subr.bf16.mxu0 0
    %3630 = vmatpush1.bf16.msra.mxu0 %v3612
    %3631 = vmatprep.subr.bf16.mxu0 0
    %3632 = vmatpush1.bf16.msra.mxu0 %v3613
    %3633 = vmatprep.subr.bf16.mxu0 0
    %3634 = vmatpush1.bf16.msra.mxu0 %v3614
    %3635 = vmatprep.subr.bf16.mxu0 0
    %3636 = vmatpush1.bf16.msra.mxu0 %v3615
    %3637 = vmatprep.subr.bf16.mxu0 0
    %3638 = vmatpush1.bf16.msra.mxu0 %v3616
    %3639 = vmatprep.subr.bf16.mxu0 0
    %3640 = vmatpush1.bf16.msra.mxu0 %v3617
    %3641 = vmatprep.subr.bf16.mxu0 0
    %3642 = vmatpush1.bf16.msra.mxu0 %v3618
    %3643 = vmatprep.subr.bf16.mxu0 0
    %3644 = vmatpush1.bf16.msra.mxu0 0
    %3645 = vmatprep.subr.bf16.mxu0 0
    %3646 = vmatpush1.bf16.msra.mxu0 0
    %3647 = vmatprep.subr.bf16.mxu0 0
    %3648 = vmatpush1.bf16.msra.mxu0 0
    %3649 = vmatprep.subr.bf16.mxu0 0
    %3650 = vmatpush1.bf16.msra.mxu0 0
    %3651 = vmatprep.subr.bf16.mxu0 0
    %3652 = vmatpush1.bf16.msra.mxu0 0
    %3653 = vmatprep.subr.bf16.mxu0 0
    %3654 = vmatpush1.bf16.msra.mxu0 0
    %3655 = vmatprep.subr.bf16.mxu0 0
    %3656 = vmatpush1.bf16.msra.mxu0 0
    %3657 = vmatprep.subr.bf16.mxu0 0
    %3658 = vmatpush1.bf16.msra.mxu0 0
    %3659 = vmatprep.mubr.bf16.mxu0 0
    %3660 = vmatmul.mubr.bf16.gmra.mrb[0].mxu0 %v3316
    %v3661 = vpop.f32.mrb[0].mxu0
    %v3662 = vadd.f32 %v108, %v3661
    %v3663 = vpop.f32.mrb[0].mxu0
    %v3664 = vpop.f32.mrb[0].mxu0
    %v3665 = vpop.f32.mrb[0].mxu0
    %3666 = vdwg.mxu0
    %v3667 = vld [vmem:[#allocation6] sm:$0xf]
    %v3668 = vld [vmem:[#allocation6 + $0x4] sm:$0xf]
    %v3669 = vld [vmem:[#allocation6 + $0x8] sm:$0xf]
    %v3670 = vld [vmem:[#allocation6 + $0xc] sm:$0xf]
    %v3671 = vld [vmem:[#allocation6 + $0x10] sm:$0xf]
    %v3672 = vld [vmem:[#allocation6 + $0x14] sm:$0xf]
    %v3673 = vld [vmem:[#allocation6 + $0x18] sm:$0xf]
    %v3674 = vld [vmem:[#allocation6 + $0x1c] sm:$0xf]
    %v3675 = vld [vmem:[#allocation6 + $0x20] sm:$0xf]
    %v3676 = vld [vmem:[#allocation6 + $0x24] sm:$0xf]
    %v3677 = vld [vmem:[#allocation6 + $0x28] sm:$0xf]
    %v3678 = vld [vmem:[#allocation6 + $0x2c] sm:$0xf]
    %v3679 = vld [vmem:[#allocation6 + $0x30] sm:$0xf]
    %v3680 = vld [vmem:[#allocation6 + $0x34] sm:$0xf]
    %v3681 = vld [vmem:[#allocation6 + $0x38] sm:$0xf]
    %v3682 = vld [vmem:[#allocation6 + $0x3c] sm:$0xf]
    %v3699 = vunpack.c.l.b16 %v3667
    %v3700 = vunpack.c.l.b16 %v3668
    %v3701 = vunpack.c.l.b16 %v3669
    %v3702 = vunpack.c.l.b16 %v3670
    %v3703 = vunpack.c.l.b16 %v3671
    %v3704 = vunpack.c.l.b16 %v3672
    %v3705 = vunpack.c.l.b16 %v3673
    %v3706 = vunpack.c.l.b16 %v3674
    %v3707 = vunpack.c.l.b16 %v3675
    %v3708 = vunpack.c.l.b16 %v3676
    %v3709 = vunpack.c.l.b16 %v3677
    %v3710 = vunpack.c.l.b16 %v3678
    %v3711 = vunpack.c.l.b16 %v3679
    %v3712 = vunpack.c.l.b16 %v3680
    %v3713 = vunpack.c.l.b16 %v3681
    %v3714 = vunpack.c.l.b16 %v3682
    %v3715 = vpack.c.b16 %v3700, %v3699
    %v3716 = vpack.c.b16 %v3702, %v3701
    %v3717 = vpack.c.b16 %v3704, %v3703
    %v3718 = vpack.c.b16 %v3706, %v3705
    %v3719 = vpack.c.b16 %v3708, %v3707
    %v3720 = vpack.c.b16 %v3710, %v3709
    %v3721 = vpack.c.b16 %v3712, %v3711
    %v3722 = vpack.c.b16 %v3714, %v3713
    %3731 = vmatprep.subr.bf16.mxu0 0
    %3732 = vmatpush1.bf16.msra.mxu0 %v3715
    %3733 = vmatprep.subr.bf16.mxu0 0
    %3734 = vmatpush1.bf16.msra.mxu0 %v3716
    %3735 = vmatprep.subr.bf16.mxu0 0
    %3736 = vmatpush1.bf16.msra.mxu0 %v3717
    %3737 = vmatprep.subr.bf16.mxu0 0
    %3738 = vmatpush1.bf16.msra.mxu0 %v3718
    %3739 = vmatprep.subr.bf16.mxu0 0
    %3740 = vmatpush1.bf16.msra.mxu0 %v3719
    %3741 = vmatprep.subr.bf16.mxu0 0
    %3742 = vmatpush1.bf16.msra.mxu0 %v3720
    %3743 = vmatprep.subr.bf16.mxu0 0
    %3744 = vmatpush1.bf16.msra.mxu0 %v3721
    %3745 = vmatprep.subr.bf16.mxu0 0
    %3746 = vmatpush1.bf16.msra.mxu0 %v3722
    %3747 = vmatprep.subr.bf16.mxu0 0
    %3748 = vmatpush1.bf16.msra.mxu0 0
    %3749 = vmatprep.subr.bf16.mxu0 0
    %3750 = vmatpush1.bf16.msra.mxu0 0
    %3751 = vmatprep.subr.bf16.mxu0 0
    %3752 = vmatpush1.bf16.msra.mxu0 0
    %3753 = vmatprep.subr.bf16.mxu0 0
    %3754 = vmatpush1.bf16.msra.mxu0 0
    %3755 = vmatprep.subr.bf16.mxu0 0
    %3756 = vmatpush1.bf16.msra.mxu0 0
    %3757 = vmatprep.subr.bf16.mxu0 0
    %3758 = vmatpush1.bf16.msra.mxu0 0
    %3759 = vmatprep.subr.bf16.mxu0 0
    %3760 = vmatpush1.bf16.msra.mxu0 0
    %3761 = vmatprep.subr.bf16.mxu0 0
    %3762 = vmatpush1.bf16.msra.mxu0 0
    %3763 = vmatprep.mubr.bf16.mxu0 0
    %3764 = vmatmul.mubr.bf16.gmra.mrb[0].mxu0 %v3317
    %v3765 = vpop.f32.mrb[0].mxu0
    %v3766 = vadd.f32 %v122, %v3765
    %v3767 = vpop.f32.mrb[0].mxu0
    %v3768 = vpop.f32.mrb[0].mxu0
    %v3769 = vpop.f32.mrb[0].mxu0
    %3770 = vdwg.mxu0
    %v3771 = vmul.f32 %v3560, %v3766
    %v3772 = vadd.f32 %v3662, %v3771
    %v3773 = vtanh.pop %v3772
    %v3774 = vsub.f32 1.0, %v3562
    %v3775 = vmul.f32 %v3774, %v3773
    %v3776 = vmul.f32 %v3562, %v3046
    %v3777 = vadd.f32 %v3775, %v3776
    %s3778 = scalar_lea.vmem %s11, 32
    %3779 = vst [vmem:[%s3778] sm:$0xff] %v3777
    %s3780 = scalar_lea.vmem %s0, 120
    %v3781 = vld [vmem:[%s3780] sm:$0xff]
    %v3782 = vld [vmem:[%s3780 + $0x8] sm:$0xff]
    %v3783 = vld [vmem:[%s3780 + $0x10] sm:$0xff]
    %v3784 = vld [vmem:[#allocation2] sm:$0xff]
    %v3785 = vld [vmem:[#allocation2 + $0x8] sm:$0xf]
    %v3786 = vld [vmem:[#allocation2 + $0xc] sm:$0xff]
    %v3787 = vld [vmem:[#allocation2 + $0x14] sm:$0xf]
    %v3788 = vld [vmem:[#allocation2 + $0x18] sm:$0xff]
    %v3789 = vld [vmem:[#allocation2 + $0x20] sm:$0xf]
    %v3790 = vld [vmem:[#allocation2 + $0x24] sm:$0xff]
    %v3791 = vld [vmem:[#allocation2 + $0x2c] sm:$0xf]
    %v3792 = vld [vmem:[#allocation2 + $0x30] sm:$0xff]
    %v3793 = vld [vmem:[#allocation2 + $0x38] sm:$0xf]
    %v3794 = vld [vmem:[#allocation2 + $0x3c] sm:$0xff]
    %v3795 = vld [vmem:[#allocation2 + $0x44] sm:$0xf]
    %v3796 = vld [vmem:[#allocation2 + $0x48] sm:$0xff]
    %v3797 = vld [vmem:[#allocation2 + $0x50] sm:$0xf]
    %v3798 = vld [vmem:[#allocation2 + $0x54] sm:$0xff]
    %v3799 = vld [vmem:[#allocation2 + $0x5c] sm:$0xf]
    %v3800 = vld [vmem:[#allocation2 + $0x60] sm:$0xff]
    %v3801 = vld [vmem:[#allocation2 + $0x68] sm:$0xf]
    %v3802 = vld [vmem:[#allocation2 + $0x6c] sm:$0xff]
    %v3803 = vld [vmem:[#allocation2 + $0x74] sm:$0xf]
    %v3804 = vld [vmem:[#allocation2 + $0x78] sm:$0xff]
    %v3805 = vld [vmem:[#allocation2 + $0x80] sm:$0xf]
    %v3806 = vld [vmem:[#allocation2 + $0x84] sm:$0xff]
    %v3807 = vld [vmem:[#allocation2 + $0x8c] sm:$0xf]
    %v3808 = vld [vmem:[#allocation2 + $0x90] sm:$0xff]
    %v3809 = vld [vmem:[#allocation2 + $0x98] sm:$0xf]
    %v3810 = vld [vmem:[#allocation2 + $0x9c] sm:$0xff]
    %v3811 = vld [vmem:[#allocation2 + $0xa4] sm:$0xf]
    %v3812 = vld [vmem:[#allocation2 + $0xa8] sm:$0xff]
    %v3813 = vld [vmem:[#allocation2 + $0xb0] sm:$0xf]
    %v3814 = vld [vmem:[#allocation2 + $0xb4] sm:$0xff]
    %v3815 = vld [vmem:[#allocation2 + $0xbc] sm:$0xf]
    %v3848 = vunpack.c.l.b16 %v3784
    %v3849 = vunpack.c.h.b16 %v3784
    %v3850 = vunpack.c.l.b16 %v3785
    %v3851 = vunpack.c.l.b16 %v3786
    %v3852 = vunpack.c.h.b16 %v3786
    %v3853 = vunpack.c.l.b16 %v3787
    %v3854 = vunpack.c.l.b16 %v3788
    %v3855 = vunpack.c.h.b16 %v3788
    %v3856 = vunpack.c.l.b16 %v3789
    %v3857 = vunpack.c.l.b16 %v3790
    %v3858 = vunpack.c.h.b16 %v3790
    %v3859 = vunpack.c.l.b16 %v3791
    %v3860 = vunpack.c.l.b16 %v3792
    %v3861 = vunpack.c.h.b16 %v3792
    %v3862 = vunpack.c.l.b16 %v3793
    %v3863 = vunpack.c.l.b16 %v3794
    %v3864 = vunpack.c.h.b16 %v3794
    %v3865 = vunpack.c.l.b16 %v3795
    %v3866 = vunpack.c.l.b16 %v3796
    %v3867 = vunpack.c.h.b16 %v3796
    %v3868 = vunpack.c.l.b16 %v3797
    %v3869 = vunpack.c.l.b16 %v3798
    %v3870 = vunpack.c.h.b16 %v3798
    %v3871 = vunpack.c.l.b16 %v3799
    %v3872 = vunpack.c.l.b16 %v3800
    %v3873 = vunpack.c.h.b16 %v3800
    %v3874 = vunpack.c.l.b16 %v3801
    %v3875 = vunpack.c.l.b16 %v3802
    %v3876 = vunpack.c.h.b16 %v3802
    %v3877 = vunpack.c.l.b16 %v3803
    %v3878 = vunpack.c.l.b16 %v3804
    %v3879 = vunpack.c.h.b16 %v3804
    %v3880 = vunpack.c.l.b16 %v3805
    %v3881 = vunpack.c.l.b16 %v3806
    %v3882 = vunpack.c.h.b16 %v3806
    %v3883 = vunpack.c.l.b16 %v3807
    %v3884 = vunpack.c.l.b16 %v3808
    %v3885 = vunpack.c.h.b16 %v3808
    %v3886 = vunpack.c.l.b16 %v3809
    %v3887 = vunpack.c.l.b16 %v3810
    %v3888 = vunpack.c.h.b16 %v3810
    %v3889 = vunpack.c.l.b16 %v3811
    %v3890 = vunpack.c.l.b16 %v3812
    %v3891 = vunpack.c.h.b16 %v3812
    %v3892 = vunpack.c.l.b16 %v3813
    %v3893 = vunpack.c.l.b16 %v3814
    %v3894 = vunpack.c.h.b16 %v3814
    %v3895 = vunpack.c.l.b16 %v3815
    %v3896 = vpack.c.b16 %v3851, %v3848
    %v3897 = vpack.c.b16 %v3852, %v3849
    %v3898 = vpack.c.b16 %v3853, %v3850
    %v3899 = vpack.c.b16 %v3857, %v3854
    %v3900 = vpack.c.b16 %v3858, %v3855
    %v3901 = vpack.c.b16 %v3859, %v3856
    %v3902 = vpack.c.b16 %v3863, %v3860
    %v3903 = vpack.c.b16 %v3864, %v3861
    %v3904 = vpack.c.b16 %v3865, %v3862
    %v3905 = vpack.c.b16 %v3869, %v3866
    %v3906 = vpack.c.b16 %v3870, %v3867
    %v3907 = vpack.c.b16 %v3871, %v3868
    %v3908 = vpack.c.b16 %v3875, %v3872
    %v3909 = vpack.c.b16 %v3876, %v3873
    %v3910 = vpack.c.b16 %v3877, %v3874
    %v3911 = vpack.c.b16 %v3881, %v3878
    %v3912 = vpack.c.b16 %v3882, %v3879
    %v3913 = vpack.c.b16 %v3883, %v3880
    %v3914 = vpack.c.b16 %v3887, %v3884
    %v3915 = vpack.c.b16 %v3888, %v3885
    %v3916 = vpack.c.b16 %v3889, %v3886
    %v3917 = vpack.c.b16 %v3893, %v3890
    %v3918 = vpack.c.b16 %v3894, %v3891
    %v3919 = vpack.c.b16 %v3895, %v3892
    %3944 = vmatprep.subr.bf16.mxu0 %v3897
    %3945 = vmatpush1.bf16.msra.mxu0 %v3896
    %3946 = vmatprep.subr.bf16.mxu0 %v3900
    %3947 = vmatpush1.bf16.msra.mxu0 %v3899
    %3948 = vmatprep.subr.bf16.mxu0 %v3903
    %3949 = vmatpush1.bf16.msra.mxu0 %v3902
    %3950 = vmatprep.subr.bf16.mxu0 %v3906
    %3951 = vmatpush1.bf16.msra.mxu0 %v3905
    %3952 = vmatprep.subr.bf16.mxu0 %v3909
    %3953 = vmatpush1.bf16.msra.mxu0 %v3908
    %3954 = vmatprep.subr.bf16.mxu0 %v3912
    %3955 = vmatpush1.bf16.msra.mxu0 %v3911
    %3956 = vmatprep.subr.bf16.mxu0 %v3915
    %3957 = vmatpush1.bf16.msra.mxu0 %v3914
    %3958 = vmatprep.subr.bf16.mxu0 %v3918
    %3959 = vmatpush1.bf16.msra.mxu0 %v3917
    %3960 = vmatprep.subr.bf16.mxu0 0
    %3961 = vmatpush1.bf16.msra.mxu0 0
    %3962 = vmatprep.subr.bf16.mxu0 0
    %3963 = vmatpush1.bf16.msra.mxu0 0
    %3964 = vmatprep.subr.bf16.mxu0 0
    %3965 = vmatpush1.bf16.msra.mxu0 0
    %3966 = vmatprep.subr.bf16.mxu0 0
    %3967 = vmatpush1.bf16.msra.mxu0 0
    %3968 = vmatprep.subr.bf16.mxu0 0
    %3969 = vmatpush1.bf16.msra.mxu0 0
    %3970 = vmatprep.subr.bf16.mxu0 0
    %3971 = vmatpush1.bf16.msra.mxu0 0
    %3972 = vmatprep.subr.bf16.mxu0 0
    %3973 = vmatpush1.bf16.msra.mxu0 0
    %3974 = vmatprep.subr.bf16.mxu0 0
    %3975 = vmatpush1.bf16.msra.mxu0 0
    %3976 = vmatprep.mubr.bf16.mxu0 0
    %3977 = vmatmul.mubr.bf16.gmra.mrb[0].mxu0 %v3316
    %v3978 = vpop.f32.mrb[0].mxu0
    %v3979 = vadd.f32 0.0, %v3978
    %v3980 = vpop.f32.mrb[0].mxu0
    %v3981 = vadd.f32 0.0, %v3980
    %v3982 = vpop.f32.mrb[0].mxu0
    %v3983 = vpop.f32.mrb[0].mxu0
    %3984 = vdwg.mxu0
    %3985 = vmatprep.subr.bf16.mxu0 0
    %3986 = vmatpush1.bf16.msra.mxu0 %v3898
    %3987 = vmatprep.subr.bf16.mxu0 0
    %3988 = vmatpush1.bf16.msra.mxu0 %v3901
    %3989 = vmatprep.subr.bf16.mxu0 0
    %3990 = vmatpush1.bf16.msra.mxu0 %v3904
    %3991 = vmatprep.subr.bf16.mxu0 0
    %3992 = vmatpush1.bf16.msra.mxu0 %v3907
    %3993 = vmatprep.subr.bf16.mxu0 0
    %3994 = vmatpush1.bf16.msra.mxu0 %v3910
    %3995 = vmatprep.subr.bf16.mxu0 0
    %3996 = vmatpush1.bf16.msra.mxu0 %v3913
    %3997 = vmatprep.subr.bf16.mxu0 0
    %3998 = vmatpush1.bf16.msra.mxu0 %v3916
    %3999 = vmatprep.subr.bf16.mxu0 0
    %4000 = vmatpush1.bf16.msra.mxu0 %v3919
    %4001 = vmatprep.subr.bf16.mxu0 0
    %4002 = vmatpush1.bf16.msra.mxu0 0
    %4003 = vmatprep.subr.bf16.mxu0 0
    %4004 = vmatpush1.bf16.msra.mxu0 0
    %4005 = vmatprep.subr.bf16.mxu0 0
    %4006 = vmatpush1.bf16.msra.mxu0 0
    %4007 = vmatprep.subr.bf16.mxu0 0
    %4008 = vmatpush1.bf16.msra.mxu0 0
    %4009 = vmatprep.subr.bf16.mxu0 0
    %4010 = vmatpush1.bf16.msra.mxu0 0
    %4011 = vmatprep.subr.bf16.mxu0 0
    %4012 = vmatpush1.bf16.msra.mxu0 0
    %4013 = vmatprep.subr.bf16.mxu0 0
    %4014 = vmatpush1.bf16.msra.mxu0 0
    %4015 = vmatprep.subr.bf16.mxu0 0
    %4016 = vmatpush1.bf16.msra.mxu0 0
    %4017 = vmatprep.mubr.bf16.mxu0 0
    %4018 = vmatmul.mubr.bf16.gmra.mrb[0].mxu0 %v3316
    %v4019 = vpop.f32.mrb[0].mxu0
    %v4020 = vadd.f32 0.0, %v4019
    %v4021 = vpop.f32.mrb[0].mxu0
    %v4022 = vpop.f32.mrb[0].mxu0
    %v4023 = vpop.f32.mrb[0].mxu0
    %4024 = vdwg.mxu0
    %v4025 = vadd.f32 %v3781, %v3979
    %v4026 = vadd.f32 %v3782, %v3981
    %v4027 = vxor.u32 %v4025, 2147483648
    %v4028 = vxor.u32 %v4026, 2147483648
    %v4029 = vmul.f32 %v4027, 1.442695
    %v4030 = vpow.pop %v4029
    %v4031 = vmul.f32 %v4028, 1.442695
    %v4032 = vpow.pop %v4031
    %v4033 = vadd.f32 %v4030, 1.0
    %v4034 = vadd.f32 %v4032, 1.0
    %v4035 = vrcp.pop %v4033
    %v4036 = vmul.f32 1.0, %v4035
    %v4037 = vrcp.pop %v4034
    %v4038 = vmul.f32 1.0, %v4037
    %v4039 = vadd.f32 %v4020, %v115
    %v4040 = vmul.f32 %v4036, %v4039
    %v4041 = vadd.f32 %v3783, %v4040
    %v4042 = vtanh.pop %v4041
    %v4043 = vsub.f32 1.0, %v4038
    %v4044 = vmul.f32 %v4043, %v4042
    %v4045 = vmul.f32 %v4038, %v3315
    %v4046 = vadd.f32 %v4044, %v4045
    %v4047 = vpack.c.bf16 %v4046, %v4046
    %v4048 = vpack.c.bf16 %v3777, %v3777
    %v4049 = vld [vmem:[%s4] sm:$0xff]
    %v4050 = vld [vmem:[%s4 + $0x8] sm:$0xff]
    %v4051 = vld [vmem:[%s4 + $0x10] sm:$0xff]
    %v4052 = vld [vmem:[%s4 + $0x18] sm:$0xff]
    %v4053 = vld [vmem:[%s4 + $0x20] sm:$0xff]
    %v4054 = vld [vmem:[%s4 + $0x28] sm:$0xff]
    %v4055 = vld [vmem:[%s4 + $0x30] sm:$0xff]
    %v4056 = vld [vmem:[%s4 + $0x38] sm:$0xff]
    %v4057 = vld [vmem:[%s4 + $0x40] sm:$0xff]
    %v4058 = vld [vmem:[%s4 + $0x48] sm:$0xff]
    %v4059 = vld [vmem:[%s4 + $0x50] sm:$0xff]
    %v4060 = vld [vmem:[%s4 + $0x58] sm:$0xff]
    %v4061 = vld [vmem:[%s4 + $0x60] sm:$0xff]
    %v4062 = vld [vmem:[%s4 + $0x68] sm:$0xff]
    %v4063 = vld [vmem:[%s4 + $0x70] sm:$0xff]
    %v4064 = vld [vmem:[%s4 + $0x78] sm:$0xff]
    %v4065 = vld [vmem:[%s4 + $0x80] sm:$0xff]
    %v4066 = vld [vmem:[%s4 + $0x88] sm:$0xff]
    %v4067 = vld [vmem:[%s4 + $0x90] sm:$0xff]
    %v4068 = vld [vmem:[%s4 + $0x98] sm:$0xff]
    %v4069 = vld [vmem:[%s4 + $0xa0] sm:$0xff]
    %v4070 = vld [vmem:[%s4 + $0xa8] sm:$0xff]
    %v4071 = vld [vmem:[%s4 + $0xb0] sm:$0xff]
    %v4072 = vld [vmem:[%s4 + $0xb8] sm:$0xff]
    %v4073 = vld [vmem:[%s4 + $0xc0] sm:$0xff]
    %v4074 = vld [vmem:[%s4 + $0xc8] sm:$0xff]
    %v4075 = vld [vmem:[%s4 + $0xd0] sm:$0xff]
    %v4076 = vld [vmem:[%s4 + $0xd8] sm:$0xff]
    %v4077 = vld [vmem:[%s4 + $0xe0] sm:$0xff]
    %v4078 = vld [vmem:[%s4 + $0xe8] sm:$0xff]
    %v4079 = vld [vmem:[%s4 + $0xf0] sm:$0xff]
    %v4080 = vld [vmem:[%s4 + $0xf8] sm:$0xff]
    %v4113 = vunpack.c.l.b16 %v4049
    %v4114 = vunpack.c.h.b16 %v4049
    %v4115 = vunpack.c.l.b16 %v4050
    %v4116 = vunpack.c.h.b16 %v4050
    %v4117 = vunpack.c.l.b16 %v4051
    %v4118 = vunpack.c.h.b16 %v4051
    %v4119 = vunpack.c.l.b16 %v4052
    %v4120 = vunpack.c.h.b16 %v4052
    %v4121 = vunpack.c.l.b16 %v4053
    %v4122 = vunpack.c.h.b16 %v4053
    %v4123 = vunpack.c.l.b16 %v4054
    %v4124 = vunpack.c.h.b16 %v4054
    %v4125 = vunpack.c.l.b16 %v4055
    %v4126 = vunpack.c.h.b16 %v4055
    %v4127 = vunpack.c.l.b16 %v4056
    %v4128 = vunpack.c.h.b16 %v4056
    %v4129 = vunpack.c.l.b16 %v4057
    %v4130 = vunpack.c.h.b16 %v4057
    %v4131 = vunpack.c.l.b16 %v4058
    %v4132 = vunpack.c.h.b16 %v4058
    %v4133 = vunpack.c.l.b16 %v4059
    %v4134 = vunpack.c.h.b16 %v4059
    %v4135 = vunpack.c.l.b16 %v4060
    %v4136 = vunpack.c.h.b16 %v4060
    %v4137 = vunpack.c.l.b16 %v4061
    %v4138 = vunpack.c.h.b16 %v4061
    %v4139 = vunpack.c.l.b16 %v4062
    %v4140 = vunpack.c.h.b16 %v4062
    %v4141 = vunpack.c.l.b16 %v4063
    %v4142 = vunpack.c.h.b16 %v4063
    %v4143 = vunpack.c.l.b16 %v4064
    %v4144 = vunpack.c.h.b16 %v4064
    %v4145 = vunpack.c.l.b16 %v4065
    %v4146 = vunpack.c.h.b16 %v4065
    %v4147 = vunpack.c.l.b16 %v4066
    %v4148 = vunpack.c.h.b16 %v4066
    %v4149 = vunpack.c.l.b16 %v4067
    %v4150 = vunpack.c.h.b16 %v4067
    %v4151 = vunpack.c.l.b16 %v4068
    %v4152 = vunpack.c.h.b16 %v4068
    %v4153 = vunpack.c.l.b16 %v4069
    %v4154 = vunpack.c.h.b16 %v4069
    %v4155 = vunpack.c.l.b16 %v4070
    %v4156 = vunpack.c.h.b16 %v4070
    %v4157 = vunpack.c.l.b16 %v4071
    %v4158 = vunpack.c.h.b16 %v4071
    %v4159 = vunpack.c.l.b16 %v4072
    %v4160 = vunpack.c.h.b16 %v4072
    %v4161 = vunpack.c.l.b16 %v4073
    %v4162 = vunpack.c.h.b16 %v4073
    %v4163 = vunpack.c.l.b16 %v4074
    %v4164 = vunpack.c.h.b16 %v4074
    %v4165 = vunpack.c.l.b16 %v4075
    %v4166 = vunpack.c.h.b16 %v4075
    %v4167 = vunpack.c.l.b16 %v4076
    %v4168 = vunpack.c.h.b16 %v4076
    %v4169 = vunpack.c.l.b16 %v4077
    %v4170 = vunpack.c.h.b16 %v4077
    %v4171 = vunpack.c.l.b16 %v4078
    %v4172 = vunpack.c.h.b16 %v4078
    %v4173 = vunpack.c.l.b16 %v4079
    %v4174 = vunpack.c.h.b16 %v4079
    %v4175 = vunpack.c.l.b16 %v4080
    %v4176 = vunpack.c.h.b16 %v4080
    %v4177 = vpack.c.b16 %v4115, %v4113
    %v4178 = vpack.c.b16 %v4116, %v4114
    %v4179 = vpack.c.b16 %v4119, %v4117
    %v4180 = vpack.c.b16 %v4120, %v4118
    %v4181 = vpack.c.b16 %v4123, %v4121
    %v4182 = vpack.c.b16 %v4124, %v4122
    %v4183 = vpack.c.b16 %v4127, %v4125
    %v4184 = vpack.c.b16 %v4128, %v4126
    %v4185 = vpack.c.b16 %v4131, %v4129
    %v4186 = vpack.c.b16 %v4132, %v4130
    %v4187 = vpack.c.b16 %v4135, %v4133
    %v4188 = vpack.c.b16 %v4136, %v4134
    %v4189 = vpack.c.b16 %v4139, %v4137
    %v4190 = vpack.c.b16 %v4140, %v4138
    %v4191 = vpack.c.b16 %v4143, %v4141
    %v4192 = vpack.c.b16 %v4144, %v4142
    %v4193 = vpack.c.b16 %v4147, %v4145
    %v4194 = vpack.c.b16 %v4148, %v4146
    %v4195 = vpack.c.b16 %v4151, %v4149
    %v4196 = vpack.c.b16 %v4152, %v4150
    %v4197 = vpack.c.b16 %v4155, %v4153
    %v4198 = vpack.c.b16 %v4156, %v4154
    %v4199 = vpack.c.b16 %v4159, %v4157
    %v4200 = vpack.c.b16 %v4160, %v4158
    %v4201 = vpack.c.b16 %v4163, %v4161
    %v4202 = vpack.c.b16 %v4164, %v4162
    %v4203 = vpack.c.b16 %v4167, %v4165
    %v4204 = vpack.c.b16 %v4168, %v4166
    %v4205 = vpack.c.b16 %v4171, %v4169
    %v4206 = vpack.c.b16 %v4172, %v4170
    %v4207 = vpack.c.b16 %v4175, %v4173
    %v4208 = vpack.c.b16 %v4176, %v4174
    %4241 = vmatprep.subr.bf16.mxu0 %v4178
    %4242 = vmatpush1.bf16.msra.mxu0 %v4177
    %4243 = vmatprep.subr.bf16.mxu0 %v4180
    %4244 = vmatpush1.bf16.msra.mxu0 %v4179
    %4245 = vmatprep.subr.bf16.mxu0 %v4182
    %4246 = vmatpush1.bf16.msra.mxu0 %v4181
    %4247 = vmatprep.subr.bf16.mxu0 %v4184
    %4248 = vmatpush1.bf16.msra.mxu0 %v4183
    %4249 = vmatprep.subr.bf16.mxu0 %v4186
    %4250 = vmatpush1.bf16.msra.mxu0 %v4185
    %4251 = vmatprep.subr.bf16.mxu0 %v4188
    %4252 = vmatpush1.bf16.msra.mxu0 %v4187
    %4253 = vmatprep.subr.bf16.mxu0 %v4190
    %4254 = vmatpush1.bf16.msra.mxu0 %v4189
    %4255 = vmatprep.subr.bf16.mxu0 %v4192
    %4256 = vmatpush1.bf16.msra.mxu0 %v4191
    %4257 = vmatprep.subr.bf16.mxu0 %v4194
    %4258 = vmatpush1.bf16.msra.mxu0 %v4193
    %4259 = vmatprep.subr.bf16.mxu0 %v4196
    %4260 = vmatpush1.bf16.msra.mxu0 %v4195
    %4261 = vmatprep.subr.bf16.mxu0 %v4198
    %4262 = vmatpush1.bf16.msra.mxu0 %v4197
    %4263 = vmatprep.subr.bf16.mxu0 %v4200
    %4264 = vmatpush1.bf16.msra.mxu0 %v4199
    %4265 = vmatprep.subr.bf16.mxu0 %v4202
    %4266 = vmatpush1.bf16.msra.mxu0 %v4201
    %4267 = vmatprep.subr.bf16.mxu0 %v4204
    %4268 = vmatpush1.bf16.msra.mxu0 %v4203
    %4269 = vmatprep.subr.bf16.mxu0 %v4206
    %4270 = vmatpush1.bf16.msra.mxu0 %v4205
    %4271 = vmatprep.subr.bf16.mxu0 %v4208
    %4272 = vmatpush1.bf16.msra.mxu0 %v4207
    %4273 = vmatprep.mubr.bf16.mxu0 %v4048
    %4274 = vmatmul.mubr.bf16.gmra.mrb[0].mxu0 %v4047
    %v4275 = vpop.f32.mrb[0].mxu0
    %v4276 = vadd.f32 %v96, %v4275
    %v4277 = vpop.f32.mrb[0].mxu0
    %v4278 = vadd.f32 %v100, %v4277
    %v4279 = vpop.f32.mrb[0].mxu0
    %v4280 = vpop.f32.mrb[0].mxu0
    %4281 = vdwg.mxu0
    %v4282 = vxor.u32 %v4276, 2147483648
    %v4283 = vxor.u32 %v4278, 2147483648
    %v4284 = vmul.f32 %v4282, 1.442695
    %v4285 = vpow.pop %v4284
    %v4286 = vmul.f32 %v4283, 1.442695
    %v4287 = vpow.pop %v4286
    %v4288 = vadd.f32 %v4285, 1.0
    %v4289 = vadd.f32 %v4287, 1.0
    %v4290 = vrcp.pop %v4288
    %v4291 = vmul.f32 1.0, %v4290
    %v4292 = vrcp.pop %v4289
    %v4293 = vmul.f32 1.0, %v4292
    %v4294 = vld [vmem:[#allocation4] sm:$0xf]
    %v4295 = vld [vmem:[#allocation4 + $0x4] sm:$0xf]
    %v4296 = vld [vmem:[#allocation4 + $0x8] sm:$0xf]
    %v4297 = vld [vmem:[#allocation4 + $0xc] sm:$0xf]
    %v4298 = vld [vmem:[#allocation4 + $0x10] sm:$0xf]
    %v4299 = vld [vmem:[#allocation4 + $0x14] sm:$0xf]
    %v4300 = vld [vmem:[#allocation4 + $0x18] sm:$0xf]
    %v4301 = vld [vmem:[#allocation4 + $0x1c] sm:$0xf]
    %v4302 = vld [vmem:[#allocation4 + $0x20] sm:$0xf]
    %v4303 = vld [vmem:[#allocation4 + $0x24] sm:$0xf]
    %v4304 = vld [vmem:[#allocation4 + $0x28] sm:$0xf]
    %v4305 = vld [vmem:[#allocation4 + $0x2c] sm:$0xf]
    %v4306 = vld [vmem:[#allocation4 + $0x30] sm:$0xf]
    %v4307 = vld [vmem:[#allocation4 + $0x34] sm:$0xf]
    %v4308 = vld [vmem:[#allocation4 + $0x38] sm:$0xf]
    %v4309 = vld [vmem:[#allocation4 + $0x3c] sm:$0xf]
    %v4326 = vunpack.c.l.b16 %v4294
    %v4327 = vunpack.c.l.b16 %v4295
    %v4328 = vunpack.c.l.b16 %v4296
    %v4329 = vunpack.c.l.b16 %v4297
    %v4330 = vunpack.c.l.b16 %v4298
    %v4331 = vunpack.c.l.b16 %v4299
    %v4332 = vunpack.c.l.b16 %v4300
    %v4333 = vunpack.c.l.b16 %v4301
    %v4334 = vunpack.c.l.b16 %v4302
    %v4335 = vunpack.c.l.b16 %v4303
    %v4336 = vunpack.c.l.b16 %v4304
    %v4337 = vunpack.c.l.b16 %v4305
    %v4338 = vunpack.c.l.b16 %v4306
    %v4339 = vunpack.c.l.b16 %v4307
    %v4340 = vunpack.c.l.b16 %v4308
    %v4341 = vunpack.c.l.b16 %v4309
    %v4342 = vpack.c.b16 %v4327, %v4326
    %v4343 = vpack.c.b16 %v4329, %v4328
    %v4344 = vpack.c.b16 %v4331, %v4330
    %v4345 = vpack.c.b16 %v4333, %v4332
    %v4346 = vpack.c.b16 %v4335, %v4334
    %v4347 = vpack.c.b16 %v4337, %v4336
    %v4348 = vpack.c.b16 %v4339, %v4338
    %v4349 = vpack.c.b16 %v4341, %v4340
    %4358 = vmatprep.subr.bf16.mxu0 0
    %4359 = vmatpush1.bf16.msra.mxu0 %v4342
    %4360 = vmatprep.subr.bf16.mxu0 0
    %4361 = vmatpush1.bf16.msra.mxu0 %v4343
    %4362 = vmatprep.subr.bf16.mxu0 0
    %4363 = vmatpush1.bf16.msra.mxu0 %v4344
    %4364 = vmatprep.subr.bf16.mxu0 0
    %4365 = vmatpush1.bf16.msra.mxu0 %v4345
    %4366 = vmatprep.subr.bf16.mxu0 0
    %4367 = vmatpush1.bf16.msra.mxu0 %v4346
    %4368 = vmatprep.subr.bf16.mxu0 0
    %4369 = vmatpush1.bf16.msra.mxu0 %v4347
    %4370 = vmatprep.subr.bf16.mxu0 0
    %4371 = vmatpush1.bf16.msra.mxu0 %v4348
    %4372 = vmatprep.subr.bf16.mxu0 0
    %4373 = vmatpush1.bf16.msra.mxu0 %v4349
    %4374 = vmatprep.subr.bf16.mxu0 0
    %4375 = vmatpush1.bf16.msra.mxu0 0
    %4376 = vmatprep.subr.bf16.mxu0 0
    %4377 = vmatpush1.bf16.msra.mxu0 0
    %4378 = vmatprep.subr.bf16.mxu0 0
    %4379 = vmatpush1.bf16.msra.mxu0 0
    %4380 = vmatprep.subr.bf16.mxu0 0
    %4381 = vmatpush1.bf16.msra.mxu0 0
    %4382 = vmatprep.subr.bf16.mxu0 0
    %4383 = vmatpush1.bf16.msra.mxu0 0
    %4384 = vmatprep.subr.bf16.mxu0 0
    %4385 = vmatpush1.bf16.msra.mxu0 0
    %4386 = vmatprep.subr.bf16.mxu0 0
    %4387 = vmatpush1.bf16.msra.mxu0 0
    %4388 = vmatprep.subr.bf16.mxu0 0
    %4389 = vmatpush1.bf16.msra.mxu0 0
    %4390 = vmatprep.mubr.bf16.mxu0 0
    %4391 = vmatmul.mubr.bf16.gmra.mrb[0].mxu0 %v4047
    %v4392 = vpop.f32.mrb[0].mxu0
    %v4393 = vadd.f32 %v108, %v4392
    %v4394 = vpop.f32.mrb[0].mxu0
    %v4395 = vpop.f32.mrb[0].mxu0
    %v4396 = vpop.f32.mrb[0].mxu0
    %4397 = vdwg.mxu0
    %v4398 = vld [vmem:[#allocation6] sm:$0xf]
    %v4399 = vld [vmem:[#allocation6 + $0x4] sm:$0xf]
    %v4400 = vld [vmem:[#allocation6 + $0x8] sm:$0xf]
    %v4401 = vld [vmem:[#allocation6 + $0xc] sm:$0xf]
    %v4402 = vld [vmem:[#allocation6 + $0x10] sm:$0xf]
    %v4403 = vld [vmem:[#allocation6 + $0x14] sm:$0xf]
    %v4404 = vld [vmem:[#allocation6 + $0x18] sm:$0xf]
    %v4405 = vld [vmem:[#allocation6 + $0x1c] sm:$0xf]
    %v4406 = vld [vmem:[#allocation6 + $0x20] sm:$0xf]
    %v4407 = vld [vmem:[#allocation6 + $0x24] sm:$0xf]
    %v4408 = vld [vmem:[#allocation6 + $0x28] sm:$0xf]
    %v4409 = vld [vmem:[#allocation6 + $0x2c] sm:$0xf]
    %v4410 = vld [vmem:[#allocation6 + $0x30] sm:$0xf]
    %v4411 = vld [vmem:[#allocation6 + $0x34] sm:$0xf]
    %v4412 = vld [vmem:[#allocation6 + $0x38] sm:$0xf]
    %v4413 = vld [vmem:[#allocation6 + $0x3c] sm:$0xf]
    %v4430 = vunpack.c.l.b16 %v4398
    %v4431 = vunpack.c.l.b16 %v4399
    %v4432 = vunpack.c.l.b16 %v4400
    %v4433 = vunpack.c.l.b16 %v4401
    %v4434 = vunpack.c.l.b16 %v4402
    %v4435 = vunpack.c.l.b16 %v4403
    %v4436 = vunpack.c.l.b16 %v4404
    %v4437 = vunpack.c.l.b16 %v4405
    %v4438 = vunpack.c.l.b16 %v4406
    %v4439 = vunpack.c.l.b16 %v4407
    %v4440 = vunpack.c.l.b16 %v4408
    %v4441 = vunpack.c.l.b16 %v4409
    %v4442 = vunpack.c.l.b16 %v4410
    %v4443 = vunpack.c.l.b16 %v4411
    %v4444 = vunpack.c.l.b16 %v4412
    %v4445 = vunpack.c.l.b16 %v4413
    %v4446 = vpack.c.b16 %v4431, %v4430
    %v4447 = vpack.c.b16 %v4433, %v4432
    %v4448 = vpack.c.b16 %v4435, %v4434
    %v4449 = vpack.c.b16 %v4437, %v4436
    %v4450 = vpack.c.b16 %v4439, %v4438
    %v4451 = vpack.c.b16 %v4441, %v4440
    %v4452 = vpack.c.b16 %v4443, %v4442
    %v4453 = vpack.c.b16 %v4445, %v4444
    %4462 = vmatprep.subr.bf16.mxu0 0
    %4463 = vmatpush1.bf16.msra.mxu0 %v4446
    %4464 = vmatprep.subr.bf16.mxu0 0
    %4465 = vmatpush1.bf16.msra.mxu0 %v4447
    %4466 = vmatprep.subr.bf16.mxu0 0
    %4467 = vmatpush1.bf16.msra.mxu0 %v4448
    %4468 = vmatprep.subr.bf16.mxu0 0
    %4469 = vmatpush1.bf16.msra.mxu0 %v4449
    %4470 = vmatprep.subr.bf16.mxu0 0
    %4471 = vmatpush1.bf16.msra.mxu0 %v4450
    %4472 = vmatprep.subr.bf16.mxu0 0
    %4473 = vmatpush1.bf16.msra.mxu0 %v4451
    %4474 = vmatprep.subr.bf16.mxu0 0
    %4475 = vmatpush1.bf16.msra.mxu0 %v4452
    %4476 = vmatprep.subr.bf16.mxu0 0
    %4477 = vmatpush1.bf16.msra.mxu0 %v4453
    %4478 = vmatprep.subr.bf16.mxu0 0
    %4479 = vmatpush1.bf16.msra.mxu0 0
    %4480 = vmatprep.subr.bf16.mxu0 0
    %4481 = vmatpush1.bf16.msra.mxu0 0
    %4482 = vmatprep.subr.bf16.mxu0 0
    %4483 = vmatpush1.bf16.msra.mxu0 0
    %4484 = vmatprep.subr.bf16.mxu0 0
    %4485 = vmatpush1.bf16.msra.mxu0 0
    %4486 = vmatprep.subr.bf16.mxu0 0
    %4487 = vmatpush1.bf16.msra.mxu0 0
    %4488 = vmatprep.subr.bf16.mxu0 0
    %4489 = vmatpush1.bf16.msra.mxu0 0
    %4490 = vmatprep.subr.bf16.mxu0 0
    %4491 = vmatpush1.bf16.msra.mxu0 0
    %4492 = vmatprep.subr.bf16.mxu0 0
    %4493 = vmatpush1.bf16.msra.mxu0 0
    %4494 = vmatprep.mubr.bf16.mxu0 0
    %4495 = vmatmul.mubr.bf16.gmra.mrb[0].mxu0 %v4048
    %v4496 = vpop.f32.mrb[0].mxu0
    %v4497 = vadd.f32 %v122, %v4496
    %v4498 = vpop.f32.mrb[0].mxu0
    %v4499 = vpop.f32.mrb[0].mxu0
    %v4500 = vpop.f32.mrb[0].mxu0
    %4501 = vdwg.mxu0
    %v4502 = vmul.f32 %v4291, %v4497
    %v4503 = vadd.f32 %v4393, %v4502
    %v4504 = vtanh.pop %v4503
    %v4505 = vsub.f32 1.0, %v4293
    %v4506 = vmul.f32 %v4505, %v4504
    %v4507 = vmul.f32 %v4293, %v3777
    %v4508 = vadd.f32 %v4506, %v4507
    %s4509 = scalar_lea.vmem %s11, 40
    %4510 = vst [vmem:[%s4509] sm:$0xff] %v4508
    %s4511 = scalar_lea.vmem %s0, 144
    %v4512 = vld [vmem:[%s4511] sm:$0xff]
    %v4513 = vld [vmem:[%s4511 + $0x8] sm:$0xff]
    %v4514 = vld [vmem:[%s4511 + $0x10] sm:$0xff]
    %v4515 = vld [vmem:[#allocation2] sm:$0xff]
    %v4516 = vld [vmem:[#allocation2 + $0x8] sm:$0xf]
    %v4517 = vld [vmem:[#allocation2 + $0xc] sm:$0xff]
    %v4518 = vld [vmem:[#allocation2 + $0x14] sm:$0xf]
    %v4519 = vld [vmem:[#allocation2 + $0x18] sm:$0xff]
    %v4520 = vld [vmem:[#allocation2 + $0x20] sm:$0xf]
    %v4521 = vld [vmem:[#allocation2 + $0x24] sm:$0xff]
    %v4522 = vld [vmem:[#allocation2 + $0x2c] sm:$0xf]
    %v4523 = vld [vmem:[#allocation2 + $0x30] sm:$0xff]
    %v4524 = vld [vmem:[#allocation2 + $0x38] sm:$0xf]
    %v4525 = vld [vmem:[#allocation2 + $0x3c] sm:$0xff]
    %v4526 = vld [vmem:[#allocation2 + $0x44] sm:$0xf]
    %v4527 = vld [vmem:[#allocation2 + $0x48] sm:$0xff]
    %v4528 = vld [vmem:[#allocation2 + $0x50] sm:$0xf]
    %v4529 = vld [vmem:[#allocation2 + $0x54] sm:$0xff]
    %v4530 = vld [vmem:[#allocation2 + $0x5c] sm:$0xf]
    %v4531 = vld [vmem:[#allocation2 + $0x60] sm:$0xff]
    %v4532 = vld [vmem:[#allocation2 + $0x68] sm:$0xf]
    %v4533 = vld [vmem:[#allocation2 + $0x6c] sm:$0xff]
    %v4534 = vld [vmem:[#allocation2 + $0x74] sm:$0xf]
    %v4535 = vld [vmem:[#allocation2 + $0x78] sm:$0xff]
    %v4536 = vld [vmem:[#allocation2 + $0x80] sm:$0xf]
    %v4537 = vld [vmem:[#allocation2 + $0x84] sm:$0xff]
    %v4538 = vld [vmem:[#allocation2 + $0x8c] sm:$0xf]
    %v4539 = vld [vmem:[#allocation2 + $0x90] sm:$0xff]
    %v4540 = vld [vmem:[#allocation2 + $0x98] sm:$0xf]
    %v4541 = vld [vmem:[#allocation2 + $0x9c] sm:$0xff]
    %v4542 = vld [vmem:[#allocation2 + $0xa4] sm:$0xf]
    %v4543 = vld [vmem:[#allocation2 + $0xa8] sm:$0xff]
    %v4544 = vld [vmem:[#allocation2 + $0xb0] sm:$0xf]
    %v4545 = vld [vmem:[#allocation2 + $0xb4] sm:$0xff]
    %v4546 = vld [vmem:[#allocation2 + $0xbc] sm:$0xf]
    %v4579 = vunpack.c.l.b16 %v4515
    %v4580 = vunpack.c.h.b16 %v4515
    %v4581 = vunpack.c.l.b16 %v4516
    %v4582 = vunpack.c.l.b16 %v4517
    %v4583 = vunpack.c.h.b16 %v4517
    %v4584 = vunpack.c.l.b16 %v4518
    %v4585 = vunpack.c.l.b16 %v4519
    %v4586 = vunpack.c.h.b16 %v4519
    %v4587 = vunpack.c.l.b16 %v4520
    %v4588 = vunpack.c.l.b16 %v4521
    %v4589 = vunpack.c.h.b16 %v4521
    %v4590 = vunpack.c.l.b16 %v4522
    %v4591 = vunpack.c.l.b16 %v4523
    %v4592 = vunpack.c.h.b16 %v4523
    %v4593 = vunpack.c.l.b16 %v4524
    %v4594 = vunpack.c.l.b16 %v4525
    %v4595 = vunpack.c.h.b16 %v4525
    %v4596 = vunpack.c.l.b16 %v4526
    %v4597 = vunpack.c.l.b16 %v4527
    %v4598 = vunpack.c.h.b16 %v4527
    %v4599 = vunpack.c.l.b16 %v4528
    %v4600 = vunpack.c.l.b16 %v4529
    %v4601 = vunpack.c.h.b16 %v4529
    %v4602 = vunpack.c.l.b16 %v4530
    %v4603 = vunpack.c.l.b16 %v4531
    %v4604 = vunpack.c.h.b16 %v4531
    %v4605 = vunpack.c.l.b16 %v4532
    %v4606 = vunpack.c.l.b16 %v4533
    %v4607 = vunpack.c.h.b16 %v4533
    %v4608 = vunpack.c.l.b16 %v4534
    %v4609 = vunpack.c.l.b16 %v4535
    %v4610 = vunpack.c.h.b16 %v4535
    %v4611 = vunpack.c.l.b16 %v4536
    %v4612 = vunpack.c.l.b16 %v4537
    %v4613 = vunpack.c.h.b16 %v4537
    %v4614 = vunpack.c.l.b16 %v4538
    %v4615 = vunpack.c.l.b16 %v4539
    %v4616 = vunpack.c.h.b16 %v4539
    %v4617 = vunpack.c.l.b16 %v4540
    %v4618 = vunpack.c.l.b16 %v4541
    %v4619 = vunpack.c.h.b16 %v4541
    %v4620 = vunpack.c.l.b16 %v4542
    %v4621 = vunpack.c.l.b16 %v4543
    %v4622 = vunpack.c.h.b16 %v4543
    %v4623 = vunpack.c.l.b16 %v4544
    %v4624 = vunpack.c.l.b16 %v4545
    %v4625 = vunpack.c.h.b16 %v4545
    %v4626 = vunpack.c.l.b16 %v4546
    %v4627 = vpack.c.b16 %v4582, %v4579
    %v4628 = vpack.c.b16 %v4583, %v4580
    %v4629 = vpack.c.b16 %v4584, %v4581
    %v4630 = vpack.c.b16 %v4588, %v4585
    %v4631 = vpack.c.b16 %v4589, %v4586
    %v4632 = vpack.c.b16 %v4590, %v4587
    %v4633 = vpack.c.b16 %v4594, %v4591
    %v4634 = vpack.c.b16 %v4595, %v4592
    %v4635 = vpack.c.b16 %v4596, %v4593
    %v4636 = vpack.c.b16 %v4600, %v4597
    %v4637 = vpack.c.b16 %v4601, %v4598
    %v4638 = vpack.c.b16 %v4602, %v4599
    %v4639 = vpack.c.b16 %v4606, %v4603
    %v4640 = vpack.c.b16 %v4607, %v4604
    %v4641 = vpack.c.b16 %v4608, %v4605
    %v4642 = vpack.c.b16 %v4612, %v4609
    %v4643 = vpack.c.b16 %v4613, %v4610
    %v4644 = vpack.c.b16 %v4614, %v4611
    %v4645 = vpack.c.b16 %v4618, %v4615
    %v4646 = vpack.c.b16 %v4619, %v4616
    %v4647 = vpack.c.b16 %v4620, %v4617
    %v4648 = vpack.c.b16 %v4624, %v4621
    %v4649 = vpack.c.b16 %v4625, %v4622
    %v4650 = vpack.c.b16 %v4626, %v4623
    %4675 = vmatprep.subr.bf16.mxu0 %v4628
    %4676 = vmatpush1.bf16.msra.mxu0 %v4627
    %4677 = vmatprep.subr.bf16.mxu0 %v4631
    %4678 = vmatpush1.bf16.msra.mxu0 %v4630
    %4679 = vmatprep.subr.bf16.mxu0 %v4634
    %4680 = vmatpush1.bf16.msra.mxu0 %v4633
    %4681 = vmatprep.subr.bf16.mxu0 %v4637
    %4682 = vmatpush1.bf16.msra.mxu0 %v4636
    %4683 = vmatprep.subr.bf16.mxu0 %v4640
    %4684 = vmatpush1.bf16.msra.mxu0 %v4639
    %4685 = vmatprep.subr.bf16.mxu0 %v4643
    %4686 = vmatpush1.bf16.msra.mxu0 %v4642
    %4687 = vmatprep.subr.bf16.mxu0 %v4646
    %4688 = vmatpush1.bf16.msra.mxu0 %v4645
    %4689 = vmatprep.subr.bf16.mxu0 %v4649
    %4690 = vmatpush1.bf16.msra.mxu0 %v4648
    %4691 = vmatprep.subr.bf16.mxu0 0
    %4692 = vmatpush1.bf16.msra.mxu0 0
    %4693 = vmatprep.subr.bf16.mxu0 0
    %4694 = vmatpush1.bf16.msra.mxu0 0
    %4695 = vmatprep.subr.bf16.mxu0 0
    %4696 = vmatpush1.bf16.msra.mxu0 0
    %4697 = vmatprep.subr.bf16.mxu0 0
    %4698 = vmatpush1.bf16.msra.mxu0 0
    %4699 = vmatprep.subr.bf16.mxu0 0
    %4700 = vmatpush1.bf16.msra.mxu0 0
    %4701 = vmatprep.subr.bf16.mxu0 0
    %4702 = vmatpush1.bf16.msra.mxu0 0
    %4703 = vmatprep.subr.bf16.mxu0 0
    %4704 = vmatpush1.bf16.msra.mxu0 0
    %4705 = vmatprep.subr.bf16.mxu0 0
    %4706 = vmatpush1.bf16.msra.mxu0 0
    %4707 = vmatprep.mubr.bf16.mxu0 0
    %4708 = vmatmul.mubr.bf16.gmra.mrb[0].mxu0 %v4047
    %v4709 = vpop.f32.mrb[0].mxu0
    %v4710 = vadd.f32 0.0, %v4709
    %v4711 = vpop.f32.mrb[0].mxu0
    %v4712 = vadd.f32 0.0, %v4711
    %v4713 = vpop.f32.mrb[0].mxu0
    %v4714 = vpop.f32.mrb[0].mxu0
    %4715 = vdwg.mxu0
    %4716 = vmatprep.subr.bf16.mxu0 0
    %4717 = vmatpush1.bf16.msra.mxu0 %v4629
    %4718 = vmatprep.subr.bf16.mxu0 0
    %4719 = vmatpush1.bf16.msra.mxu0 %v4632
    %4720 = vmatprep.subr.bf16.mxu0 0
    %4721 = vmatpush1.bf16.msra.mxu0 %v4635
    %4722 = vmatprep.subr.bf16.mxu0 0
    %4723 = vmatpush1.bf16.msra.mxu0 %v4638
    %4724 = vmatprep.subr.bf16.mxu0 0
    %4725 = vmatpush1.bf16.msra.mxu0 %v4641
    %4726 = vmatprep.subr.bf16.mxu0 0
    %4727 = vmatpush1.bf16.msra.mxu0 %v4644
    %4728 = vmatprep.subr.bf16.mxu0 0
    %4729 = vmatpush1.bf16.msra.mxu0 %v4647
    %4730 = vmatprep.subr.bf16.mxu0 0
    %4731 = vmatpush1.bf16.msra.mxu0 %v4650
    %4732 = vmatprep.subr.bf16.mxu0 0
    %4733 = vmatpush1.bf16.msra.mxu0 0
    %4734 = vmatprep.subr.bf16.mxu0 0
    %4735 = vmatpush1.bf16.msra.mxu0 0
    %4736 = vmatprep.subr.bf16.mxu0 0
    %4737 = vmatpush1.bf16.msra.mxu0 0
    %4738 = vmatprep.subr.bf16.mxu0 0
    %4739 = vmatpush1.bf16.msra.mxu0 0
    %4740 = vmatprep.subr.bf16.mxu0 0
    %4741 = vmatpush1.bf16.msra.mxu0 0
    %4742 = vmatprep.subr.bf16.mxu0 0
    %4743 = vmatpush1.bf16.msra.mxu0 0
    %4744 = vmatprep.subr.bf16.mxu0 0
    %4745 = vmatpush1.bf16.msra.mxu0 0
    %4746 = vmatprep.subr.bf16.mxu0 0
    %4747 = vmatpush1.bf16.msra.mxu0 0
    %4748 = vmatprep.mubr.bf16.mxu0 0
    %4749 = vmatmul.mubr.bf16.gmra.mrb[0].mxu0 %v4047
    %v4750 = vpop.f32.mrb[0].mxu0
    %v4751 = vadd.f32 0.0, %v4750
    %v4752 = vpop.f32.mrb[0].mxu0
    %v4753 = vpop.f32.mrb[0].mxu0
    %v4754 = vpop.f32.mrb[0].mxu0
    %4755 = vdwg.mxu0
    %v4756 = vadd.f32 %v4512, %v4710
    %v4757 = vadd.f32 %v4513, %v4712
    %v4758 = vxor.u32 %v4756, 2147483648
    %v4759 = vxor.u32 %v4757, 2147483648
    %v4760 = vmul.f32 %v4758, 1.442695
    %v4761 = vpow.pop %v4760
    %v4762 = vmul.f32 %v4759, 1.442695
    %v4763 = vpow.pop %v4762
    %v4764 = vadd.f32 %v4761, 1.0
    %v4765 = vadd.f32 %v4763, 1.0
    %v4766 = vrcp.pop %v4764
    %v4767 = vmul.f32 1.0, %v4766
    %v4768 = vrcp.pop %v4765
    %v4769 = vmul.f32 1.0, %v4768
    %v4770 = vadd.f32 %v4751, %v115
    %v4771 = vmul.f32 %v4767, %v4770
    %v4772 = vadd.f32 %v4514, %v4771
    %v4773 = vtanh.pop %v4772
    %v4774 = vsub.f32 1.0, %v4769
    %v4775 = vmul.f32 %v4774, %v4773
    %v4776 = vmul.f32 %v4769, %v4046
    %v4777 = vadd.f32 %v4775, %v4776
    %v4778 = vpack.c.bf16 %v4777, %v4777
    %v4779 = vpack.c.bf16 %v4508, %v4508
    %v4780 = vld [vmem:[%s4] sm:$0xff]
    %v4781 = vld [vmem:[%s4 + $0x8] sm:$0xff]
    %v4782 = vld [vmem:[%s4 + $0x10] sm:$0xff]
    %v4783 = vld [vmem:[%s4 + $0x18] sm:$0xff]
    %v4784 = vld [vmem:[%s4 + $0x20] sm:$0xff]
    %v4785 = vld [vmem:[%s4 + $0x28] sm:$0xff]
    %v4786 = vld [vmem:[%s4 + $0x30] sm:$0xff]
    %v4787 = vld [vmem:[%s4 + $0x38] sm:$0xff]
    %v4788 = vld [vmem:[%s4 + $0x40] sm:$0xff]
    %v4789 = vld [vmem:[%s4 + $0x48] sm:$0xff]
    %v4790 = vld [vmem:[%s4 + $0x50] sm:$0xff]
    %v4791 = vld [vmem:[%s4 + $0x58] sm:$0xff]
    %v4792 = vld [vmem:[%s4 + $0x60] sm:$0xff]
    %v4793 = vld [vmem:[%s4 + $0x68] sm:$0xff]
    %v4794 = vld [vmem:[%s4 + $0x70] sm:$0xff]
    %v4795 = vld [vmem:[%s4 + $0x78] sm:$0xff]
    %v4796 = vld [vmem:[%s4 + $0x80] sm:$0xff]
    %v4797 = vld [vmem:[%s4 + $0x88] sm:$0xff]
    %v4798 = vld [vmem:[%s4 + $0x90] sm:$0xff]
    %v4799 = vld [vmem:[%s4 + $0x98] sm:$0xff]
    %v4800 = vld [vmem:[%s4 + $0xa0] sm:$0xff]
    %v4801 = vld [vmem:[%s4 + $0xa8] sm:$0xff]
    %v4802 = vld [vmem:[%s4 + $0xb0] sm:$0xff]
    %v4803 = vld [vmem:[%s4 + $0xb8] sm:$0xff]
    %v4804 = vld [vmem:[%s4 + $0xc0] sm:$0xff]
    %v4805 = vld [vmem:[%s4 + $0xc8] sm:$0xff]
    %v4806 = vld [vmem:[%s4 + $0xd0] sm:$0xff]
    %v4807 = vld [vmem:[%s4 + $0xd8] sm:$0xff]
    %v4808 = vld [vmem:[%s4 + $0xe0] sm:$0xff]
    %v4809 = vld [vmem:[%s4 + $0xe8] sm:$0xff]
    %v4810 = vld [vmem:[%s4 + $0xf0] sm:$0xff]
    %v4811 = vld [vmem:[%s4 + $0xf8] sm:$0xff]
    %v4844 = vunpack.c.l.b16 %v4780
    %v4845 = vunpack.c.h.b16 %v4780
    %v4846 = vunpack.c.l.b16 %v4781
    %v4847 = vunpack.c.h.b16 %v4781
    %v4848 = vunpack.c.l.b16 %v4782
    %v4849 = vunpack.c.h.b16 %v4782
    %v4850 = vunpack.c.l.b16 %v4783
    %v4851 = vunpack.c.h.b16 %v4783
    %v4852 = vunpack.c.l.b16 %v4784
    %v4853 = vunpack.c.h.b16 %v4784
    %v4854 = vunpack.c.l.b16 %v4785
    %v4855 = vunpack.c.h.b16 %v4785
    %v4856 = vunpack.c.l.b16 %v4786
    %v4857 = vunpack.c.h.b16 %v4786
    %v4858 = vunpack.c.l.b16 %v4787
    %v4859 = vunpack.c.h.b16 %v4787
    %v4860 = vunpack.c.l.b16 %v4788
    %v4861 = vunpack.c.h.b16 %v4788
    %v4862 = vunpack.c.l.b16 %v4789
    %v4863 = vunpack.c.h.b16 %v4789
    %v4864 = vunpack.c.l.b16 %v4790
    %v4865 = vunpack.c.h.b16 %v4790
    %v4866 = vunpack.c.l.b16 %v4791
    %v4867 = vunpack.c.h.b16 %v4791
    %v4868 = vunpack.c.l.b16 %v4792
    %v4869 = vunpack.c.h.b16 %v4792
    %v4870 = vunpack.c.l.b16 %v4793
    %v4871 = vunpack.c.h.b16 %v4793
    %v4872 = vunpack.c.l.b16 %v4794
    %v4873 = vunpack.c.h.b16 %v4794
    %v4874 = vunpack.c.l.b16 %v4795
    %v4875 = vunpack.c.h.b16 %v4795
    %v4876 = vunpack.c.l.b16 %v4796
    %v4877 = vunpack.c.h.b16 %v4796
    %v4878 = vunpack.c.l.b16 %v4797
    %v4879 = vunpack.c.h.b16 %v4797
    %v4880 = vunpack.c.l.b16 %v4798
    %v4881 = vunpack.c.h.b16 %v4798
    %v4882 = vunpack.c.l.b16 %v4799
    %v4883 = vunpack.c.h.b16 %v4799
    %v4884 = vunpack.c.l.b16 %v4800
    %v4885 = vunpack.c.h.b16 %v4800
    %v4886 = vunpack.c.l.b16 %v4801
    %v4887 = vunpack.c.h.b16 %v4801
    %v4888 = vunpack.c.l.b16 %v4802
    %v4889 = vunpack.c.h.b16 %v4802
    %v4890 = vunpack.c.l.b16 %v4803
    %v4891 = vunpack.c.h.b16 %v4803
    %v4892 = vunpack.c.l.b16 %v4804
    %v4893 = vunpack.c.h.b16 %v4804
    %v4894 = vunpack.c.l.b16 %v4805
    %v4895 = vunpack.c.h.b16 %v4805
    %v4896 = vunpack.c.l.b16 %v4806
    %v4897 = vunpack.c.h.b16 %v4806
    %v4898 = vunpack.c.l.b16 %v4807
    %v4899 = vunpack.c.h.b16 %v4807
    %v4900 = vunpack.c.l.b16 %v4808
    %v4901 = vunpack.c.h.b16 %v4808
    %v4902 = vunpack.c.l.b16 %v4809
    %v4903 = vunpack.c.h.b16 %v4809
    %v4904 = vunpack.c.l.b16 %v4810
    %v4905 = vunpack.c.h.b16 %v4810
    %v4906 = vunpack.c.l.b16 %v4811
    %v4907 = vunpack.c.h.b16 %v4811
    %v4908 = vpack.c.b16 %v4846, %v4844
    %v4909 = vpack.c.b16 %v4847, %v4845
    %v4910 = vpack.c.b16 %v4850, %v4848
    %v4911 = vpack.c.b16 %v4851, %v4849
    %v4912 = vpack.c.b16 %v4854, %v4852
    %v4913 = vpack.c.b16 %v4855, %v4853
    %v4914 = vpack.c.b16 %v4858, %v4856
    %v4915 = vpack.c.b16 %v4859, %v4857
    %v4916 = vpack.c.b16 %v4862, %v4860
    %v4917 = vpack.c.b16 %v4863, %v4861
    %v4918 = vpack.c.b16 %v4866, %v4864
    %v4919 = vpack.c.b16 %v4867, %v4865
    %v4920 = vpack.c.b16 %v4870, %v4868
    %v4921 = vpack.c.b16 %v4871, %v4869
    %v4922 = vpack.c.b16 %v4874, %v4872
    %v4923 = vpack.c.b16 %v4875, %v4873
    %v4924 = vpack.c.b16 %v4878, %v4876
    %v4925 = vpack.c.b16 %v4879, %v4877
    %v4926 = vpack.c.b16 %v4882, %v4880
    %v4927 = vpack.c.b16 %v4883, %v4881
    %v4928 = vpack.c.b16 %v4886, %v4884
    %v4929 = vpack.c.b16 %v4887, %v4885
    %v4930 = vpack.c.b16 %v4890, %v4888
    %v4931 = vpack.c.b16 %v4891, %v4889
    %v4932 = vpack.c.b16 %v4894, %v4892
    %v4933 = vpack.c.b16 %v4895, %v4893
    %v4934 = vpack.c.b16 %v4898, %v4896
    %v4935 = vpack.c.b16 %v4899, %v4897
    %v4936 = vpack.c.b16 %v4902, %v4900
    %v4937 = vpack.c.b16 %v4903, %v4901
    %v4938 = vpack.c.b16 %v4906, %v4904
    %v4939 = vpack.c.b16 %v4907, %v4905
    %4972 = vmatprep.subr.bf16.mxu0 %v4909
    %4973 = vmatpush1.bf16.msra.mxu0 %v4908
    %4974 = vmatprep.subr.bf16.mxu0 %v4911
    %4975 = vmatpush1.bf16.msra.mxu0 %v4910
    %4976 = vmatprep.subr.bf16.mxu0 %v4913
    %4977 = vmatpush1.bf16.msra.mxu0 %v4912
    %4978 = vmatprep.subr.bf16.mxu0 %v4915
    %4979 = vmatpush1.bf16.msra.mxu0 %v4914
    %4980 = vmatprep.subr.bf16.mxu0 %v4917
    %4981 = vmatpush1.bf16.msra.mxu0 %v4916
    %4982 = vmatprep.subr.bf16.mxu0 %v4919
    %4983 = vmatpush1.bf16.msra.mxu0 %v4918
    %4984 = vmatprep.subr.bf16.mxu0 %v4921
    %4985 = vmatpush1.bf16.msra.mxu0 %v4920
    %4986 = vmatprep.subr.bf16.mxu0 %v4923
    %4987 = vmatpush1.bf16.msra.mxu0 %v4922
    %4988 = vmatprep.subr.bf16.mxu0 %v4925
    %4989 = vmatpush1.bf16.msra.mxu0 %v4924
    %4990 = vmatprep.subr.bf16.mxu0 %v4927
    %4991 = vmatpush1.bf16.msra.mxu0 %v4926
    %4992 = vmatprep.subr.bf16.mxu0 %v4929
    %4993 = vmatpush1.bf16.msra.mxu0 %v4928
    %4994 = vmatprep.subr.bf16.mxu0 %v4931
    %4995 = vmatpush1.bf16.msra.mxu0 %v4930
    %4996 = vmatprep.subr.bf16.mxu0 %v4933
    %4997 = vmatpush1.bf16.msra.mxu0 %v4932
    %4998 = vmatprep.subr.bf16.mxu0 %v4935
    %4999 = vmatpush1.bf16.msra.mxu0 %v4934
    %5000 = vmatprep.subr.bf16.mxu0 %v4937
    %5001 = vmatpush1.bf16.msra.mxu0 %v4936
    %5002 = vmatprep.subr.bf16.mxu0 %v4939
    %5003 = vmatpush1.bf16.msra.mxu0 %v4938
    %5004 = vmatprep.mubr.bf16.mxu0 %v4779
    %5005 = vmatmul.mubr.bf16.gmra.mrb[0].mxu0 %v4778
    %v5006 = vpop.f32.mrb[0].mxu0
    %v5007 = vadd.f32 %v96, %v5006
    %v5008 = vpop.f32.mrb[0].mxu0
    %v5009 = vadd.f32 %v100, %v5008
    %v5010 = vpop.f32.mrb[0].mxu0
    %v5011 = vpop.f32.mrb[0].mxu0
    %5012 = vdwg.mxu0
    %v5013 = vxor.u32 %v5007, 2147483648
    %v5014 = vxor.u32 %v5009, 2147483648
    %v5015 = vmul.f32 %v5013, 1.442695
    %v5016 = vpow.pop %v5015
    %v5017 = vmul.f32 %v5014, 1.442695
    %v5018 = vpow.pop %v5017
    %v5019 = vadd.f32 %v5016, 1.0
    %v5020 = vadd.f32 %v5018, 1.0
    %v5021 = vrcp.pop %v5019
    %v5022 = vmul.f32 1.0, %v5021
    %v5023 = vrcp.pop %v5020
    %v5024 = vmul.f32 1.0, %v5023
    %v5025 = vld [vmem:[#allocation4] sm:$0xf]
    %v5026 = vld [vmem:[#allocation4 + $0x4] sm:$0xf]
    %v5027 = vld [vmem:[#allocation4 + $0x8] sm:$0xf]
    %v5028 = vld [vmem:[#allocation4 + $0xc] sm:$0xf]
    %v5029 = vld [vmem:[#allocation4 + $0x10] sm:$0xf]
    %v5030 = vld [vmem:[#allocation4 + $0x14] sm:$0xf]
    %v5031 = vld [vmem:[#allocation4 + $0x18] sm:$0xf]
    %v5032 = vld [vmem:[#allocation4 + $0x1c] sm:$0xf]
    %v5033 = vld [vmem:[#allocation4 + $0x20] sm:$0xf]
    %v5034 = vld [vmem:[#allocation4 + $0x24] sm:$0xf]
    %v5035 = vld [vmem:[#allocation4 + $0x28] sm:$0xf]
    %v5036 = vld [vmem:[#allocation4 + $0x2c] sm:$0xf]
    %v5037 = vld [vmem:[#allocation4 + $0x30] sm:$0xf]
    %v5038 = vld [vmem:[#allocation4 + $0x34] sm:$0xf]
    %v5039 = vld [vmem:[#allocation4 + $0x38] sm:$0xf]
    %v5040 = vld [vmem:[#allocation4 + $0x3c] sm:$0xf]
    %v5057 = vunpack.c.l.b16 %v5025
    %v5058 = vunpack.c.l.b16 %v5026
    %v5059 = vunpack.c.l.b16 %v5027
    %v5060 = vunpack.c.l.b16 %v5028
    %v5061 = vunpack.c.l.b16 %v5029
    %v5062 = vunpack.c.l.b16 %v5030
    %v5063 = vunpack.c.l.b16 %v5031
    %v5064 = vunpack.c.l.b16 %v5032
    %v5065 = vunpack.c.l.b16 %v5033
    %v5066 = vunpack.c.l.b16 %v5034
    %v5067 = vunpack.c.l.b16 %v5035
    %v5068 = vunpack.c.l.b16 %v5036
    %v5069 = vunpack.c.l.b16 %v5037
    %v5070 = vunpack.c.l.b16 %v5038
    %v5071 = vunpack.c.l.b16 %v5039
    %v5072 = vunpack.c.l.b16 %v5040
    %v5073 = vpack.c.b16 %v5058, %v5057
    %v5074 = vpack.c.b16 %v5060, %v5059
    %v5075 = vpack.c.b16 %v5062, %v5061
    %v5076 = vpack.c.b16 %v5064, %v5063
    %v5077 = vpack.c.b16 %v5066, %v5065
    %v5078 = vpack.c.b16 %v5068, %v5067
    %v5079 = vpack.c.b16 %v5070, %v5069
    %v5080 = vpack.c.b16 %v5072, %v5071
    %5089 = vmatprep.subr.bf16.mxu0 0
    %5090 = vmatpush1.bf16.msra.mxu0 %v5073
    %5091 = vmatprep.subr.bf16.mxu0 0
    %5092 = vmatpush1.bf16.msra.mxu0 %v5074
    %5093 = vmatprep.subr.bf16.mxu0 0
    %5094 = vmatpush1.bf16.msra.mxu0 %v5075
    %5095 = vmatprep.subr.bf16.mxu0 0
    %5096 = vmatpush1.bf16.msra.mxu0 %v5076
    %5097 = vmatprep.subr.bf16.mxu0 0
    %5098 = vmatpush1.bf16.msra.mxu0 %v5077
    %5099 = vmatprep.subr.bf16.mxu0 0
    %5100 = vmatpush1.bf16.msra.mxu0 %v5078
    %5101 = vmatprep.subr.bf16.mxu0 0
    %5102 = vmatpush1.bf16.msra.mxu0 %v5079
    %5103 = vmatprep.subr.bf16.mxu0 0
    %5104 = vmatpush1.bf16.msra.mxu0 %v5080
    %5105 = vmatprep.subr.bf16.mxu0 0
    %5106 = vmatpush1.bf16.msra.mxu0 0
    %5107 = vmatprep.subr.bf16.mxu0 0
    %5108 = vmatpush1.bf16.msra.mxu0 0
    %5109 = vmatprep.subr.bf16.mxu0 0
    %5110 = vmatpush1.bf16.msra.mxu0 0
    %5111 = vmatprep.subr.bf16.mxu0 0
    %5112 = vmatpush1.bf16.msra.mxu0 0
    %5113 = vmatprep.subr.bf16.mxu0 0
    %5114 = vmatpush1.bf16.msra.mxu0 0
    %5115 = vmatprep.subr.bf16.mxu0 0
    %5116 = vmatpush1.bf16.msra.mxu0 0
    %5117 = vmatprep.subr.bf16.mxu0 0
    %5118 = vmatpush1.bf16.msra.mxu0 0
    %5119 = vmatprep.subr.bf16.mxu0 0
    %5120 = vmatpush1.bf16.msra.mxu0 0
    %5121 = vmatprep.mubr.bf16.mxu0 0
    %5122 = vmatmul.mubr.bf16.gmra.mrb[0].mxu0 %v4778
    %v5123 = vpop.f32.mrb[0].mxu0
    %v5124 = vadd.f32 %v108, %v5123
    %v5125 = vpop.f32.mrb[0].mxu0
    %v5126 = vpop.f32.mrb[0].mxu0
    %v5127 = vpop.f32.mrb[0].mxu0
    %5128 = vdwg.mxu0
    %v5129 = vld [vmem:[#allocation6] sm:$0xf]
    %v5130 = vld [vmem:[#allocation6 + $0x4] sm:$0xf]
    %v5131 = vld [vmem:[#allocation6 + $0x8] sm:$0xf]
    %v5132 = vld [vmem:[#allocation6 + $0xc] sm:$0xf]
    %v5133 = vld [vmem:[#allocation6 + $0x10] sm:$0xf]
    %v5134 = vld [vmem:[#allocation6 + $0x14] sm:$0xf]
    %v5135 = vld [vmem:[#allocation6 + $0x18] sm:$0xf]
    %v5136 = vld [vmem:[#allocation6 + $0x1c] sm:$0xf]
    %v5137 = vld [vmem:[#allocation6 + $0x20] sm:$0xf]
    %v5138 = vld [vmem:[#allocation6 + $0x24] sm:$0xf]
    %v5139 = vld [vmem:[#allocation6 + $0x28] sm:$0xf]
    %v5140 = vld [vmem:[#allocation6 + $0x2c] sm:$0xf]
    %v5141 = vld [vmem:[#allocation6 + $0x30] sm:$0xf]
    %v5142 = vld [vmem:[#allocation6 + $0x34] sm:$0xf]
    %v5143 = vld [vmem:[#allocation6 + $0x38] sm:$0xf]
    %v5144 = vld [vmem:[#allocation6 + $0x3c] sm:$0xf]
    %v5161 = vunpack.c.l.b16 %v5129
    %v5162 = vunpack.c.l.b16 %v5130
    %v5163 = vunpack.c.l.b16 %v5131
    %v5164 = vunpack.c.l.b16 %v5132
    %v5165 = vunpack.c.l.b16 %v5133
    %v5166 = vunpack.c.l.b16 %v5134
    %v5167 = vunpack.c.l.b16 %v5135
    %v5168 = vunpack.c.l.b16 %v5136
    %v5169 = vunpack.c.l.b16 %v5137
    %v5170 = vunpack.c.l.b16 %v5138
    %v5171 = vunpack.c.l.b16 %v5139
    %v5172 = vunpack.c.l.b16 %v5140
    %v5173 = vunpack.c.l.b16 %v5141
    %v5174 = vunpack.c.l.b16 %v5142
    %v5175 = vunpack.c.l.b16 %v5143
    %v5176 = vunpack.c.l.b16 %v5144
    %v5177 = vpack.c.b16 %v5162, %v5161
    %v5178 = vpack.c.b16 %v5164, %v5163
    %v5179 = vpack.c.b16 %v5166, %v5165
    %v5180 = vpack.c.b16 %v5168, %v5167
    %v5181 = vpack.c.b16 %v5170, %v5169
    %v5182 = vpack.c.b16 %v5172, %v5171
    %v5183 = vpack.c.b16 %v5174, %v5173
    %v5184 = vpack.c.b16 %v5176, %v5175
    %5193 = vmatprep.subr.bf16.mxu0 0
    %5194 = vmatpush1.bf16.msra.mxu0 %v5177
    %5195 = vmatprep.subr.bf16.mxu0 0
    %5196 = vmatpush1.bf16.msra.mxu0 %v5178
    %5197 = vmatprep.subr.bf16.mxu0 0
    %5198 = vmatpush1.bf16.msra.mxu0 %v5179
    %5199 = vmatprep.subr.bf16.mxu0 0
    %5200 = vmatpush1.bf16.msra.mxu0 %v5180
    %5201 = vmatprep.subr.bf16.mxu0 0
    %5202 = vmatpush1.bf16.msra.mxu0 %v5181
    %5203 = vmatprep.subr.bf16.mxu0 0
    %5204 = vmatpush1.bf16.msra.mxu0 %v5182
    %5205 = vmatprep.subr.bf16.mxu0 0
    %5206 = vmatpush1.bf16.msra.mxu0 %v5183
    %5207 = vmatprep.subr.bf16.mxu0 0
    %5208 = vmatpush1.bf16.msra.mxu0 %v5184
    %5209 = vmatprep.subr.bf16.mxu0 0
    %5210 = vmatpush1.bf16.msra.mxu0 0
    %5211 = vmatprep.subr.bf16.mxu0 0
    %5212 = vmatpush1.bf16.msra.mxu0 0
    %5213 = vmatprep.subr.bf16.mxu0 0
    %5214 = vmatpush1.bf16.msra.mxu0 0
    %5215 = vmatprep.subr.bf16.mxu0 0
    %5216 = vmatpush1.bf16.msra.mxu0 0
    %5217 = vmatprep.subr.bf16.mxu0 0
    %5218 = vmatpush1.bf16.msra.mxu0 0
    %5219 = vmatprep.subr.bf16.mxu0 0
    %5220 = vmatpush1.bf16.msra.mxu0 0
    %5221 = vmatprep.subr.bf16.mxu0 0
    %5222 = vmatpush1.bf16.msra.mxu0 0
    %5223 = vmatprep.subr.bf16.mxu0 0
    %5224 = vmatpush1.bf16.msra.mxu0 0
    %5225 = vmatprep.mubr.bf16.mxu0 0
    %5226 = vmatmul.mubr.bf16.gmra.mrb[0].mxu0 %v4779
    %v5227 = vpop.f32.mrb[0].mxu0
    %v5228 = vadd.f32 %v122, %v5227
    %v5229 = vpop.f32.mrb[0].mxu0
    %v5230 = vpop.f32.mrb[0].mxu0
    %v5231 = vpop.f32.mrb[0].mxu0
    %5232 = vdwg.mxu0
    %v5233 = vmul.f32 %v5022, %v5228
    %v5234 = vadd.f32 %v5124, %v5233
    %v5235 = vtanh.pop %v5234
    %v5236 = vsub.f32 1.0, %v5024
    %v5237 = vmul.f32 %v5236, %v5235
    %v5238 = vmul.f32 %v5024, %v4508
    %v5239 = vadd.f32 %v5237, %v5238
    %s5240 = scalar_lea.vmem %s11, 48
    %5241 = vst [vmem:[%s5240] sm:$0xff] %v5239
    %s5242 = scalar_lea.vmem %s0, 168
    %v5243 = vld [vmem:[%s5242] sm:$0xff]
    %v5244 = vld [vmem:[%s5242 + $0x8] sm:$0xff]
    %v5245 = vld [vmem:[%s5242 + $0x10] sm:$0xff]
    %v5246 = vld [vmem:[#allocation2] sm:$0xff]
    %v5247 = vld [vmem:[#allocation2 + $0x8] sm:$0xf]
    %v5248 = vld [vmem:[#allocation2 + $0xc] sm:$0xff]
    %v5249 = vld [vmem:[#allocation2 + $0x14] sm:$0xf]
    %v5250 = vld [vmem:[#allocation2 + $0x18] sm:$0xff]
    %v5251 = vld [vmem:[#allocation2 + $0x20] sm:$0xf]
    %v5252 = vld [vmem:[#allocation2 + $0x24] sm:$0xff]
    %v5253 = vld [vmem:[#allocation2 + $0x2c] sm:$0xf]
    %v5254 = vld [vmem:[#allocation2 + $0x30] sm:$0xff]
    %v5255 = vld [vmem:[#allocation2 + $0x38] sm:$0xf]
    %v5256 = vld [vmem:[#allocation2 + $0x3c] sm:$0xff]
    %v5257 = vld [vmem:[#allocation2 + $0x44] sm:$0xf]
    %v5258 = vld [vmem:[#allocation2 + $0x48] sm:$0xff]
    %v5259 = vld [vmem:[#allocation2 + $0x50] sm:$0xf]
    %v5260 = vld [vmem:[#allocation2 + $0x54] sm:$0xff]
    %v5261 = vld [vmem:[#allocation2 + $0x5c] sm:$0xf]
    %v5262 = vld [vmem:[#allocation2 + $0x60] sm:$0xff]
    %v5263 = vld [vmem:[#allocation2 + $0x68] sm:$0xf]
    %v5264 = vld [vmem:[#allocation2 + $0x6c] sm:$0xff]
    %v5265 = vld [vmem:[#allocation2 + $0x74] sm:$0xf]
    %v5266 = vld [vmem:[#allocation2 + $0x78] sm:$0xff]
    %v5267 = vld [vmem:[#allocation2 + $0x80] sm:$0xf]
    %v5268 = vld [vmem:[#allocation2 + $0x84] sm:$0xff]
    %v5269 = vld [vmem:[#allocation2 + $0x8c] sm:$0xf]
    %v5270 = vld [vmem:[#allocation2 + $0x90] sm:$0xff]
    %v5271 = vld [vmem:[#allocation2 + $0x98] sm:$0xf]
    %v5272 = vld [vmem:[#allocation2 + $0x9c] sm:$0xff]
    %v5273 = vld [vmem:[#allocation2 + $0xa4] sm:$0xf]
    %v5274 = vld [vmem:[#allocation2 + $0xa8] sm:$0xff]
    %v5275 = vld [vmem:[#allocation2 + $0xb0] sm:$0xf]
    %v5276 = vld [vmem:[#allocation2 + $0xb4] sm:$0xff]
    %v5277 = vld [vmem:[#allocation2 + $0xbc] sm:$0xf]
    %v5310 = vunpack.c.l.b16 %v5246
    %v5311 = vunpack.c.h.b16 %v5246
    %v5312 = vunpack.c.l.b16 %v5247
    %v5313 = vunpack.c.l.b16 %v5248
    %v5314 = vunpack.c.h.b16 %v5248
    %v5315 = vunpack.c.l.b16 %v5249
    %v5316 = vunpack.c.l.b16 %v5250
    %v5317 = vunpack.c.h.b16 %v5250
    %v5318 = vunpack.c.l.b16 %v5251
    %v5319 = vunpack.c.l.b16 %v5252
    %v5320 = vunpack.c.h.b16 %v5252
    %v5321 = vunpack.c.l.b16 %v5253
    %v5322 = vunpack.c.l.b16 %v5254
    %v5323 = vunpack.c.h.b16 %v5254
    %v5324 = vunpack.c.l.b16 %v5255
    %v5325 = vunpack.c.l.b16 %v5256
    %v5326 = vunpack.c.h.b16 %v5256
    %v5327 = vunpack.c.l.b16 %v5257
    %v5328 = vunpack.c.l.b16 %v5258
    %v5329 = vunpack.c.h.b16 %v5258
    %v5330 = vunpack.c.l.b16 %v5259
    %v5331 = vunpack.c.l.b16 %v5260
    %v5332 = vunpack.c.h.b16 %v5260
    %v5333 = vunpack.c.l.b16 %v5261
    %v5334 = vunpack.c.l.b16 %v5262
    %v5335 = vunpack.c.h.b16 %v5262
    %v5336 = vunpack.c.l.b16 %v5263
    %v5337 = vunpack.c.l.b16 %v5264
    %v5338 = vunpack.c.h.b16 %v5264
    %v5339 = vunpack.c.l.b16 %v5265
    %v5340 = vunpack.c.l.b16 %v5266
    %v5341 = vunpack.c.h.b16 %v5266
    %v5342 = vunpack.c.l.b16 %v5267
    %v5343 = vunpack.c.l.b16 %v5268
    %v5344 = vunpack.c.h.b16 %v5268
    %v5345 = vunpack.c.l.b16 %v5269
    %v5346 = vunpack.c.l.b16 %v5270
    %v5347 = vunpack.c.h.b16 %v5270
    %v5348 = vunpack.c.l.b16 %v5271
    %v5349 = vunpack.c.l.b16 %v5272
    %v5350 = vunpack.c.h.b16 %v5272
    %v5351 = vunpack.c.l.b16 %v5273
    %v5352 = vunpack.c.l.b16 %v5274
    %v5353 = vunpack.c.h.b16 %v5274
    %v5354 = vunpack.c.l.b16 %v5275
    %v5355 = vunpack.c.l.b16 %v5276
    %v5356 = vunpack.c.h.b16 %v5276
    %v5357 = vunpack.c.l.b16 %v5277
    %v5358 = vpack.c.b16 %v5313, %v5310
    %v5359 = vpack.c.b16 %v5314, %v5311
    %v5360 = vpack.c.b16 %v5315, %v5312
    %v5361 = vpack.c.b16 %v5319, %v5316
    %v5362 = vpack.c.b16 %v5320, %v5317
    %v5363 = vpack.c.b16 %v5321, %v5318
    %v5364 = vpack.c.b16 %v5325, %v5322
    %v5365 = vpack.c.b16 %v5326, %v5323
    %v5366 = vpack.c.b16 %v5327, %v5324
    %v5367 = vpack.c.b16 %v5331, %v5328
    %v5368 = vpack.c.b16 %v5332, %v5329
    %v5369 = vpack.c.b16 %v5333, %v5330
    %v5370 = vpack.c.b16 %v5337, %v5334
    %v5371 = vpack.c.b16 %v5338, %v5335
    %v5372 = vpack.c.b16 %v5339, %v5336
    %v5373 = vpack.c.b16 %v5343, %v5340
    %v5374 = vpack.c.b16 %v5344, %v5341
    %v5375 = vpack.c.b16 %v5345, %v5342
    %v5376 = vpack.c.b16 %v5349, %v5346
    %v5377 = vpack.c.b16 %v5350, %v5347
    %v5378 = vpack.c.b16 %v5351, %v5348
    %v5379 = vpack.c.b16 %v5355, %v5352
    %v5380 = vpack.c.b16 %v5356, %v5353
    %v5381 = vpack.c.b16 %v5357, %v5354
    %5406 = vmatprep.subr.bf16.mxu0 %v5359
    %5407 = vmatpush1.bf16.msra.mxu0 %v5358
    %5408 = vmatprep.subr.bf16.mxu0 %v5362
    %5409 = vmatpush1.bf16.msra.mxu0 %v5361
    %5410 = vmatprep.subr.bf16.mxu0 %v5365
    %5411 = vmatpush1.bf16.msra.mxu0 %v5364
    %5412 = vmatprep.subr.bf16.mxu0 %v5368
    %5413 = vmatpush1.bf16.msra.mxu0 %v5367
    %5414 = vmatprep.subr.bf16.mxu0 %v5371
    %5415 = vmatpush1.bf16.msra.mxu0 %v5370
    %5416 = vmatprep.subr.bf16.mxu0 %v5374
    %5417 = vmatpush1.bf16.msra.mxu0 %v5373
    %5418 = vmatprep.subr.bf16.mxu0 %v5377
    %5419 = vmatpush1.bf16.msra.mxu0 %v5376
    %5420 = vmatprep.subr.bf16.mxu0 %v5380
    %5421 = vmatpush1.bf16.msra.mxu0 %v5379
    %5422 = vmatprep.subr.bf16.mxu0 0
    %5423 = vmatpush1.bf16.msra.mxu0 0
    %5424 = vmatprep.subr.bf16.mxu0 0
    %5425 = vmatpush1.bf16.msra.mxu0 0
    %5426 = vmatprep.subr.bf16.mxu0 0
    %5427 = vmatpush1.bf16.msra.mxu0 0
    %5428 = vmatprep.subr.bf16.mxu0 0
    %5429 = vmatpush1.bf16.msra.mxu0 0
    %5430 = vmatprep.subr.bf16.mxu0 0
    %5431 = vmatpush1.bf16.msra.mxu0 0
    %5432 = vmatprep.subr.bf16.mxu0 0
    %5433 = vmatpush1.bf16.msra.mxu0 0
    %5434 = vmatprep.subr.bf16.mxu0 0
    %5435 = vmatpush1.bf16.msra.mxu0 0
    %5436 = vmatprep.subr.bf16.mxu0 0
    %5437 = vmatpush1.bf16.msra.mxu0 0
    %5438 = vmatprep.mubr.bf16.mxu0 0
    %5439 = vmatmul.mubr.bf16.gmra.mrb[0].mxu0 %v4778
    %v5440 = vpop.f32.mrb[0].mxu0
    %v5441 = vadd.f32 0.0, %v5440
    %v5442 = vpop.f32.mrb[0].mxu0
    %v5443 = vadd.f32 0.0, %v5442
    %v5444 = vpop.f32.mrb[0].mxu0
    %v5445 = vpop.f32.mrb[0].mxu0
    %5446 = vdwg.mxu0
    %5447 = vmatprep.subr.bf16.mxu0 0
    %5448 = vmatpush1.bf16.msra.mxu0 %v5360
    %5449 = vmatprep.subr.bf16.mxu0 0
    %5450 = vmatpush1.bf16.msra.mxu0 %v5363
    %5451 = vmatprep.subr.bf16.mxu0 0
    %5452 = vmatpush1.bf16.msra.mxu0 %v5366
    %5453 = vmatprep.subr.bf16.mxu0 0
    %5454 = vmatpush1.bf16.msra.mxu0 %v5369
    %5455 = vmatprep.subr.bf16.mxu0 0
    %5456 = vmatpush1.bf16.msra.mxu0 %v5372
    %5457 = vmatprep.subr.bf16.mxu0 0
    %5458 = vmatpush1.bf16.msra.mxu0 %v5375
    %5459 = vmatprep.subr.bf16.mxu0 0
    %5460 = vmatpush1.bf16.msra.mxu0 %v5378
    %5461 = vmatprep.subr.bf16.mxu0 0
    %5462 = vmatpush1.bf16.msra.mxu0 %v5381
    %5463 = vmatprep.subr.bf16.mxu0 0
    %5464 = vmatpush1.bf16.msra.mxu0 0
    %5465 = vmatprep.subr.bf16.mxu0 0
    %5466 = vmatpush1.bf16.msra.mxu0 0
    %5467 = vmatprep.subr.bf16.mxu0 0
    %5468 = vmatpush1.bf16.msra.mxu0 0
    %5469 = vmatprep.subr.bf16.mxu0 0
    %5470 = vmatpush1.bf16.msra.mxu0 0
    %5471 = vmatprep.subr.bf16.mxu0 0
    %5472 = vmatpush1.bf16.msra.mxu0 0
    %5473 = vmatprep.subr.bf16.mxu0 0
    %5474 = vmatpush1.bf16.msra.mxu0 0
    %5475 = vmatprep.subr.bf16.mxu0 0
    %5476 = vmatpush1.bf16.msra.mxu0 0
    %5477 = vmatprep.subr.bf16.mxu0 0
    %5478 = vmatpush1.bf16.msra.mxu0 0
    %5479 = vmatprep.mubr.bf16.mxu0 0
    %5480 = vmatmul.mubr.bf16.gmra.mrb[0].mxu0 %v4778
    %v5481 = vpop.f32.mrb[0].mxu0
    %v5482 = vadd.f32 0.0, %v5481
    %v5483 = vpop.f32.mrb[0].mxu0
    %v5484 = vpop.f32.mrb[0].mxu0
    %v5485 = vpop.f32.mrb[0].mxu0
    %5486 = vdwg.mxu0
    %v5487 = vadd.f32 %v5243, %v5441
    %v5488 = vadd.f32 %v5244, %v5443
    %v5489 = vxor.u32 %v5487, 2147483648
    %v5490 = vxor.u32 %v5488, 2147483648
    %v5491 = vmul.f32 %v5489, 1.442695
    %v5492 = vpow.pop %v5491
    %v5493 = vmul.f32 %v5490, 1.442695
    %v5494 = vpow.pop %v5493
    %v5495 = vadd.f32 %v5492, 1.0
    %v5496 = vadd.f32 %v5494, 1.0
    %v5497 = vrcp.pop %v5495
    %v5498 = vmul.f32 1.0, %v5497
    %v5499 = vrcp.pop %v5496
    %v5500 = vmul.f32 1.0, %v5499
    %v5501 = vadd.f32 %v5482, %v115
    %v5502 = vmul.f32 %v5498, %v5501
    %v5503 = vadd.f32 %v5245, %v5502
    %v5504 = vtanh.pop %v5503
    %v5505 = vsub.f32 1.0, %v5500
    %v5506 = vmul.f32 %v5505, %v5504
    %v5507 = vmul.f32 %v5500, %v4777
    %v5508 = vadd.f32 %v5506, %v5507
    %v5509 = vpack.c.bf16 %v5508, %v5508
    %v5510 = vpack.c.bf16 %v5239, %v5239
    %v5511 = vld [vmem:[%s4] sm:$0xff]
    %v5512 = vld [vmem:[%s4 + $0x8] sm:$0xff]
    %v5513 = vld [vmem:[%s4 + $0x10] sm:$0xff]
    %v5514 = vld [vmem:[%s4 + $0x18] sm:$0xff]
    %v5515 = vld [vmem:[%s4 + $0x20] sm:$0xff]
    %v5516 = vld [vmem:[%s4 + $0x28] sm:$0xff]
    %v5517 = vld [vmem:[%s4 + $0x30] sm:$0xff]
    %v5518 = vld [vmem:[%s4 + $0x38] sm:$0xff]
    %v5519 = vld [vmem:[%s4 + $0x40] sm:$0xff]
    %v5520 = vld [vmem:[%s4 + $0x48] sm:$0xff]
    %v5521 = vld [vmem:[%s4 + $0x50] sm:$0xff]
    %v5522 = vld [vmem:[%s4 + $0x58] sm:$0xff]
    %v5523 = vld [vmem:[%s4 + $0x60] sm:$0xff]
    %v5524 = vld [vmem:[%s4 + $0x68] sm:$0xff]
    %v5525 = vld [vmem:[%s4 + $0x70] sm:$0xff]
    %v5526 = vld [vmem:[%s4 + $0x78] sm:$0xff]
    %v5527 = vld [vmem:[%s4 + $0x80] sm:$0xff]
    %v5528 = vld [vmem:[%s4 + $0x88] sm:$0xff]
    %v5529 = vld [vmem:[%s4 + $0x90] sm:$0xff]
    %v5530 = vld [vmem:[%s4 + $0x98] sm:$0xff]
    %v5531 = vld [vmem:[%s4 + $0xa0] sm:$0xff]
    %v5532 = vld [vmem:[%s4 + $0xa8] sm:$0xff]
    %v5533 = vld [vmem:[%s4 + $0xb0] sm:$0xff]
    %v5534 = vld [vmem:[%s4 + $0xb8] sm:$0xff]
    %v5535 = vld [vmem:[%s4 + $0xc0] sm:$0xff]
    %v5536 = vld [vmem:[%s4 + $0xc8] sm:$0xff]
    %v5537 = vld [vmem:[%s4 + $0xd0] sm:$0xff]
    %v5538 = vld [vmem:[%s4 + $0xd8] sm:$0xff]
    %v5539 = vld [vmem:[%s4 + $0xe0] sm:$0xff]
    %v5540 = vld [vmem:[%s4 + $0xe8] sm:$0xff]
    %v5541 = vld [vmem:[%s4 + $0xf0] sm:$0xff]
    %v5542 = vld [vmem:[%s4 + $0xf8] sm:$0xff]
    %v5575 = vunpack.c.l.b16 %v5511
    %v5576 = vunpack.c.h.b16 %v5511
    %v5577 = vunpack.c.l.b16 %v5512
    %v5578 = vunpack.c.h.b16 %v5512
    %v5579 = vunpack.c.l.b16 %v5513
    %v5580 = vunpack.c.h.b16 %v5513
    %v5581 = vunpack.c.l.b16 %v5514
    %v5582 = vunpack.c.h.b16 %v5514
    %v5583 = vunpack.c.l.b16 %v5515
    %v5584 = vunpack.c.h.b16 %v5515
    %v5585 = vunpack.c.l.b16 %v5516
    %v5586 = vunpack.c.h.b16 %v5516
    %v5587 = vunpack.c.l.b16 %v5517
    %v5588 = vunpack.c.h.b16 %v5517
    %v5589 = vunpack.c.l.b16 %v5518
    %v5590 = vunpack.c.h.b16 %v5518
    %v5591 = vunpack.c.l.b16 %v5519
    %v5592 = vunpack.c.h.b16 %v5519
    %v5593 = vunpack.c.l.b16 %v5520
    %v5594 = vunpack.c.h.b16 %v5520
    %v5595 = vunpack.c.l.b16 %v5521
    %v5596 = vunpack.c.h.b16 %v5521
    %v5597 = vunpack.c.l.b16 %v5522
    %v5598 = vunpack.c.h.b16 %v5522
    %v5599 = vunpack.c.l.b16 %v5523
    %v5600 = vunpack.c.h.b16 %v5523
    %v5601 = vunpack.c.l.b16 %v5524
    %v5602 = vunpack.c.h.b16 %v5524
    %v5603 = vunpack.c.l.b16 %v5525
    %v5604 = vunpack.c.h.b16 %v5525
    %v5605 = vunpack.c.l.b16 %v5526
    %v5606 = vunpack.c.h.b16 %v5526
    %v5607 = vunpack.c.l.b16 %v5527
    %v5608 = vunpack.c.h.b16 %v5527
    %v5609 = vunpack.c.l.b16 %v5528
    %v5610 = vunpack.c.h.b16 %v5528
    %v5611 = vunpack.c.l.b16 %v5529
    %v5612 = vunpack.c.h.b16 %v5529
    %v5613 = vunpack.c.l.b16 %v5530
    %v5614 = vunpack.c.h.b16 %v5530
    %v5615 = vunpack.c.l.b16 %v5531
    %v5616 = vunpack.c.h.b16 %v5531
    %v5617 = vunpack.c.l.b16 %v5532
    %v5618 = vunpack.c.h.b16 %v5532
    %v5619 = vunpack.c.l.b16 %v5533
    %v5620 = vunpack.c.h.b16 %v5533
    %v5621 = vunpack.c.l.b16 %v5534
    %v5622 = vunpack.c.h.b16 %v5534
    %v5623 = vunpack.c.l.b16 %v5535
    %v5624 = vunpack.c.h.b16 %v5535
    %v5625 = vunpack.c.l.b16 %v5536
    %v5626 = vunpack.c.h.b16 %v5536
    %v5627 = vunpack.c.l.b16 %v5537
    %v5628 = vunpack.c.h.b16 %v5537
    %v5629 = vunpack.c.l.b16 %v5538
    %v5630 = vunpack.c.h.b16 %v5538
    %v5631 = vunpack.c.l.b16 %v5539
    %v5632 = vunpack.c.h.b16 %v5539
    %v5633 = vunpack.c.l.b16 %v5540
    %v5634 = vunpack.c.h.b16 %v5540
    %v5635 = vunpack.c.l.b16 %v5541
    %v5636 = vunpack.c.h.b16 %v5541
    %v5637 = vunpack.c.l.b16 %v5542
    %v5638 = vunpack.c.h.b16 %v5542
    %v5639 = vpack.c.b16 %v5577, %v5575
    %v5640 = vpack.c.b16 %v5578, %v5576
    %v5641 = vpack.c.b16 %v5581, %v5579
    %v5642 = vpack.c.b16 %v5582, %v5580
    %v5643 = vpack.c.b16 %v5585, %v5583
    %v5644 = vpack.c.b16 %v5586, %v5584
    %v5645 = vpack.c.b16 %v5589, %v5587
    %v5646 = vpack.c.b16 %v5590, %v5588
    %v5647 = vpack.c.b16 %v5593, %v5591
    %v5648 = vpack.c.b16 %v5594, %v5592
    %v5649 = vpack.c.b16 %v5597, %v5595
    %v5650 = vpack.c.b16 %v5598, %v5596
    %v5651 = vpack.c.b16 %v5601, %v5599
    %v5652 = vpack.c.b16 %v5602, %v5600
    %v5653 = vpack.c.b16 %v5605, %v5603
    %v5654 = vpack.c.b16 %v5606, %v5604
    %v5655 = vpack.c.b16 %v5609, %v5607
    %v5656 = vpack.c.b16 %v5610, %v5608
    %v5657 = vpack.c.b16 %v5613, %v5611
    %v5658 = vpack.c.b16 %v5614, %v5612
    %v5659 = vpack.c.b16 %v5617, %v5615
    %v5660 = vpack.c.b16 %v5618, %v5616
    %v5661 = vpack.c.b16 %v5621, %v5619
    %v5662 = vpack.c.b16 %v5622, %v5620
    %v5663 = vpack.c.b16 %v5625, %v5623
    %v5664 = vpack.c.b16 %v5626, %v5624
    %v5665 = vpack.c.b16 %v5629, %v5627
    %v5666 = vpack.c.b16 %v5630, %v5628
    %v5667 = vpack.c.b16 %v5633, %v5631
    %v5668 = vpack.c.b16 %v5634, %v5632
    %v5669 = vpack.c.b16 %v5637, %v5635
    %v5670 = vpack.c.b16 %v5638, %v5636
    %5703 = vmatprep.subr.bf16.mxu0 %v5640
    %5704 = vmatpush1.bf16.msra.mxu0 %v5639
    %5705 = vmatprep.subr.bf16.mxu0 %v5642
    %5706 = vmatpush1.bf16.msra.mxu0 %v5641
    %5707 = vmatprep.subr.bf16.mxu0 %v5644
    %5708 = vmatpush1.bf16.msra.mxu0 %v5643
    %5709 = vmatprep.subr.bf16.mxu0 %v5646
    %5710 = vmatpush1.bf16.msra.mxu0 %v5645
    %5711 = vmatprep.subr.bf16.mxu0 %v5648
    %5712 = vmatpush1.bf16.msra.mxu0 %v5647
    %5713 = vmatprep.subr.bf16.mxu0 %v5650
    %5714 = vmatpush1.bf16.msra.mxu0 %v5649
    %5715 = vmatprep.subr.bf16.mxu0 %v5652
    %5716 = vmatpush1.bf16.msra.mxu0 %v5651
    %5717 = vmatprep.subr.bf16.mxu0 %v5654
    %5718 = vmatpush1.bf16.msra.mxu0 %v5653
    %5719 = vmatprep.subr.bf16.mxu0 %v5656
    %5720 = vmatpush1.bf16.msra.mxu0 %v5655
    %5721 = vmatprep.subr.bf16.mxu0 %v5658
    %5722 = vmatpush1.bf16.msra.mxu0 %v5657
    %5723 = vmatprep.subr.bf16.mxu0 %v5660
    %5724 = vmatpush1.bf16.msra.mxu0 %v5659
    %5725 = vmatprep.subr.bf16.mxu0 %v5662
    %5726 = vmatpush1.bf16.msra.mxu0 %v5661
    %5727 = vmatprep.subr.bf16.mxu0 %v5664
    %5728 = vmatpush1.bf16.msra.mxu0 %v5663
    %5729 = vmatprep.subr.bf16.mxu0 %v5666
    %5730 = vmatpush1.bf16.msra.mxu0 %v5665
    %5731 = vmatprep.subr.bf16.mxu0 %v5668
    %5732 = vmatpush1.bf16.msra.mxu0 %v5667
    %5733 = vmatprep.subr.bf16.mxu0 %v5670
    %5734 = vmatpush1.bf16.msra.mxu0 %v5669
    %5735 = vmatprep.mubr.bf16.mxu0 %v5510
    %5736 = vmatmul.mubr.bf16.gmra.mrb[0].mxu0 %v5509
    %v5737 = vpop.f32.mrb[0].mxu0
    %v5738 = vadd.f32 %v96, %v5737
    %v5739 = vpop.f32.mrb[0].mxu0
    %v5740 = vadd.f32 %v100, %v5739
    %v5741 = vpop.f32.mrb[0].mxu0
    %v5742 = vpop.f32.mrb[0].mxu0
    %5743 = vdwg.mxu0
    %v5744 = vxor.u32 %v5738, 2147483648
    %v5745 = vxor.u32 %v5740, 2147483648
    %v5746 = vmul.f32 %v5744, 1.442695
    %v5747 = vpow.pop %v5746
    %v5748 = vmul.f32 %v5745, 1.442695
    %v5749 = vpow.pop %v5748
    %v5750 = vadd.f32 %v5747, 1.0
    %v5751 = vadd.f32 %v5749, 1.0
    %v5752 = vrcp.pop %v5750
    %v5753 = vmul.f32 1.0, %v5752
    %v5754 = vrcp.pop %v5751
    %v5755 = vmul.f32 1.0, %v5754
    %v5756 = vld [vmem:[#allocation4] sm:$0xf]
    %v5757 = vld [vmem:[#allocation4 + $0x4] sm:$0xf]
    %v5758 = vld [vmem:[#allocation4 + $0x8] sm:$0xf]
    %v5759 = vld [vmem:[#allocation4 + $0xc] sm:$0xf]
    %v5760 = vld [vmem:[#allocation4 + $0x10] sm:$0xf]
    %v5761 = vld [vmem:[#allocation4 + $0x14] sm:$0xf]
    %v5762 = vld [vmem:[#allocation4 + $0x18] sm:$0xf]
    %v5763 = vld [vmem:[#allocation4 + $0x1c] sm:$0xf]
    %v5764 = vld [vmem:[#allocation4 + $0x20] sm:$0xf]
    %v5765 = vld [vmem:[#allocation4 + $0x24] sm:$0xf]
    %v5766 = vld [vmem:[#allocation4 + $0x28] sm:$0xf]
    %v5767 = vld [vmem:[#allocation4 + $0x2c] sm:$0xf]
    %v5768 = vld [vmem:[#allocation4 + $0x30] sm:$0xf]
    %v5769 = vld [vmem:[#allocation4 + $0x34] sm:$0xf]
    %v5770 = vld [vmem:[#allocation4 + $0x38] sm:$0xf]
    %v5771 = vld [vmem:[#allocation4 + $0x3c] sm:$0xf]
    %v5788 = vunpack.c.l.b16 %v5756
    %v5789 = vunpack.c.l.b16 %v5757
    %v5790 = vunpack.c.l.b16 %v5758
    %v5791 = vunpack.c.l.b16 %v5759
    %v5792 = vunpack.c.l.b16 %v5760
    %v5793 = vunpack.c.l.b16 %v5761
    %v5794 = vunpack.c.l.b16 %v5762
    %v5795 = vunpack.c.l.b16 %v5763
    %v5796 = vunpack.c.l.b16 %v5764
    %v5797 = vunpack.c.l.b16 %v5765
    %v5798 = vunpack.c.l.b16 %v5766
    %v5799 = vunpack.c.l.b16 %v5767
    %v5800 = vunpack.c.l.b16 %v5768
    %v5801 = vunpack.c.l.b16 %v5769
    %v5802 = vunpack.c.l.b16 %v5770
    %v5803 = vunpack.c.l.b16 %v5771
    %v5804 = vpack.c.b16 %v5789, %v5788
    %v5805 = vpack.c.b16 %v5791, %v5790
    %v5806 = vpack.c.b16 %v5793, %v5792
    %v5807 = vpack.c.b16 %v5795, %v5794
    %v5808 = vpack.c.b16 %v5797, %v5796
    %v5809 = vpack.c.b16 %v5799, %v5798
    %v5810 = vpack.c.b16 %v5801, %v5800
    %v5811 = vpack.c.b16 %v5803, %v5802
    %5820 = vmatprep.subr.bf16.mxu0 0
    %5821 = vmatpush1.bf16.msra.mxu0 %v5804
    %5822 = vmatprep.subr.bf16.mxu0 0
    %5823 = vmatpush1.bf16.msra.mxu0 %v5805
    %5824 = vmatprep.subr.bf16.mxu0 0
    %5825 = vmatpush1.bf16.msra.mxu0 %v5806
    %5826 = vmatprep.subr.bf16.mxu0 0
    %5827 = vmatpush1.bf16.msra.mxu0 %v5807
    %5828 = vmatprep.subr.bf16.mxu0 0
    %5829 = vmatpush1.bf16.msra.mxu0 %v5808
    %5830 = vmatprep.subr.bf16.mxu0 0
    %5831 = vmatpush1.bf16.msra.mxu0 %v5809
    %5832 = vmatprep.subr.bf16.mxu0 0
    %5833 = vmatpush1.bf16.msra.mxu0 %v5810
    %5834 = vmatprep.subr.bf16.mxu0 0
    %5835 = vmatpush1.bf16.msra.mxu0 %v5811
    %5836 = vmatprep.subr.bf16.mxu0 0
    %5837 = vmatpush1.bf16.msra.mxu0 0
    %5838 = vmatprep.subr.bf16.mxu0 0
    %5839 = vmatpush1.bf16.msra.mxu0 0
    %5840 = vmatprep.subr.bf16.mxu0 0
    %5841 = vmatpush1.bf16.msra.mxu0 0
    %5842 = vmatprep.subr.bf16.mxu0 0
    %5843 = vmatpush1.bf16.msra.mxu0 0
    %5844 = vmatprep.subr.bf16.mxu0 0
    %5845 = vmatpush1.bf16.msra.mxu0 0
    %5846 = vmatprep.subr.bf16.mxu0 0
    %5847 = vmatpush1.bf16.msra.mxu0 0
    %5848 = vmatprep.subr.bf16.mxu0 0
    %5849 = vmatpush1.bf16.msra.mxu0 0
    %5850 = vmatprep.subr.bf16.mxu0 0
    %5851 = vmatpush1.bf16.msra.mxu0 0
    %5852 = vmatprep.mubr.bf16.mxu0 0
    %5853 = vmatmul.mubr.bf16.gmra.mrb[0].mxu0 %v5509
    %v5854 = vpop.f32.mrb[0].mxu0
    %v5855 = vadd.f32 %v108, %v5854
    %v5856 = vpop.f32.mrb[0].mxu0
    %v5857 = vpop.f32.mrb[0].mxu0
    %v5858 = vpop.f32.mrb[0].mxu0
    %5859 = vdwg.mxu0
    %v5860 = vld [vmem:[#allocation6] sm:$0xf]
    %v5861 = vld [vmem:[#allocation6 + $0x4] sm:$0xf]
    %v5862 = vld [vmem:[#allocation6 + $0x8] sm:$0xf]
    %v5863 = vld [vmem:[#allocation6 + $0xc] sm:$0xf]
    %v5864 = vld [vmem:[#allocation6 + $0x10] sm:$0xf]
    %v5865 = vld [vmem:[#allocation6 + $0x14] sm:$0xf]
    %v5866 = vld [vmem:[#allocation6 + $0x18] sm:$0xf]
    %v5867 = vld [vmem:[#allocation6 + $0x1c] sm:$0xf]
    %v5868 = vld [vmem:[#allocation6 + $0x20] sm:$0xf]
    %v5869 = vld [vmem:[#allocation6 + $0x24] sm:$0xf]
    %v5870 = vld [vmem:[#allocation6 + $0x28] sm:$0xf]
    %v5871 = vld [vmem:[#allocation6 + $0x2c] sm:$0xf]
    %v5872 = vld [vmem:[#allocation6 + $0x30] sm:$0xf]
    %v5873 = vld [vmem:[#allocation6 + $0x34] sm:$0xf]
    %v5874 = vld [vmem:[#allocation6 + $0x38] sm:$0xf]
    %v5875 = vld [vmem:[#allocation6 + $0x3c] sm:$0xf]
    %v5892 = vunpack.c.l.b16 %v5860
    %v5893 = vunpack.c.l.b16 %v5861
    %v5894 = vunpack.c.l.b16 %v5862
    %v5895 = vunpack.c.l.b16 %v5863
    %v5896 = vunpack.c.l.b16 %v5864
    %v5897 = vunpack.c.l.b16 %v5865
    %v5898 = vunpack.c.l.b16 %v5866
    %v5899 = vunpack.c.l.b16 %v5867
    %v5900 = vunpack.c.l.b16 %v5868
    %v5901 = vunpack.c.l.b16 %v5869
    %v5902 = vunpack.c.l.b16 %v5870
    %v5903 = vunpack.c.l.b16 %v5871
    %v5904 = vunpack.c.l.b16 %v5872
    %v5905 = vunpack.c.l.b16 %v5873
    %v5906 = vunpack.c.l.b16 %v5874
    %v5907 = vunpack.c.l.b16 %v5875
    %v5908 = vpack.c.b16 %v5893, %v5892
    %v5909 = vpack.c.b16 %v5895, %v5894
    %v5910 = vpack.c.b16 %v5897, %v5896
    %v5911 = vpack.c.b16 %v5899, %v5898
    %v5912 = vpack.c.b16 %v5901, %v5900
    %v5913 = vpack.c.b16 %v5903, %v5902
    %v5914 = vpack.c.b16 %v5905, %v5904
    %v5915 = vpack.c.b16 %v5907, %v5906
    %5924 = vmatprep.subr.bf16.mxu0 0
    %5925 = vmatpush1.bf16.msra.mxu0 %v5908
    %5926 = vmatprep.subr.bf16.mxu0 0
    %5927 = vmatpush1.bf16.msra.mxu0 %v5909
    %5928 = vmatprep.subr.bf16.mxu0 0
    %5929 = vmatpush1.bf16.msra.mxu0 %v5910
    %5930 = vmatprep.subr.bf16.mxu0 0
    %5931 = vmatpush1.bf16.msra.mxu0 %v5911
    %5932 = vmatprep.subr.bf16.mxu0 0
    %5933 = vmatpush1.bf16.msra.mxu0 %v5912
    %5934 = vmatprep.subr.bf16.mxu0 0
    %5935 = vmatpush1.bf16.msra.mxu0 %v5913
    %5936 = vmatprep.subr.bf16.mxu0 0
    %5937 = vmatpush1.bf16.msra.mxu0 %v5914
    %5938 = vmatprep.subr.bf16.mxu0 0
    %5939 = vmatpush1.bf16.msra.mxu0 %v5915
    %5940 = vmatprep.subr.bf16.mxu0 0
    %5941 = vmatpush1.bf16.msra.mxu0 0
    %5942 = vmatprep.subr.bf16.mxu0 0
    %5943 = vmatpush1.bf16.msra.mxu0 0
    %5944 = vmatprep.subr.bf16.mxu0 0
    %5945 = vmatpush1.bf16.msra.mxu0 0
    %5946 = vmatprep.subr.bf16.mxu0 0
    %5947 = vmatpush1.bf16.msra.mxu0 0
    %5948 = vmatprep.subr.bf16.mxu0 0
    %5949 = vmatpush1.bf16.msra.mxu0 0
    %5950 = vmatprep.subr.bf16.mxu0 0
    %5951 = vmatpush1.bf16.msra.mxu0 0
    %5952 = vmatprep.subr.bf16.mxu0 0
    %5953 = vmatpush1.bf16.msra.mxu0 0
    %5954 = vmatprep.subr.bf16.mxu0 0
    %5955 = vmatpush1.bf16.msra.mxu0 0
    %5956 = vmatprep.mubr.bf16.mxu0 0
    %5957 = vmatmul.mubr.bf16.gmra.mrb[0].mxu0 %v5510
    %v5958 = vpop.f32.mrb[0].mxu0
    %v5959 = vadd.f32 %v122, %v5958
    %v5960 = vpop.f32.mrb[0].mxu0
    %v5961 = vpop.f32.mrb[0].mxu0
    %v5962 = vpop.f32.mrb[0].mxu0
    %5963 = vdwg.mxu0
    %v5964 = vmul.f32 %v5753, %v5959
    %v5965 = vadd.f32 %v5855, %v5964
    %v5966 = vtanh.pop %v5965
    %v5967 = vsub.f32 1.0, %v5755
    %v5968 = vmul.f32 %v5967, %v5966
    %v5969 = vmul.f32 %v5755, %v5239
    %v5970 = vadd.f32 %v5968, %v5969
    %s5971 = scalar_lea.vmem %s11, 56
    %5972 = vst [vmem:[%s5971] sm:$0xff] %v5970
    %5973 = vst [vmem:[%s12] sm:$0xff] %v5508
    %5974 = vst [vmem:[%s13] sm:$0xff] %v5970
    // Predicated region
    $region62: #{chaotic_gru_forward.1} parent=1 // pred_check
      _
    $region63: #{chaotic_gru_forward.1} parent=1 // pred_check_branch
      %5976 = sbr.rel (0) target = $region65
    $region64: #{chaotic_gru_forward.1} parent=1 // pred_region
      _
    $region65: #{chaotic_gru_forward.1} parent=1 // pred_fallthru
      _
    // Predicated region
    $region66: #{chaotic_gru_forward.1} parent=1 // pred_check
      _
    $region67: #{chaotic_gru_forward.1} parent=1 // pred_check_branch
      %5978 = sbr.rel (0) target = $region69
    $region68: #{chaotic_gru_forward.1} parent=1 // pred_region
      _
    $region69: #{chaotic_gru_forward.1} parent=1 // pred_fallthru
      _
    // Predicated region
    $region70: #{chaotic_gru_forward.1} parent=1 // pred_check
      _
    $region71: #{chaotic_gru_forward.1} parent=1 // pred_check_branch
      %5980 = sbr.rel (0) target = $region73
    $region72: #{chaotic_gru_forward.1} parent=1 // pred_region
      _
    $region73: #{chaotic_gru_forward.1} parent=1 // pred_fallthru
      _
    // Predicated region
    $region74: #{chaotic_gru_forward.1} parent=1 // pred_check
      _
    $region75: #{chaotic_gru_forward.1} parent=1 // pred_check_branch
      %5982 = sbr.rel (0) target = $region77
    $region76: #{chaotic_gru_forward.1} parent=1 // pred_region
      _
    $region77: #{chaotic_gru_forward.1} parent=1 // pred_fallthru
      _
    // Predicated region
    $region78: #{chaotic_gru_forward.1} parent=1 // pred_check
      _
    $region79: #{chaotic_gru_forward.1} parent=1 // pred_check_branch
      %5984 = sbr.rel (0) target = $region81
    $region80: #{chaotic_gru_forward.1} parent=1 // pred_region
      _
    $region81: #{chaotic_gru_forward.1} parent=1 // pred_fallthru
      _
    // Predicated region
    $region82: #{chaotic_gru_forward.1} parent=1 // pred_check
      _
    $region83: #{chaotic_gru_forward.1} parent=1 // pred_check_branch
      %5986 = sbr.rel (0) target = $region85
    $region84: #{chaotic_gru_forward.1} parent=1 // pred_region
      _
    $region85: #{chaotic_gru_forward.1} parent=1 // pred_fallthru
      _
    %5987 = vsyncpa [#allocation3], 1
    %5988 = vsyncpa [#allocation5], 1

</llo_original>
